<compile_context>
chip_gen: v6e
topology: v6e:2x2x1
jax: 0.10.0
libtpu: 0.0.40
codegen_flags: <defaults>
</compile_context>

<pallas_src>
import functools

import jax
import jax.numpy as jnp
from jax.experimental import pallas as pl
from jax.experimental.pallas import tpu as pltpu

HIDDEN = 1024
OUT_LANES = 128  # lane-dense output block -> full unmasked stores


def _round_up(x, m):
    return ((x + m - 1) // m) * m


def _default_tile_rows():
    """512 rows on v6e/v7x (amortizes the ~0.35us grid-step tax), 256 on v5e."""
    try:
        kind = jax.devices()[0].device_kind.lower()
    except Exception:
        return 512
    if "v5e" in kind or "v5 lite" in kind or "v5lite" in kind:
        return 256
    return 512


def _da_ins_head_kernel(x_ref, w1_ref, b1_ref, w2_ref, b2_ref, w3_ref, b3_ref,
                        o_ref):
    # fc1: cast the f32 x tile to bf16 in-body (saves the external cast's HBM
    # round trip); MXU matmul with f32 accumulation.
    x_bf = x_ref[...].astype(jnp.bfloat16)
    h1 = jnp.dot(x_bf, w1_ref[...], preferred_element_type=jnp.float32)
    h1 = jnp.maximum(h1 + b1_ref[...], 0.0)          # bias + ReLU in f32
    # dropout(p=0.5, training=False) == identity

    # fc2: activations back to bf16 so the MXU runs at full bf16 rate.
    h2 = jnp.dot(h1.astype(jnp.bfloat16), w2_ref[...],
                 preferred_element_type=jnp.float32)
    h2 = jnp.maximum(h2 + b2_ref[...], 0.0)
    # dropout(p=0.5, training=False) == identity

    # fc3 (1024 -> 1): one MXU matmul against w3 zero-padded to (1024, 128);
    # output block is lane-dense with the logit in column 0 (columns 1..127
    # are discarded by the wrapper).
    logit = jnp.dot(h2.astype(jnp.bfloat16), w3_ref[...],
                    preferred_element_type=jnp.float32)
    o_ref[...] = (logit + b3_ref[...]).astype(o_ref.dtype)


@functools.partial(jax.jit, static_argnames=("tm",))
def _da_ins_head_impl(x, w1, b1, w2, b2, w3, b3, *, tm):
    n, c = x.shape

    # Row tile: large enough to fill the MXU M dim; clamped for small N so a
    # tiny (weight-DMA-bound) call stays a single grid step.  Ragged last
    # blocks are handled by the pipeline, so no padded copy of x is needed.
    tm_eff = min(tm, _round_up(n, 8))
    grid = (pl.cdiv(n, tm_eff),)

    # Realistic VMEM budget: f32 x tile + f32 out tile double-buffered, bf16
    # weights + f32 biases single-buffered, h1/h2 temporaries; 1.5x slack,
    # clamped to [32 MiB, 48 MiB] (>= 16 MiB headroom on v7x's 64 MiB VMEM).
    vmem_est = (
        2 * tm_eff * c * 4                                            # x tile
        + (c * HIDDEN + HIDDEN * HIDDEN + HIDDEN * OUT_LANES) * 2     # weights
        + (2 * HIDDEN + OUT_LANES) * 4                                # biases
        + 2 * tm_eff * OUT_LANES * 4                                  # out tile
        + 4 * tm_eff * HIDDEN * 4                                     # h1/h2 temps
    )
    vmem_limit = min(max(int(vmem_est * 1.5) + (4 << 20), 32 << 20), 48 << 20)

    flops = 2 * n * (c * HIDDEN + HIDDEN * HIDDEN + HIDDEN * OUT_LANES)
    bytes_accessed = (
        n * c * 4
        + (c * HIDDEN + HIDDEN * HIDDEN + HIDDEN * OUT_LANES) * 2
        + (2 * HIDDEN + OUT_LANES) * 4
        + n * OUT_LANES * 4
    )

    def const(shape):  # grid-invariant block: DMA'd once, single-buffered
        return pl.BlockSpec(shape, lambda i: (0, 0),
                            pipeline_mode=pl.Buffered(1))

    out = pl.pallas_call(
        _da_ins_head_kernel,
        out_shape=jax.ShapeDtypeStruct((n, OUT_LANES), jnp.float32),
        grid_spec=pltpu.PrefetchScalarGridSpec(
            num_scalar_prefetch=0,
            grid=grid,
            in_specs=[
                pl.BlockSpec((tm_eff, c), lambda i: (i, 0)),  # x tile (f32)
                const((c, HIDDEN)),          # w1 bf16
                const((1, HIDDEN)),          # b1 f32
                const((HIDDEN, HIDDEN)),     # w2 bf16
                const((1, HIDDEN)),          # b2 f32
                const((HIDDEN, OUT_LANES)),  # w3 bf16, zero-padded to 128 lanes
                const((1, OUT_LANES)),       # b3 f32, padded (bias in lane 0)
            ],
            out_specs=pl.BlockSpec((tm_eff, OUT_LANES), lambda i: (i, 0)),
        ),
        compiler_params=pltpu.CompilerParams(
            dimension_semantics=("parallel",),
            vmem_limit_bytes=vmem_limit),
        cost_estimate=pl.CostEstimate(
            flops=flops, transcendentals=0, bytes_accessed=bytes_accessed),
    )(x, w1, b1, w2, b2, w3, b3)

    return out[:, :1]


def da_ins_head(x, w1, b1, w2, b2, w3, b3, *, tm=None):
    """Eval-mode forward.  x: (N, C) f32; params from prepare_params().
    Returns (N, 1) f32."""
    if tm is None:
        tm = _default_tile_rows()
    return _da_ins_head_impl(x, w1, b1, w2, b2, w3, b3, tm=tm)


def prepare_params(w1, b1, w2, b2, w3, b3):
    """One-time conversion of f32 (in, out)-layout params to kernel layout.

    Hoisted out of the per-call path (perf review): weights -> bf16; fc3
    weight zero-padded to (1024, OUT_LANES) with the real column in lane 0;
    biases -> f32 rows.  Call once, reuse for every forward.
    (If loading real PyTorch nn.Linear weights, transpose them to (in, out)
    before calling this.)
    """
    w1k = jnp.asarray(w1, jnp.float32).astype(jnp.bfloat16)            # (C, 1024)
    w2k = jnp.asarray(w2, jnp.float32).astype(jnp.bfloat16)            # (1024, 1024)
    w3_col = jnp.asarray(w3, jnp.float32).reshape(HIDDEN).astype(jnp.bfloat16)
    w3k = jnp.zeros((HIDDEN, OUT_LANES), jnp.bfloat16).at[:, 0].set(w3_col)
    b1k = jnp.asarray(b1, jnp.float32).reshape(1, HIDDEN)
    b2k = jnp.asarray(b2, jnp.float32).reshape(1, HIDDEN)
    b3k = jnp.zeros((1, OUT_LANES), jnp.float32).at[0, 0].set(
        jnp.asarray(b3, jnp.float32).reshape(()))
    return w1k, b1k, w2k, b2k, w3k, b3k


def init_params(key, in_channels):
    """Deterministic f32 init mimicking PyTorch nn.Linear default
    (U[-k, k], k = 1/sqrt(fan_in)); weights stored as (in, out)."""
    ks = jax.random.split(key, 6)

    def linear(kw, kb, fan_in, fan_out):
        bound = 1.0 / jnp.sqrt(jnp.float32(fan_in))
        w = jax.random.uniform(kw, (fan_in, fan_out), jnp.float32, -bound, bound)
        b = jax.random.uniform(kb, (1, fan_out), jnp.float32, -bound, bound)
        return w, b

    w1, b1 = linear(ks[0], ks[1], in_channels, HIDDEN)
    w2, b2 = linear(ks[2], ks[3], HIDDEN, HIDDEN)
    w3, b3 = linear(ks[4], ks[5], HIDDEN, 1)
    return w1, b1, w2, b2, w3, b3


def reference(x, w1, b1, w2, b2, w3, b3):
    """f32 math on the same bf16-rounded values the kernel sees (isolates
    kernel correctness from the intentional bf16 precision tradeoff)."""
    f32 = jnp.float32
    xb = x.astype(jnp.bfloat16).astype(f32)
    w1b = w1.astype(jnp.bfloat16).astype(f32)
    w2b = w2.astype(jnp.bfloat16).astype(f32)
    w3b = w3.astype(jnp.bfloat16).astype(f32)
    h = jnp.maximum(xb @ w1b + b1, 0.0)
    h = h.astype(jnp.bfloat16).astype(f32)
    h = jnp.maximum(h @ w2b + b2, 0.0)
    h = h.astype(jnp.bfloat16).astype(f32)
    return h @ w3b + b3


if __name__ == "__main__":
    key = jax.random.PRNGKey(0)
    k_params, k_x = jax.random.split(key)

    in_channels = 64   # small in_channels for the synthetic example
    n_instances = 16   # e.g. 2 images x 8 ROIs each, flattened to (N, C)

    raw_params = init_params(k_params, in_channels)
    params = prepare_params(*raw_params)   # one-time cast/layout (hoisted)

    x = jax.random.normal(k_x, (n_instances, in_channels), jnp.float32)
    y = jax.block_until_ready(da_ins_head(x, *params))
    y_ref = reference(x, *raw_params)
    assert y.shape == (n_instances, 1), y.shape
    assert jnp.allclose(y, y_ref, atol=2e-3, rtol=2e-3), "mismatch vs JAX reference"

    # Ragged-N path: exercises the cdiv grid / dropped out-of-bounds writes
    # (no padded HBM copy of x).
    x2 = jax.random.normal(jax.random.PRNGKey(1), (13, in_channels), jnp.float32)
    y2 = jax.block_until_ready(da_ins_head(x2, *params))
    y2_ref = reference(x2, *raw_params)
    assert y2.shape == (13, 1), y2.shape
    assert jnp.allclose(y2, y2_ref, atol=2e-3, rtol=2e-3), "ragged-N mismatch"

    print("KERNEL_OK")
</pallas_src>

<mosaic_0001>
module attributes {stable_mosaic.version = 11 : i64} {
  func.func @_da_ins_head_kernel(%arg0: i32, %arg1: memref<16x64xf32, #tpu.memory_space<vmem>>, %arg2: memref<64x1024xbf16, #tpu.memory_space<vmem>>, %arg3: memref<1x1024xf32, #tpu.memory_space<vmem>>, %arg4: memref<1024x1024xbf16, #tpu.memory_space<vmem>>, %arg5: memref<1x1024xf32, #tpu.memory_space<vmem>>, %arg6: memref<1024x128xbf16, #tpu.memory_space<vmem>>, %arg7: memref<1x128xf32, #tpu.memory_space<vmem>>, %arg8: memref<16x128xf32, #tpu.memory_space<vmem>>) attributes {dimension_semantics = [#tpu.dimension_semantics<parallel>], iteration_bounds = array<i64: 1>, scalar_prefetch = 0 : i64, scratch_operands = 0 : i64, tpu.core_type = #tpu.core_type<tc>, window_params = [{transform_indices = @transform_0, window_bounds = array<i64: 16, 64>}, {pipeline_mode = #tpu.pipeline_mode<synchronous>, transform_indices = @transform_1, window_bounds = array<i64: 64, 1024>}, {pipeline_mode = #tpu.pipeline_mode<synchronous>, transform_indices = @transform_2, window_bounds = array<i64: 1, 1024>}, {pipeline_mode = #tpu.pipeline_mode<synchronous>, transform_indices = @transform_3, window_bounds = array<i64: 1024, 1024>}, {pipeline_mode = #tpu.pipeline_mode<synchronous>, transform_indices = @transform_4, window_bounds = array<i64: 1, 1024>}, {pipeline_mode = #tpu.pipeline_mode<synchronous>, transform_indices = @transform_5, window_bounds = array<i64: 1024, 128>}, {pipeline_mode = #tpu.pipeline_mode<synchronous>, transform_indices = @transform_6, window_bounds = array<i64: 1, 128>}, {transform_indices = @transform_7, window_bounds = array<i64: 16, 128>}]} {
    %c0 = arith.constant 0 : index
    %c0_0 = arith.constant 0 : index
    %0 = vector.load %arg1[%c0, %c0_0] : memref<16x64xf32, #tpu.memory_space<vmem>>, vector<16x64xf32>
    %1 = arith.truncf %0 : vector<16x64xf32> to vector<16x64xbf16>
    %c0_1 = arith.constant 0 : index
    %c0_2 = arith.constant 0 : index
    %2 = vector.load %arg2[%c0_1, %c0_2] : memref<64x1024xbf16, #tpu.memory_space<vmem>>, vector<64x1024xbf16>
    %cst = arith.constant dense<0.000000e+00> : vector<16x1024xf32>
    %3 = tpu.matmul %1, %2, %cst {dimension_numbers = #tpu.dot_dimension_numbers<[1], [0], [0], [1], [0, 0, 1, 1], [], []>} : vector<16x64xbf16>, vector<64x1024xbf16>, vector<16x1024xf32> -> vector<16x1024xf32>
    %c0_3 = arith.constant 0 : index
    %c0_4 = arith.constant 0 : index
    %4 = vector.load %arg3[%c0_3, %c0_4] : memref<1x1024xf32, #tpu.memory_space<vmem>>, vector<1x1024xf32>
    %5 = vector.broadcast %4 : vector<1x1024xf32> to vector<16x1024xf32>
    %6 = arith.addf %3, %5 : vector<16x1024xf32>
    %cst_5 = arith.constant 0.000000e+00 : f32
    %7 = vector.broadcast %cst_5 : f32 to vector<16x1024xf32>
    %8 = arith.maximumf %6, %7 : vector<16x1024xf32>
    %9 = arith.truncf %8 : vector<16x1024xf32> to vector<16x1024xbf16>
    %c0_6 = arith.constant 0 : index
    %c0_7 = arith.constant 0 : index
    %10 = vector.load %arg4[%c0_6, %c0_7] : memref<1024x1024xbf16, #tpu.memory_space<vmem>>, vector<1024x1024xbf16>
    %cst_8 = arith.constant dense<0.000000e+00> : vector<16x1024xf32>
    %11 = tpu.matmul %9, %10, %cst_8 {dimension_numbers = #tpu.dot_dimension_numbers<[1], [0], [0], [1], [0, 0, 1, 1], [], []>} : vector<16x1024xbf16>, vector<1024x1024xbf16>, vector<16x1024xf32> -> vector<16x1024xf32>
    %c0_9 = arith.constant 0 : index
    %c0_10 = arith.constant 0 : index
    %12 = vector.load %arg5[%c0_9, %c0_10] : memref<1x1024xf32, #tpu.memory_space<vmem>>, vector<1x1024xf32>
    %13 = vector.broadcast %12 : vector<1x1024xf32> to vector<16x1024xf32>
    %14 = arith.addf %11, %13 : vector<16x1024xf32>
    %cst_11 = arith.constant 0.000000e+00 : f32
    %15 = vector.broadcast %cst_11 : f32 to vector<16x1024xf32>
    %16 = arith.maximumf %14, %15 : vector<16x1024xf32>
    %17 = arith.truncf %16 : vector<16x1024xf32> to vector<16x1024xbf16>
    %c0_12 = arith.constant 0 : index
    %c0_13 = arith.constant 0 : index
    %18 = vector.load %arg6[%c0_12, %c0_13] : memref<1024x128xbf16, #tpu.memory_space<vmem>>, vector<1024x128xbf16>
    %cst_14 = arith.constant dense<0.000000e+00> : vector<16x128xf32>
    %19 = tpu.matmul %17, %18, %cst_14 {dimension_numbers = #tpu.dot_dimension_numbers<[1], [0], [0], [1], [0, 0, 1, 1], [], []>} : vector<16x1024xbf16>, vector<1024x128xbf16>, vector<16x128xf32> -> vector<16x128xf32>
    %c0_15 = arith.constant 0 : index
    %c0_16 = arith.constant 0 : index
    %20 = vector.load %arg7[%c0_15, %c0_16] : memref<1x128xf32, #tpu.memory_space<vmem>>, vector<1x128xf32>
    %21 = vector.broadcast %20 : vector<1x128xf32> to vector<16x128xf32>
    %22 = arith.addf %19, %21 : vector<16x128xf32>
    %c0_17 = arith.constant 0 : index
    %c0_18 = arith.constant 0 : index
    %23 = vector.load %arg8[%c0_17, %c0_18] : memref<16x128xf32, #tpu.memory_space<vmem>>, vector<16x128xf32>
    tpu.vector_store %arg8[%c0_17, %c0_18], %22 {strides = array<i32>} : memref<16x128xf32, #tpu.memory_space<vmem>>, vector<16x128xf32>,
    return
  }
  func.func @transform_0(%arg0: i32) -> (i32, i32) {
    %c0_i32 = arith.constant 0 : i32
    %c0_i32_0 = arith.constant 0 : i32
    return %arg0, %c0_i32 : i32, i32
  }
  func.func @transform_1(%arg0: i32) -> (i32, i32) {
    %c0_i32 = arith.constant 0 : i32
    %c0_i32_0 = arith.constant 0 : i32
    %c0_i32_1 = arith.constant 0 : i32
    return %c0_i32, %c0_i32_0 : i32, i32
  }
  func.func @transform_2(%arg0: i32) -> (i32, i32) {
    %c0_i32 = arith.constant 0 : i32
    %c0_i32_0 = arith.constant 0 : i32
    %c0_i32_1 = arith.constant 0 : i32
    return %c0_i32, %c0_i32_0 : i32, i32
  }
  func.func @transform_3(%arg0: i32) -> (i32, i32) {
    %c0_i32 = arith.constant 0 : i32
    %c0_i32_0 = arith.constant 0 : i32
    %c0_i32_1 = arith.constant 0 : i32
    return %c0_i32, %c0_i32_0 : i32, i32
  }
  func.func @transform_4(%arg0: i32) -> (i32, i32) {
    %c0_i32 = arith.constant 0 : i32
    %c0_i32_0 = arith.constant 0 : i32
    %c0_i32_1 = arith.constant 0 : i32
    return %c0_i32, %c0_i32_0 : i32, i32
  }
  func.func @transform_5(%arg0: i32) -> (i32, i32) {
    %c0_i32 = arith.constant 0 : i32
    %c0_i32_0 = arith.constant 0 : i32
    %c0_i32_1 = arith.constant 0 : i32
    return %c0_i32, %c0_i32_0 : i32, i32
  }
  func.func @transform_6(%arg0: i32) -> (i32, i32) {
    %c0_i32 = arith.constant 0 : i32
    %c0_i32_0 = arith.constant 0 : i32
    %c0_i32_1 = arith.constant 0 : i32
    return %c0_i32, %c0_i32_0 : i32, i32
  }
  func.func @transform_7(%arg0: i32) -> (i32, i32) {
    %c0_i32 = arith.constant 0 : i32
    %c0_i32_0 = arith.constant 0 : i32
    return %arg0, %c0_i32 : i32, i32
  }
}

</mosaic_0001>

<llo_original>
// kernel: _da_ins_head_impl.1
$region0: #{_da_ins_head_impl.1}
  #allocation0 [shape = 'u32[]', space=smem, size = 0x4, offset = 0x4, fixed_abs, tag = 'smem constant byte address 0x4 - core index']
  #allocation1 [shape = 'u32[144,128]{1,0:T(1,128)}', space=vmem, size = 0x12000, scoped, tag = 'internal scratch']
  %s0 = inlined_call_operand.hbm [shape: f32[16,64], index: 0, kind: input, shape index: {}]
  %s1 = inlined_call_operand.hbm [shape: bf16[64,1024], index: 1, kind: input, shape index: {}]
  %s2 = inlined_call_operand.hbm [shape: f32[1,1024], index: 2, kind: input, shape index: {}]
  %s3 = inlined_call_operand.hbm [shape: bf16[1024,1024], index: 3, kind: input, shape index: {}]
  %s4 = inlined_call_operand.hbm [shape: f32[1,1024], index: 4, kind: input, shape index: {}]
  %s5 = inlined_call_operand.hbm [shape: bf16[1024,128], index: 5, kind: input, shape index: {}]
  %s6 = inlined_call_operand.hbm [shape: f32[1,128], index: 6, kind: input, shape index: {}]
  %s7 = inlined_call_operand.vmem [shape: f32[16,128], index: 7, kind: output, shape index: {}]
  %s8 = sld [smem:[#allocation0]]
  $region66: #{_da_ins_head_impl.1} parent=0
    _
  %s10 = ssub.s32 1, %s8
  %s11 = scalar_select 0, %s10, %s8
  $region1: #{_da_ins_head_impl.1} parent=0
    #allocation2 [shape = 'u8[8192]{0}', space=vmem, size = 0x2000, scoped, tag = 'input window, operand 0, single buffered']
    #allocation3 [shape = 's32[1]{0}', space=sflag, size = 0x4, scoped, tag = 'scoped memory for _da_ins_head_impl.1']
    #allocation4 [shape = 'u8[131072]{0}', space=vmem, size = 0x20000, scoped, tag = 'input window, operand 1, single buffered']
    #allocation5 [shape = 's32[1]{0}', space=sflag, size = 0x4, scoped, tag = 'scoped memory for _da_ins_head_impl.1']
    #allocation6 [shape = 'u8[4096]{0}', space=vmem, size = 0x1000, scoped, tag = 'input window, operand 2, single buffered']
    #allocation7 [shape = 'u8[2097152]{0}', space=vmem, size = 0x200000, scoped, tag = 'input window, operand 3, single buffered']
    #allocation8 [shape = 's32[1]{0}', space=sflag, size = 0x4, scoped, tag = 'scoped memory for _da_ins_head_impl.1']
    #allocation9 [shape = 'u8[4096]{0}', space=vmem, size = 0x1000, scoped, tag = 'input window, operand 4, single buffered']
    #allocation10 [shape = 'u8[262144]{0}', space=vmem, size = 0x40000, scoped, tag = 'input window, operand 5, single buffered']
    #allocation11 [shape = 's32[1]{0}', space=sflag, size = 0x4, scoped, tag = 'scoped memory for _da_ins_head_impl.1']
    #allocation12 [shape = 'u8[512]{0}', space=vmem, size = 0x400, scoped, tag = 'input window, operand 6, single buffered']
    %12 = vsyncpa [#allocation3], 0
    %13 = vsyncpa [#allocation5], 0
    %14 = vsyncpa [#allocation8], 0
    %15 = vsyncpa [#allocation11], 0
    // Predicated region
    $region2: #{_da_ins_head_impl.1} parent=1 // pred_check
      _
    $region3: #{_da_ins_head_impl.1} parent=1 // pred_check_branch
      %17 = sbr.rel (0) target = $region5
    $region4: #{_da_ins_head_impl.1} parent=1 // pred_region
      %s19 = ssub.s32 256, 256
      %20 = vsyncadd [#allocation3], %s19
      %s21 = sshll.u32 [#allocation2], 4
      %s22 = int_to_ptr.vmem [resolvable:$true] %s21
      %27 = dma.hbm_to_vmem [thread:$0]  %s0, 256, %s22, [#allocation3], 128, 128, 8
    $region5: #{_da_ins_head_impl.1} parent=1 // pred_fallthru
      _
    // Predicated region
    $region6: #{_da_ins_head_impl.1} parent=1 // pred_check
      _
    $region7: #{_da_ins_head_impl.1} parent=1 // pred_check_branch
      %29 = sbr.rel (0) target = $region9
    $region8: #{_da_ins_head_impl.1} parent=1 // pred_region
      %s31 = ssub.s32 4096, 4096
      %32 = vsyncadd [#allocation5], %s31
      %s33 = sshll.u32 [#allocation4], 4
      %s34 = int_to_ptr.vmem [resolvable:$true] %s33
      %39 = dma.hbm_to_vmem [thread:$0]  %s1, 4096, %s34, [#allocation5], 512, 512, 32
    $region9: #{_da_ins_head_impl.1} parent=1 // pred_fallthru
      _
    // Predicated region
    $region10: #{_da_ins_head_impl.1} parent=1 // pred_check
      _
    $region11: #{_da_ins_head_impl.1} parent=1 // pred_check_branch
      %41 = sbr.rel (0) target = $region13
    $region12: #{_da_ins_head_impl.1} parent=1 // pred_region
      %s43 = ssub.s32 128, 128
      %44 = vsyncadd [#allocation5], %s43
      %s46 = sshll.u32 [#allocation6], 4
      %s47 = int_to_ptr.vmem [resolvable:$true] %s46
      %49 = dma.hbm_to_vmem [thread:$0]  %s2, 128, %s47, [#allocation5]
    $region13: #{_da_ins_head_impl.1} parent=1 // pred_fallthru
      _
    // Predicated region
    $region14: #{_da_ins_head_impl.1} parent=1 // pred_check
      _
    $region15: #{_da_ins_head_impl.1} parent=1 // pred_check_branch
      %51 = sbr.rel (0) target = $region17
    $region16: #{_da_ins_head_impl.1} parent=1 // pred_region
      %s53 = ssub.s32 65536, 65536
      %54 = vsyncadd [#allocation8], %s53
      %s55 = sshll.u32 [#allocation7], 4
      %s56 = int_to_ptr.vmem [resolvable:$true] %s55
      %61 = dma.hbm_to_vmem [thread:$0]  %s3, 65536, %s56, [#allocation8], 512, 512, 32
    $region17: #{_da_ins_head_impl.1} parent=1 // pred_fallthru
      _
    // Predicated region
    $region18: #{_da_ins_head_impl.1} parent=1 // pred_check
      _
    $region19: #{_da_ins_head_impl.1} parent=1 // pred_check_branch
      %63 = sbr.rel (0) target = $region21
    $region20: #{_da_ins_head_impl.1} parent=1 // pred_region
      %s65 = ssub.s32 128, 128
      %66 = vsyncadd [#allocation8], %s65
      %s68 = sshll.u32 [#allocation9], 4
      %s69 = int_to_ptr.vmem [resolvable:$true] %s68
      %71 = dma.hbm_to_vmem [thread:$0]  %s4, 128, %s69, [#allocation8]
    $region21: #{_da_ins_head_impl.1} parent=1 // pred_fallthru
      _
    // Predicated region
    $region22: #{_da_ins_head_impl.1} parent=1 // pred_check
      _
    $region23: #{_da_ins_head_impl.1} parent=1 // pred_check_branch
      %73 = sbr.rel (0) target = $region25
    $region24: #{_da_ins_head_impl.1} parent=1 // pred_region
      %s75 = ssub.s32 8192, 8192
      %76 = vsyncadd [#allocation11], %s75
      %s77 = sshll.u32 [#allocation10], 4
      %s78 = int_to_ptr.vmem [resolvable:$true] %s77
      %83 = dma.hbm_to_vmem [thread:$0]  %s5, 8192, %s78, [#allocation11], 64, 64, 4
    $region25: #{_da_ins_head_impl.1} parent=1 // pred_fallthru
      _
    // Predicated region
    $region26: #{_da_ins_head_impl.1} parent=1 // pred_check
      _
    $region27: #{_da_ins_head_impl.1} parent=1 // pred_check_branch
      %85 = sbr.rel (0) target = $region29
    $region28: #{_da_ins_head_impl.1} parent=1 // pred_region
      %s87 = ssub.s32 16, 16
      %88 = vsyncadd [#allocation11], %s87
      %s90 = sshll.u32 [#allocation12], 4
      %s91 = int_to_ptr.vmem [resolvable:$true] %s90
      %93 = dma.hbm_to_vmem [thread:$0]  %s6, 16, %s91, [#allocation11]
    $region29: #{_da_ins_head_impl.1} parent=1 // pred_fallthru
      _
    // Predicated region
    $region30: #{_da_ins_head_impl.1} parent=1 // pred_check
      _
    $region31: #{_da_ins_head_impl.1} parent=1 // pred_check_branch
      %95 = sbr.rel (0) target = $region33
    $region32: #{_da_ins_head_impl.1} parent=1 // pred_region
      %96 = dma.done [#allocation3], 256
    $region33: #{_da_ins_head_impl.1} parent=1 // pred_fallthru
      _
    // Predicated region
    $region34: #{_da_ins_head_impl.1} parent=1 // pred_check
      _
    $region35: #{_da_ins_head_impl.1} parent=1 // pred_check_branch
      %98 = sbr.rel (0) target = $region37
    $region36: #{_da_ins_head_impl.1} parent=1 // pred_region
      %99 = dma.done [#allocation5], 4096
    $region37: #{_da_ins_head_impl.1} parent=1 // pred_fallthru
      _
    // Predicated region
    $region38: #{_da_ins_head_impl.1} parent=1 // pred_check
      _
    $region39: #{_da_ins_head_impl.1} parent=1 // pred_check_branch
      %101 = sbr.rel (0) target = $region41
    $region40: #{_da_ins_head_impl.1} parent=1 // pred_region
      %102 = dma.done [#allocation5], 128
    $region41: #{_da_ins_head_impl.1} parent=1 // pred_fallthru
      _
    // Predicated region
    $region42: #{_da_ins_head_impl.1} parent=1 // pred_check
      _
    $region43: #{_da_ins_head_impl.1} parent=1 // pred_check_branch
      %104 = sbr.rel (0) target = $region45
    $region44: #{_da_ins_head_impl.1} parent=1 // pred_region
      %105 = dma.done [#allocation8], 65536
    $region45: #{_da_ins_head_impl.1} parent=1 // pred_fallthru
      _
    // Predicated region
    $region46: #{_da_ins_head_impl.1} parent=1 // pred_check
      _
    $region47: #{_da_ins_head_impl.1} parent=1 // pred_check_branch
      %107 = sbr.rel (0) target = $region49
    $region48: #{_da_ins_head_impl.1} parent=1 // pred_region
      %108 = dma.done [#allocation8], 128
    $region49: #{_da_ins_head_impl.1} parent=1 // pred_fallthru
      _
    // Predicated region
    $region50: #{_da_ins_head_impl.1} parent=1 // pred_check
      _
    $region51: #{_da_ins_head_impl.1} parent=1 // pred_check_branch
      %110 = sbr.rel (0) target = $region53
    $region52: #{_da_ins_head_impl.1} parent=1 // pred_region
      %111 = dma.done [#allocation11], 8192
    $region53: #{_da_ins_head_impl.1} parent=1 // pred_fallthru
      _
    // Predicated region
    $region54: #{_da_ins_head_impl.1} parent=1 // pred_check
      _
    $region55: #{_da_ins_head_impl.1} parent=1 // pred_check_branch
      %113 = sbr.rel (0) target = $region57
    $region56: #{_da_ins_head_impl.1} parent=1 // pred_region
      %114 = dma.done [#allocation11], 16
    $region57: #{_da_ins_head_impl.1} parent=1 // pred_fallthru
      _
    %v116 = vld [vmem:[#allocation2] sm:$0xff]
    %v117 = vld [vmem:[#allocation2 + $0x8] sm:$0xff]
    %v118 = vpack.c.bf16 %v117, %v116
    %v119 = vld [vmem:[#allocation4] sm:$0xff]
    %v120 = vld [vmem:[#allocation4 + $0x8] sm:$0xff]
    %v121 = vld [vmem:[#allocation4 + $0x10] sm:$0xff]
    %v122 = vld [vmem:[#allocation4 + $0x18] sm:$0xff]
    %v123 = vld [vmem:[#allocation4 + $0x20] sm:$0xff]
    %v124 = vld [vmem:[#allocation4 + $0x28] sm:$0xff]
    %v125 = vld [vmem:[#allocation4 + $0x30] sm:$0xff]
    %v126 = vld [vmem:[#allocation4 + $0x38] sm:$0xff]
    %v127 = vld [vmem:[#allocation4 + $0x40] sm:$0xff]
    %v128 = vld [vmem:[#allocation4 + $0x48] sm:$0xff]
    %v129 = vld [vmem:[#allocation4 + $0x50] sm:$0xff]
    %v130 = vld [vmem:[#allocation4 + $0x58] sm:$0xff]
    %v131 = vld [vmem:[#allocation4 + $0x60] sm:$0xff]
    %v132 = vld [vmem:[#allocation4 + $0x68] sm:$0xff]
    %v133 = vld [vmem:[#allocation4 + $0x70] sm:$0xff]
    %v134 = vld [vmem:[#allocation4 + $0x78] sm:$0xff]
    %v135 = vld [vmem:[#allocation4 + $0x80] sm:$0xff]
    %v136 = vld [vmem:[#allocation4 + $0x88] sm:$0xff]
    %v137 = vld [vmem:[#allocation4 + $0x90] sm:$0xff]
    %v138 = vld [vmem:[#allocation4 + $0x98] sm:$0xff]
    %v139 = vld [vmem:[#allocation4 + $0xa0] sm:$0xff]
    %v140 = vld [vmem:[#allocation4 + $0xa8] sm:$0xff]
    %v141 = vld [vmem:[#allocation4 + $0xb0] sm:$0xff]
    %v142 = vld [vmem:[#allocation4 + $0xb8] sm:$0xff]
    %v143 = vld [vmem:[#allocation4 + $0xc0] sm:$0xff]
    %v144 = vld [vmem:[#allocation4 + $0xc8] sm:$0xff]
    %v145 = vld [vmem:[#allocation4 + $0xd0] sm:$0xff]
    %v146 = vld [vmem:[#allocation4 + $0xd8] sm:$0xff]
    %v147 = vld [vmem:[#allocation4 + $0xe0] sm:$0xff]
    %v148 = vld [vmem:[#allocation4 + $0xe8] sm:$0xff]
    %v149 = vld [vmem:[#allocation4 + $0xf0] sm:$0xff]
    %v150 = vld [vmem:[#allocation4 + $0xf8] sm:$0xff]
    %v151 = vld [vmem:[#allocation6] sm:$0xff]
    %v153 = vlaneseq
    %v154 = vshrl.u32 %v153, 7
    %v155 = vsub.s32 0, %v154
    %v156 = vrot.slane %v151, %v155
    %v157 = vlaneseq
    %v158 = vshrl.u32 %v157, 7
    %v159 = vsub.s32 1, %v158
    %v160 = vrot.slane %v151, %v159
    %v161 = vlaneseq
    %v162 = vshrl.u32 %v161, 7
    %v163 = vsub.s32 2, %v162
    %v164 = vrot.slane %v151, %v163
    %v165 = vlaneseq
    %v166 = vshrl.u32 %v165, 7
    %v167 = vsub.s32 3, %v166
    %v168 = vrot.slane %v151, %v167
    %v169 = vlaneseq
    %v170 = vshrl.u32 %v169, 7
    %v171 = vsub.s32 4, %v170
    %v172 = vrot.slane %v151, %v171
    %v173 = vlaneseq
    %v174 = vshrl.u32 %v173, 7
    %v175 = vsub.s32 5, %v174
    %v176 = vrot.slane %v151, %v175
    %v177 = vlaneseq
    %v178 = vshrl.u32 %v177, 7
    %v179 = vsub.s32 6, %v178
    %v180 = vrot.slane %v151, %v179
    %v181 = vlaneseq
    %v182 = vshrl.u32 %v181, 7
    %v183 = vsub.s32 7, %v182
    %v184 = vrot.slane %v151, %v183
    %v225 = vunpack.c.l.b16 %v119
    %v226 = vunpack.c.h.b16 %v119
    %v227 = vunpack.c.l.b16 %v120
    %v228 = vunpack.c.h.b16 %v120
    %v229 = vunpack.c.l.b16 %v121
    %v230 = vunpack.c.h.b16 %v121
    %v231 = vunpack.c.l.b16 %v122
    %v232 = vunpack.c.h.b16 %v122
    %v233 = vunpack.c.l.b16 %v123
    %v234 = vunpack.c.h.b16 %v123
    %v235 = vunpack.c.l.b16 %v124
    %v236 = vunpack.c.h.b16 %v124
    %v237 = vunpack.c.l.b16 %v125
    %v238 = vunpack.c.h.b16 %v125
    %v239 = vunpack.c.l.b16 %v126
    %v240 = vunpack.c.h.b16 %v126
    %v241 = vunpack.c.l.b16 %v127
    %v242 = vunpack.c.h.b16 %v127
    %v243 = vunpack.c.l.b16 %v128
    %v244 = vunpack.c.h.b16 %v128
    %v245 = vunpack.c.l.b16 %v129
    %v246 = vunpack.c.h.b16 %v129
    %v247 = vunpack.c.l.b16 %v130
    %v248 = vunpack.c.h.b16 %v130
    %v249 = vunpack.c.l.b16 %v131
    %v250 = vunpack.c.h.b16 %v131
    %v251 = vunpack.c.l.b16 %v132
    %v252 = vunpack.c.h.b16 %v132
    %v253 = vunpack.c.l.b16 %v133
    %v254 = vunpack.c.h.b16 %v133
    %v255 = vunpack.c.l.b16 %v134
    %v256 = vunpack.c.h.b16 %v134
    %v257 = vunpack.c.l.b16 %v135
    %v258 = vunpack.c.h.b16 %v135
    %v259 = vunpack.c.l.b16 %v136
    %v260 = vunpack.c.h.b16 %v136
    %v261 = vunpack.c.l.b16 %v137
    %v262 = vunpack.c.h.b16 %v137
    %v263 = vunpack.c.l.b16 %v138
    %v264 = vunpack.c.h.b16 %v138
    %v265 = vunpack.c.l.b16 %v139
    %v266 = vunpack.c.h.b16 %v139
    %v267 = vunpack.c.l.b16 %v140
    %v268 = vunpack.c.h.b16 %v140
    %v269 = vunpack.c.l.b16 %v141
    %v270 = vunpack.c.h.b16 %v141
    %v271 = vunpack.c.l.b16 %v142
    %v272 = vunpack.c.h.b16 %v142
    %v273 = vunpack.c.l.b16 %v143
    %v274 = vunpack.c.h.b16 %v143
    %v275 = vunpack.c.l.b16 %v144
    %v276 = vunpack.c.h.b16 %v144
    %v277 = vunpack.c.l.b16 %v145
    %v278 = vunpack.c.h.b16 %v145
    %v279 = vunpack.c.l.b16 %v146
    %v280 = vunpack.c.h.b16 %v146
    %v281 = vunpack.c.l.b16 %v147
    %v282 = vunpack.c.h.b16 %v147
    %v283 = vunpack.c.l.b16 %v148
    %v284 = vunpack.c.h.b16 %v148
    %v285 = vunpack.c.l.b16 %v149
    %v286 = vunpack.c.h.b16 %v149
    %v287 = vunpack.c.l.b16 %v150
    %v288 = vunpack.c.h.b16 %v150
    %v289 = vpack.c.b16 %v233, %v225
    %v290 = vpack.c.b16 %v234, %v226
    %v291 = vpack.c.b16 %v235, %v227
    %v292 = vpack.c.b16 %v236, %v228
    %v293 = vpack.c.b16 %v237, %v229
    %v294 = vpack.c.b16 %v238, %v230
    %v295 = vpack.c.b16 %v239, %v231
    %v296 = vpack.c.b16 %v240, %v232
    %v297 = vpack.c.b16 %v249, %v241
    %v298 = vpack.c.b16 %v250, %v242
    %v299 = vpack.c.b16 %v251, %v243
    %v300 = vpack.c.b16 %v252, %v244
    %v301 = vpack.c.b16 %v253, %v245
    %v302 = vpack.c.b16 %v254, %v246
    %v303 = vpack.c.b16 %v255, %v247
    %v304 = vpack.c.b16 %v256, %v248
    %v305 = vpack.c.b16 %v265, %v257
    %v306 = vpack.c.b16 %v266, %v258
    %v307 = vpack.c.b16 %v267, %v259
    %v308 = vpack.c.b16 %v268, %v260
    %v309 = vpack.c.b16 %v269, %v261
    %v310 = vpack.c.b16 %v270, %v262
    %v311 = vpack.c.b16 %v271, %v263
    %v312 = vpack.c.b16 %v272, %v264
    %v313 = vpack.c.b16 %v281, %v273
    %v314 = vpack.c.b16 %v282, %v274
    %v315 = vpack.c.b16 %v283, %v275
    %v316 = vpack.c.b16 %v284, %v276
    %v317 = vpack.c.b16 %v285, %v277
    %v318 = vpack.c.b16 %v286, %v278
    %v319 = vpack.c.b16 %v287, %v279
    %v320 = vpack.c.b16 %v288, %v280
    %vm353 = vcmask 523264
    %v355 = vsel %vm353, %v118, 0
    %357 = vmatprep.subr.bf16.mxu0 0
    %358 = vmatpush1.bf16.msra.mxu0 0
    %359 = vmatprep.subr.bf16.mxu0 0
    %360 = vmatpush1.bf16.msra.mxu0 0
    %361 = vmatprep.subr.bf16.mxu0 0
    %362 = vmatpush1.bf16.msra.mxu0 0
    %363 = vmatprep.subr.bf16.mxu0 0
    %364 = vmatpush1.bf16.msra.mxu0 0
    %365 = vmatprep.subr.bf16.mxu0 %v314
    %366 = vmatpush1.bf16.msra.mxu0 %v313
    %367 = vmatprep.subr.bf16.mxu0 %v306
    %368 = vmatpush1.bf16.msra.mxu0 %v305
    %369 = vmatprep.subr.bf16.mxu0 %v298
    %370 = vmatpush1.bf16.msra.mxu0 %v297
    %371 = vmatprep.subr.bf16.mxu0 %v290
    %372 = vmatpush1.bf16.msra.mxu0 %v289
    %373 = vmatprep.subr.bf16.mxu0 0
    %374 = vmatpush2.bf16.msra.mxu0 0
    %375 = vmatprep.subr.bf16.mxu0 0
    %376 = vmatpush2.bf16.msra.mxu0 0
    %377 = vmatprep.subr.bf16.mxu0 0
    %378 = vmatpush2.bf16.msra.mxu0 0
    %379 = vmatprep.subr.bf16.mxu0 0
    %380 = vmatpush2.bf16.msra.mxu0 0
    %381 = vmatprep.subr.bf16.mxu0 0
    %382 = vmatpush2.bf16.msra.mxu0 0
    %383 = vmatprep.subr.bf16.mxu0 0
    %384 = vmatpush2.bf16.msra.mxu0 0
    %385 = vmatprep.subr.bf16.mxu0 0
    %386 = vmatpush2.bf16.msra.mxu0 0
    %387 = vmatprep.subr.bf16.mxu0 0
    %388 = vmatpush2.bf16.msra.mxu0 0
    %389 = vmatprep.mubr.bf16.mxu0 0
    %390 = vmatmul.mubr.bf16.gmra.mxu0 %v355
    %v391 = vpop.f32.mrf.mxu0
    %v392 = vadd.f32 %v156, %v391
    %v393 = vpop.f32.mrf.mxu0
    %v394 = vadd.f32 %v160, %v393
    %v395 = vpop.f32.mrf.mxu0
    %v396 = vadd.f32 %v156, %v395
    %v397 = vpop.f32.mrf.mxu0
    %v398 = vadd.f32 %v160, %v397
    %399 = vdwg.mxu0
    %400 = vmatprep.subr.bf16.mxu0 0
    %401 = vmatpush1.bf16.msra.mxu0 0
    %402 = vmatprep.subr.bf16.mxu0 0
    %403 = vmatpush1.bf16.msra.mxu0 0
    %404 = vmatprep.subr.bf16.mxu0 0
    %405 = vmatpush1.bf16.msra.mxu0 0
    %406 = vmatprep.subr.bf16.mxu0 0
    %407 = vmatpush1.bf16.msra.mxu0 0
    %408 = vmatprep.subr.bf16.mxu0 %v316
    %409 = vmatpush1.bf16.msra.mxu0 %v315
    %410 = vmatprep.subr.bf16.mxu0 %v308
    %411 = vmatpush1.bf16.msra.mxu0 %v307
    %412 = vmatprep.subr.bf16.mxu0 %v300
    %413 = vmatpush1.bf16.msra.mxu0 %v299
    %414 = vmatprep.subr.bf16.mxu0 %v292
    %415 = vmatpush1.bf16.msra.mxu0 %v291
    %416 = vmatprep.subr.bf16.mxu0 0
    %417 = vmatpush2.bf16.msra.mxu0 0
    %418 = vmatprep.subr.bf16.mxu0 0
    %419 = vmatpush2.bf16.msra.mxu0 0
    %420 = vmatprep.subr.bf16.mxu0 0
    %421 = vmatpush2.bf16.msra.mxu0 0
    %422 = vmatprep.subr.bf16.mxu0 0
    %423 = vmatpush2.bf16.msra.mxu0 0
    %424 = vmatprep.subr.bf16.mxu0 0
    %425 = vmatpush2.bf16.msra.mxu0 0
    %426 = vmatprep.subr.bf16.mxu0 0
    %427 = vmatpush2.bf16.msra.mxu0 0
    %428 = vmatprep.subr.bf16.mxu0 0
    %429 = vmatpush2.bf16.msra.mxu0 0
    %430 = vmatprep.subr.bf16.mxu0 0
    %431 = vmatpush2.bf16.msra.mxu0 0
    %432 = vmatprep.mubr.bf16.mxu0 0
    %433 = vmatmul.mubr.bf16.gmra.mxu0 %v355
    %v434 = vpop.f32.mrf.mxu0
    %v435 = vadd.f32 %v164, %v434
    %v436 = vpop.f32.mrf.mxu0
    %v437 = vadd.f32 %v168, %v436
    %v438 = vpop.f32.mrf.mxu0
    %v439 = vadd.f32 %v164, %v438
    %v440 = vpop.f32.mrf.mxu0
    %v441 = vadd.f32 %v168, %v440
    %442 = vdwg.mxu0
    %443 = vmatprep.subr.bf16.mxu0 0
    %444 = vmatpush1.bf16.msra.mxu0 0
    %445 = vmatprep.subr.bf16.mxu0 0
    %446 = vmatpush1.bf16.msra.mxu0 0
    %447 = vmatprep.subr.bf16.mxu0 0
    %448 = vmatpush1.bf16.msra.mxu0 0
    %449 = vmatprep.subr.bf16.mxu0 0
    %450 = vmatpush1.bf16.msra.mxu0 0
    %451 = vmatprep.subr.bf16.mxu0 %v318
    %452 = vmatpush1.bf16.msra.mxu0 %v317
    %453 = vmatprep.subr.bf16.mxu0 %v310
    %454 = vmatpush1.bf16.msra.mxu0 %v309
    %455 = vmatprep.subr.bf16.mxu0 %v302
    %456 = vmatpush1.bf16.msra.mxu0 %v301
    %457 = vmatprep.subr.bf16.mxu0 %v294
    %458 = vmatpush1.bf16.msra.mxu0 %v293
    %459 = vmatprep.subr.bf16.mxu0 0
    %460 = vmatpush2.bf16.msra.mxu0 0
    %461 = vmatprep.subr.bf16.mxu0 0
    %462 = vmatpush2.bf16.msra.mxu0 0
    %463 = vmatprep.subr.bf16.mxu0 0
    %464 = vmatpush2.bf16.msra.mxu0 0
    %465 = vmatprep.subr.bf16.mxu0 0
    %466 = vmatpush2.bf16.msra.mxu0 0
    %467 = vmatprep.subr.bf16.mxu0 0
    %468 = vmatpush2.bf16.msra.mxu0 0
    %469 = vmatprep.subr.bf16.mxu0 0
    %470 = vmatpush2.bf16.msra.mxu0 0
    %471 = vmatprep.subr.bf16.mxu0 0
    %472 = vmatpush2.bf16.msra.mxu0 0
    %473 = vmatprep.subr.bf16.mxu0 0
    %474 = vmatpush2.bf16.msra.mxu0 0
    %475 = vmatprep.mubr.bf16.mxu0 0
    %476 = vmatmul.mubr.bf16.gmra.mxu0 %v355
    %v477 = vpop.f32.mrf.mxu0
    %v478 = vadd.f32 %v172, %v477
    %v479 = vpop.f32.mrf.mxu0
    %v480 = vadd.f32 %v176, %v479
    %v481 = vpop.f32.mrf.mxu0
    %v482 = vadd.f32 %v172, %v481
    %v483 = vpop.f32.mrf.mxu0
    %v484 = vadd.f32 %v176, %v483
    %485 = vdwg.mxu0
    %486 = vmatprep.subr.bf16.mxu0 0
    %487 = vmatpush1.bf16.msra.mxu0 0
    %488 = vmatprep.subr.bf16.mxu0 0
    %489 = vmatpush1.bf16.msra.mxu0 0
    %490 = vmatprep.subr.bf16.mxu0 0
    %491 = vmatpush1.bf16.msra.mxu0 0
    %492 = vmatprep.subr.bf16.mxu0 0
    %493 = vmatpush1.bf16.msra.mxu0 0
    %494 = vmatprep.subr.bf16.mxu0 %v320
    %495 = vmatpush1.bf16.msra.mxu0 %v319
    %496 = vmatprep.subr.bf16.mxu0 %v312
    %497 = vmatpush1.bf16.msra.mxu0 %v311
    %498 = vmatprep.subr.bf16.mxu0 %v304
    %499 = vmatpush1.bf16.msra.mxu0 %v303
    %500 = vmatprep.subr.bf16.mxu0 %v296
    %501 = vmatpush1.bf16.msra.mxu0 %v295
    %502 = vmatprep.subr.bf16.mxu0 0
    %503 = vmatpush2.bf16.msra.mxu0 0
    %504 = vmatprep.subr.bf16.mxu0 0
    %505 = vmatpush2.bf16.msra.mxu0 0
    %506 = vmatprep.subr.bf16.mxu0 0
    %507 = vmatpush2.bf16.msra.mxu0 0
    %508 = vmatprep.subr.bf16.mxu0 0
    %509 = vmatpush2.bf16.msra.mxu0 0
    %510 = vmatprep.subr.bf16.mxu0 0
    %511 = vmatpush2.bf16.msra.mxu0 0
    %512 = vmatprep.subr.bf16.mxu0 0
    %513 = vmatpush2.bf16.msra.mxu0 0
    %514 = vmatprep.subr.bf16.mxu0 0
    %515 = vmatpush2.bf16.msra.mxu0 0
    %516 = vmatprep.subr.bf16.mxu0 0
    %517 = vmatpush2.bf16.msra.mxu0 0
    %518 = vmatprep.mubr.bf16.mxu0 0
    %519 = vmatmul.mubr.bf16.gmra.mxu0 %v355
    %v520 = vpop.f32.mrf.mxu0
    %v521 = vadd.f32 %v180, %v520
    %v522 = vpop.f32.mrf.mxu0
    %v523 = vadd.f32 %v184, %v522
    %v524 = vpop.f32.mrf.mxu0
    %v525 = vadd.f32 %v180, %v524
    %v526 = vpop.f32.mrf.mxu0
    %v527 = vadd.f32 %v184, %v526
    %528 = vdwg.mxu0
    %v529 = vmax.f32 %v392, 0.0
    %v530 = vmax.f32 %v394, 0.0
    %v531 = vmax.f32 %v435, 0.0
    %v532 = vmax.f32 %v437, 0.0
    %v533 = vmax.f32 %v478, 0.0
    %v534 = vmax.f32 %v480, 0.0
    %v535 = vmax.f32 %v521, 0.0
    %v536 = vmax.f32 %v523, 0.0
    %v537 = vmax.f32 %v396, 0.0
    %v538 = vmax.f32 %v398, 0.0
    %v539 = vmax.f32 %v439, 0.0
    %v540 = vmax.f32 %v441, 0.0
    %v541 = vmax.f32 %v482, 0.0
    %v542 = vmax.f32 %v484, 0.0
    %v543 = vmax.f32 %v525, 0.0
    %v544 = vmax.f32 %v527, 0.0
    %v545 = vpack.c.bf16 %v537, %v529
    %v546 = vpack.c.bf16 %v538, %v530
    %v547 = vpack.c.bf16 %v539, %v531
    %v548 = vpack.c.bf16 %v540, %v532
    %v549 = vpack.c.bf16 %v541, %v533
    %v550 = vpack.c.bf16 %v542, %v534
    %v551 = vpack.c.bf16 %v543, %v535
    %v552 = vpack.c.bf16 %v544, %v536
    %v553 = vld [vmem:[#allocation7] sm:$0xff]
    %v554 = vld [vmem:[#allocation7 + $0x8] sm:$0xff]
    %v555 = vld [vmem:[#allocation7 + $0x10] sm:$0xff]
    %v556 = vld [vmem:[#allocation7 + $0x18] sm:$0xff]
    %v557 = vld [vmem:[#allocation7 + $0x20] sm:$0xff]
    %v558 = vld [vmem:[#allocation7 + $0x28] sm:$0xff]
    %v559 = vld [vmem:[#allocation7 + $0x30] sm:$0xff]
    %v560 = vld [vmem:[#allocation7 + $0x38] sm:$0xff]
    %v561 = vld [vmem:[#allocation7 + $0x40] sm:$0xff]
    %v562 = vld [vmem:[#allocation7 + $0x48] sm:$0xff]
    %v563 = vld [vmem:[#allocation7 + $0x50] sm:$0xff]
    %v564 = vld [vmem:[#allocation7 + $0x58] sm:$0xff]
    %v565 = vld [vmem:[#allocation7 + $0x60] sm:$0xff]
    %v566 = vld [vmem:[#allocation7 + $0x68] sm:$0xff]
    %v567 = vld [vmem:[#allocation7 + $0x70] sm:$0xff]
    %v568 = vld [vmem:[#allocation7 + $0x78] sm:$0xff]
    %v569 = vld [vmem:[#allocation7 + $0x80] sm:$0xff]
    %v570 = vld [vmem:[#allocation7 + $0x88] sm:$0xff]
    %v571 = vld [vmem:[#allocation7 + $0x90] sm:$0xff]
    %v572 = vld [vmem:[#allocation7 + $0x98] sm:$0xff]
    %v573 = vld [vmem:[#allocation7 + $0xa0] sm:$0xff]
    %v574 = vld [vmem:[#allocation7 + $0xa8] sm:$0xff]
    %v575 = vld [vmem:[#allocation7 + $0xb0] sm:$0xff]
    %v576 = vld [vmem:[#allocation7 + $0xb8] sm:$0xff]
    %v577 = vld [vmem:[#allocation7 + $0xc0] sm:$0xff]
    %v578 = vld [vmem:[#allocation7 + $0xc8] sm:$0xff]
    %v579 = vld [vmem:[#allocation7 + $0xd0] sm:$0xff]
    %v580 = vld [vmem:[#allocation7 + $0xd8] sm:$0xff]
    %v581 = vld [vmem:[#allocation7 + $0xe0] sm:$0xff]
    %v582 = vld [vmem:[#allocation7 + $0xe8] sm:$0xff]
    %v583 = vld [vmem:[#allocation7 + $0xf0] sm:$0xff]
    %v584 = vld [vmem:[#allocation7 + $0xf8] sm:$0xff]
    %v585 = vld [vmem:[#allocation7 + $0x100] sm:$0xff]
    %v586 = vld [vmem:[#allocation7 + $0x108] sm:$0xff]
    %v587 = vld [vmem:[#allocation7 + $0x110] sm:$0xff]
    %v588 = vld [vmem:[#allocation7 + $0x118] sm:$0xff]
    %v589 = vld [vmem:[#allocation7 + $0x120] sm:$0xff]
    %v590 = vld [vmem:[#allocation7 + $0x128] sm:$0xff]
    %v591 = vld [vmem:[#allocation7 + $0x130] sm:$0xff]
    %v592 = vld [vmem:[#allocation7 + $0x138] sm:$0xff]
    %v593 = vld [vmem:[#allocation7 + $0x140] sm:$0xff]
    %v594 = vld [vmem:[#allocation7 + $0x148] sm:$0xff]
    %v595 = vld [vmem:[#allocation7 + $0x150] sm:$0xff]
    %v596 = vld [vmem:[#allocation7 + $0x158] sm:$0xff]
    %v597 = vld [vmem:[#allocation7 + $0x160] sm:$0xff]
    %v598 = vld [vmem:[#allocation7 + $0x168] sm:$0xff]
    %v599 = vld [vmem:[#allocation7 + $0x170] sm:$0xff]
    %v600 = vld [vmem:[#allocation7 + $0x178] sm:$0xff]
    %v601 = vld [vmem:[#allocation7 + $0x180] sm:$0xff]
    %v602 = vld [vmem:[#allocation7 + $0x188] sm:$0xff]
    %v603 = vld [vmem:[#allocation7 + $0x190] sm:$0xff]
    %v604 = vld [vmem:[#allocation7 + $0x198] sm:$0xff]
    %v605 = vld [vmem:[#allocation7 + $0x1a0] sm:$0xff]
    %v606 = vld [vmem:[#allocation7 + $0x1a8] sm:$0xff]
    %v607 = vld [vmem:[#allocation7 + $0x1b0] sm:$0xff]
    %v608 = vld [vmem:[#allocation7 + $0x1b8] sm:$0xff]
    %v609 = vld [vmem:[#allocation7 + $0x1c0] sm:$0xff]
    %v610 = vld [vmem:[#allocation7 + $0x1c8] sm:$0xff]
    %v611 = vld [vmem:[#allocation7 + $0x1d0] sm:$0xff]
    %v612 = vld [vmem:[#allocation7 + $0x1d8] sm:$0xff]
    %v613 = vld [vmem:[#allocation7 + $0x1e0] sm:$0xff]
    %v614 = vld [vmem:[#allocation7 + $0x1e8] sm:$0xff]
    %v615 = vld [vmem:[#allocation7 + $0x1f0] sm:$0xff]
    %v616 = vld [vmem:[#allocation7 + $0x1f8] sm:$0xff]
    %v617 = vld [vmem:[#allocation7 + $0x200] sm:$0xff]
    %v618 = vld [vmem:[#allocation7 + $0x208] sm:$0xff]
    %v619 = vld [vmem:[#allocation7 + $0x210] sm:$0xff]
    %v620 = vld [vmem:[#allocation7 + $0x218] sm:$0xff]
    %v621 = vld [vmem:[#allocation7 + $0x220] sm:$0xff]
    %v622 = vld [vmem:[#allocation7 + $0x228] sm:$0xff]
    %v623 = vld [vmem:[#allocation7 + $0x230] sm:$0xff]
    %v624 = vld [vmem:[#allocation7 + $0x238] sm:$0xff]
    %v625 = vld [vmem:[#allocation7 + $0x240] sm:$0xff]
    %v626 = vld [vmem:[#allocation7 + $0x248] sm:$0xff]
    %v627 = vld [vmem:[#allocation7 + $0x250] sm:$0xff]
    %v628 = vld [vmem:[#allocation7 + $0x258] sm:$0xff]
    %v629 = vld [vmem:[#allocation7 + $0x260] sm:$0xff]
    %v630 = vld [vmem:[#allocation7 + $0x268] sm:$0xff]
    %v631 = vld [vmem:[#allocation7 + $0x270] sm:$0xff]
    %v632 = vld [vmem:[#allocation7 + $0x278] sm:$0xff]
    %v633 = vld [vmem:[#allocation7 + $0x280] sm:$0xff]
    %v634 = vld [vmem:[#allocation7 + $0x288] sm:$0xff]
    %v635 = vld [vmem:[#allocation7 + $0x290] sm:$0xff]
    %v636 = vld [vmem:[#allocation7 + $0x298] sm:$0xff]
    %v637 = vld [vmem:[#allocation7 + $0x2a0] sm:$0xff]
    %v638 = vld [vmem:[#allocation7 + $0x2a8] sm:$0xff]
    %v639 = vld [vmem:[#allocation7 + $0x2b0] sm:$0xff]
    %v640 = vld [vmem:[#allocation7 + $0x2b8] sm:$0xff]
    %v641 = vld [vmem:[#allocation7 + $0x2c0] sm:$0xff]
    %v642 = vld [vmem:[#allocation7 + $0x2c8] sm:$0xff]
    %v643 = vld [vmem:[#allocation7 + $0x2d0] sm:$0xff]
    %v644 = vld [vmem:[#allocation7 + $0x2d8] sm:$0xff]
    %v645 = vld [vmem:[#allocation7 + $0x2e0] sm:$0xff]
    %v646 = vld [vmem:[#allocation7 + $0x2e8] sm:$0xff]
    %v647 = vld [vmem:[#allocation7 + $0x2f0] sm:$0xff]
    %v648 = vld [vmem:[#allocation7 + $0x2f8] sm:$0xff]
    %v649 = vld [vmem:[#allocation7 + $0x300] sm:$0xff]
    %v650 = vld [vmem:[#allocation7 + $0x308] sm:$0xff]
    %v651 = vld [vmem:[#allocation7 + $0x310] sm:$0xff]
    %v652 = vld [vmem:[#allocation7 + $0x318] sm:$0xff]
    %v653 = vld [vmem:[#allocation7 + $0x320] sm:$0xff]
    %v654 = vld [vmem:[#allocation7 + $0x328] sm:$0xff]
    %v655 = vld [vmem:[#allocation7 + $0x330] sm:$0xff]
    %v656 = vld [vmem:[#allocation7 + $0x338] sm:$0xff]
    %v657 = vld [vmem:[#allocation7 + $0x340] sm:$0xff]
    %v658 = vld [vmem:[#allocation7 + $0x348] sm:$0xff]
    %v659 = vld [vmem:[#allocation7 + $0x350] sm:$0xff]
    %v660 = vld [vmem:[#allocation7 + $0x358] sm:$0xff]
    %v661 = vld [vmem:[#allocation7 + $0x360] sm:$0xff]
    %v662 = vld [vmem:[#allocation7 + $0x368] sm:$0xff]
    %v663 = vld [vmem:[#allocation7 + $0x370] sm:$0xff]
    %v664 = vld [vmem:[#allocation7 + $0x378] sm:$0xff]
    %v665 = vld [vmem:[#allocation7 + $0x380] sm:$0xff]
    %v666 = vld [vmem:[#allocation7 + $0x388] sm:$0xff]
    %v667 = vld [vmem:[#allocation7 + $0x390] sm:$0xff]
    %v668 = vld [vmem:[#allocation7 + $0x398] sm:$0xff]
    %v669 = vld [vmem:[#allocation7 + $0x3a0] sm:$0xff]
    %v670 = vld [vmem:[#allocation7 + $0x3a8] sm:$0xff]
    %v671 = vld [vmem:[#allocation7 + $0x3b0] sm:$0xff]
    %v672 = vld [vmem:[#allocation7 + $0x3b8] sm:$0xff]
    %v673 = vld [vmem:[#allocation7 + $0x3c0] sm:$0xff]
    %v674 = vld [vmem:[#allocation7 + $0x3c8] sm:$0xff]
    %v675 = vld [vmem:[#allocation7 + $0x3d0] sm:$0xff]
    %v676 = vld [vmem:[#allocation7 + $0x3d8] sm:$0xff]
    %v677 = vld [vmem:[#allocation7 + $0x3e0] sm:$0xff]
    %v678 = vld [vmem:[#allocation7 + $0x3e8] sm:$0xff]
    %v679 = vld [vmem:[#allocation7 + $0x3f0] sm:$0xff]
    %v680 = vld [vmem:[#allocation7 + $0x3f8] sm:$0xff]
    %v681 = vld [vmem:[#allocation7 + $0x400] sm:$0xff]
    %v682 = vld [vmem:[#allocation7 + $0x408] sm:$0xff]
    %v683 = vld [vmem:[#allocation7 + $0x410] sm:$0xff]
    %v684 = vld [vmem:[#allocation7 + $0x418] sm:$0xff]
    %v685 = vld [vmem:[#allocation7 + $0x420] sm:$0xff]
    %v686 = vld [vmem:[#allocation7 + $0x428] sm:$0xff]
    %v687 = vld [vmem:[#allocation7 + $0x430] sm:$0xff]
    %v688 = vld [vmem:[#allocation7 + $0x438] sm:$0xff]
    %v689 = vld [vmem:[#allocation7 + $0x440] sm:$0xff]
    %v690 = vld [vmem:[#allocation7 + $0x448] sm:$0xff]
    %v691 = vld [vmem:[#allocation7 + $0x450] sm:$0xff]
    %v692 = vld [vmem:[#allocation7 + $0x458] sm:$0xff]
    %v693 = vld [vmem:[#allocation7 + $0x460] sm:$0xff]
    %v694 = vld [vmem:[#allocation7 + $0x468] sm:$0xff]
    %v695 = vld [vmem:[#allocation7 + $0x470] sm:$0xff]
    %v696 = vld [vmem:[#allocation7 + $0x478] sm:$0xff]
    %v697 = vld [vmem:[#allocation7 + $0x480] sm:$0xff]
    %v698 = vld [vmem:[#allocation7 + $0x488] sm:$0xff]
    %v699 = vld [vmem:[#allocation7 + $0x490] sm:$0xff]
    %v700 = vld [vmem:[#allocation7 + $0x498] sm:$0xff]
    %v701 = vld [vmem:[#allocation7 + $0x4a0] sm:$0xff]
    %v702 = vld [vmem:[#allocation7 + $0x4a8] sm:$0xff]
    %v703 = vld [vmem:[#allocation7 + $0x4b0] sm:$0xff]
    %v704 = vld [vmem:[#allocation7 + $0x4b8] sm:$0xff]
    %v705 = vld [vmem:[#allocation7 + $0x4c0] sm:$0xff]
    %v706 = vld [vmem:[#allocation7 + $0x4c8] sm:$0xff]
    %v707 = vld [vmem:[#allocation7 + $0x4d0] sm:$0xff]
    %v708 = vld [vmem:[#allocation7 + $0x4d8] sm:$0xff]
    %v709 = vld [vmem:[#allocation7 + $0x4e0] sm:$0xff]
    %v710 = vld [vmem:[#allocation7 + $0x4e8] sm:$0xff]
    %v711 = vld [vmem:[#allocation7 + $0x4f0] sm:$0xff]
    %v712 = vld [vmem:[#allocation7 + $0x4f8] sm:$0xff]
    %v713 = vld [vmem:[#allocation7 + $0x500] sm:$0xff]
    %v714 = vld [vmem:[#allocation7 + $0x508] sm:$0xff]
    %v715 = vld [vmem:[#allocation7 + $0x510] sm:$0xff]
    %v716 = vld [vmem:[#allocation7 + $0x518] sm:$0xff]
    %v717 = vld [vmem:[#allocation7 + $0x520] sm:$0xff]
    %v718 = vld [vmem:[#allocation7 + $0x528] sm:$0xff]
    %v719 = vld [vmem:[#allocation7 + $0x530] sm:$0xff]
    %v720 = vld [vmem:[#allocation7 + $0x538] sm:$0xff]
    %v721 = vld [vmem:[#allocation7 + $0x540] sm:$0xff]
    %v722 = vld [vmem:[#allocation7 + $0x548] sm:$0xff]
    %v723 = vld [vmem:[#allocation7 + $0x550] sm:$0xff]
    %v724 = vld [vmem:[#allocation7 + $0x558] sm:$0xff]
    %v725 = vld [vmem:[#allocation7 + $0x560] sm:$0xff]
    %v726 = vld [vmem:[#allocation7 + $0x568] sm:$0xff]
    %v727 = vld [vmem:[#allocation7 + $0x570] sm:$0xff]
    %v728 = vld [vmem:[#allocation7 + $0x578] sm:$0xff]
    %v729 = vld [vmem:[#allocation7 + $0x580] sm:$0xff]
    %v730 = vld [vmem:[#allocation7 + $0x588] sm:$0xff]
    %v731 = vld [vmem:[#allocation7 + $0x590] sm:$0xff]
    %v732 = vld [vmem:[#allocation7 + $0x598] sm:$0xff]
    %v733 = vld [vmem:[#allocation7 + $0x5a0] sm:$0xff]
    %v734 = vld [vmem:[#allocation7 + $0x5a8] sm:$0xff]
    %v735 = vld [vmem:[#allocation7 + $0x5b0] sm:$0xff]
    %v736 = vld [vmem:[#allocation7 + $0x5b8] sm:$0xff]
    %v737 = vld [vmem:[#allocation7 + $0x5c0] sm:$0xff]
    %v738 = vld [vmem:[#allocation7 + $0x5c8] sm:$0xff]
    %v739 = vld [vmem:[#allocation7 + $0x5d0] sm:$0xff]
    %v740 = vld [vmem:[#allocation7 + $0x5d8] sm:$0xff]
    %v741 = vld [vmem:[#allocation7 + $0x5e0] sm:$0xff]
    %v742 = vld [vmem:[#allocation7 + $0x5e8] sm:$0xff]
    %v743 = vld [vmem:[#allocation7 + $0x5f0] sm:$0xff]
    %v744 = vld [vmem:[#allocation7 + $0x5f8] sm:$0xff]
    %v745 = vld [vmem:[#allocation7 + $0x600] sm:$0xff]
    %v746 = vld [vmem:[#allocation7 + $0x608] sm:$0xff]
    %v747 = vld [vmem:[#allocation7 + $0x610] sm:$0xff]
    %v748 = vld [vmem:[#allocation7 + $0x618] sm:$0xff]
    %v749 = vld [vmem:[#allocation7 + $0x620] sm:$0xff]
    %v750 = vld [vmem:[#allocation7 + $0x628] sm:$0xff]
    %v751 = vld [vmem:[#allocation7 + $0x630] sm:$0xff]
    %v752 = vld [vmem:[#allocation7 + $0x638] sm:$0xff]
    %v753 = vld [vmem:[#allocation7 + $0x640] sm:$0xff]
    %v754 = vld [vmem:[#allocation7 + $0x648] sm:$0xff]
    %v755 = vld [vmem:[#allocation7 + $0x650] sm:$0xff]
    %v756 = vld [vmem:[#allocation7 + $0x658] sm:$0xff]
    %v757 = vld [vmem:[#allocation7 + $0x660] sm:$0xff]
    %v758 = vld [vmem:[#allocation7 + $0x668] sm:$0xff]
    %v759 = vld [vmem:[#allocation7 + $0x670] sm:$0xff]
    %v760 = vld [vmem:[#allocation7 + $0x678] sm:$0xff]
    %v761 = vld [vmem:[#allocation7 + $0x680] sm:$0xff]
    %v762 = vld [vmem:[#allocation7 + $0x688] sm:$0xff]
    %v763 = vld [vmem:[#allocation7 + $0x690] sm:$0xff]
    %v764 = vld [vmem:[#allocation7 + $0x698] sm:$0xff]
    %v765 = vld [vmem:[#allocation7 + $0x6a0] sm:$0xff]
    %v766 = vld [vmem:[#allocation7 + $0x6a8] sm:$0xff]
    %v767 = vld [vmem:[#allocation7 + $0x6b0] sm:$0xff]
    %v768 = vld [vmem:[#allocation7 + $0x6b8] sm:$0xff]
    %v769 = vld [vmem:[#allocation7 + $0x6c0] sm:$0xff]
    %v770 = vld [vmem:[#allocation7 + $0x6c8] sm:$0xff]
    %v771 = vld [vmem:[#allocation7 + $0x6d0] sm:$0xff]
    %v772 = vld [vmem:[#allocation7 + $0x6d8] sm:$0xff]
    %v773 = vld [vmem:[#allocation7 + $0x6e0] sm:$0xff]
    %v774 = vld [vmem:[#allocation7 + $0x6e8] sm:$0xff]
    %v775 = vld [vmem:[#allocation7 + $0x6f0] sm:$0xff]
    %v776 = vld [vmem:[#allocation7 + $0x6f8] sm:$0xff]
    %v777 = vld [vmem:[#allocation7 + $0x700] sm:$0xff]
    %v778 = vld [vmem:[#allocation7 + $0x708] sm:$0xff]
    %v779 = vld [vmem:[#allocation7 + $0x710] sm:$0xff]
    %v780 = vld [vmem:[#allocation7 + $0x718] sm:$0xff]
    %v781 = vld [vmem:[#allocation7 + $0x720] sm:$0xff]
    %v782 = vld [vmem:[#allocation7 + $0x728] sm:$0xff]
    %v783 = vld [vmem:[#allocation7 + $0x730] sm:$0xff]
    %v784 = vld [vmem:[#allocation7 + $0x738] sm:$0xff]
    %v785 = vld [vmem:[#allocation7 + $0x740] sm:$0xff]
    %v786 = vld [vmem:[#allocation7 + $0x748] sm:$0xff]
    %v787 = vld [vmem:[#allocation7 + $0x750] sm:$0xff]
    %v788 = vld [vmem:[#allocation7 + $0x758] sm:$0xff]
    %v789 = vld [vmem:[#allocation7 + $0x760] sm:$0xff]
    %v790 = vld [vmem:[#allocation7 + $0x768] sm:$0xff]
    %v791 = vld [vmem:[#allocation7 + $0x770] sm:$0xff]
    %v792 = vld [vmem:[#allocation7 + $0x778] sm:$0xff]
    %v793 = vld [vmem:[#allocation7 + $0x780] sm:$0xff]
    %v794 = vld [vmem:[#allocation7 + $0x788] sm:$0xff]
    %v795 = vld [vmem:[#allocation7 + $0x790] sm:$0xff]
    %v796 = vld [vmem:[#allocation7 + $0x798] sm:$0xff]
    %v797 = vld [vmem:[#allocation7 + $0x7a0] sm:$0xff]
    %v798 = vld [vmem:[#allocation7 + $0x7a8] sm:$0xff]
    %v799 = vld [vmem:[#allocation7 + $0x7b0] sm:$0xff]
    %v800 = vld [vmem:[#allocation7 + $0x7b8] sm:$0xff]
    %v801 = vld [vmem:[#allocation7 + $0x7c0] sm:$0xff]
    %v802 = vld [vmem:[#allocation7 + $0x7c8] sm:$0xff]
    %v803 = vld [vmem:[#allocation7 + $0x7d0] sm:$0xff]
    %v804 = vld [vmem:[#allocation7 + $0x7d8] sm:$0xff]
    %v805 = vld [vmem:[#allocation7 + $0x7e0] sm:$0xff]
    %v806 = vld [vmem:[#allocation7 + $0x7e8] sm:$0xff]
    %v807 = vld [vmem:[#allocation7 + $0x7f0] sm:$0xff]
    %v808 = vld [vmem:[#allocation7 + $0x7f8] sm:$0xff]
    %v809 = vld [vmem:[#allocation7 + $0x800] sm:$0xff]
    %v810 = vld [vmem:[#allocation7 + $0x808] sm:$0xff]
    %v811 = vld [vmem:[#allocation7 + $0x810] sm:$0xff]
    %v812 = vld [vmem:[#allocation7 + $0x818] sm:$0xff]
    %v813 = vld [vmem:[#allocation7 + $0x820] sm:$0xff]
    %v814 = vld [vmem:[#allocation7 + $0x828] sm:$0xff]
    %v815 = vld [vmem:[#allocation7 + $0x830] sm:$0xff]
    %v816 = vld [vmem:[#allocation7 + $0x838] sm:$0xff]
    %v817 = vld [vmem:[#allocation7 + $0x840] sm:$0xff]
    %v818 = vld [vmem:[#allocation7 + $0x848] sm:$0xff]
    %v819 = vld [vmem:[#allocation7 + $0x850] sm:$0xff]
    %v820 = vld [vmem:[#allocation7 + $0x858] sm:$0xff]
    %v821 = vld [vmem:[#allocation7 + $0x860] sm:$0xff]
    %v822 = vld [vmem:[#allocation7 + $0x868] sm:$0xff]
    %v823 = vld [vmem:[#allocation7 + $0x870] sm:$0xff]
    %v824 = vld [vmem:[#allocation7 + $0x878] sm:$0xff]
    %v825 = vld [vmem:[#allocation7 + $0x880] sm:$0xff]
    %v826 = vld [vmem:[#allocation7 + $0x888] sm:$0xff]
    %v827 = vld [vmem:[#allocation7 + $0x890] sm:$0xff]
    %v828 = vld [vmem:[#allocation7 + $0x898] sm:$0xff]
    %v829 = vld [vmem:[#allocation7 + $0x8a0] sm:$0xff]
    %v830 = vld [vmem:[#allocation7 + $0x8a8] sm:$0xff]
    %v831 = vld [vmem:[#allocation7 + $0x8b0] sm:$0xff]
    %v832 = vld [vmem:[#allocation7 + $0x8b8] sm:$0xff]
    %v833 = vld [vmem:[#allocation7 + $0x8c0] sm:$0xff]
    %v834 = vld [vmem:[#allocation7 + $0x8c8] sm:$0xff]
    %v835 = vld [vmem:[#allocation7 + $0x8d0] sm:$0xff]
    %v836 = vld [vmem:[#allocation7 + $0x8d8] sm:$0xff]
    %v837 = vld [vmem:[#allocation7 + $0x8e0] sm:$0xff]
    %v838 = vld [vmem:[#allocation7 + $0x8e8] sm:$0xff]
    %v839 = vld [vmem:[#allocation7 + $0x8f0] sm:$0xff]
    %v840 = vld [vmem:[#allocation7 + $0x8f8] sm:$0xff]
    %v841 = vld [vmem:[#allocation7 + $0x900] sm:$0xff]
    %v842 = vld [vmem:[#allocation7 + $0x908] sm:$0xff]
    %v843 = vld [vmem:[#allocation7 + $0x910] sm:$0xff]
    %v844 = vld [vmem:[#allocation7 + $0x918] sm:$0xff]
    %v845 = vld [vmem:[#allocation7 + $0x920] sm:$0xff]
    %v846 = vld [vmem:[#allocation7 + $0x928] sm:$0xff]
    %v847 = vld [vmem:[#allocation7 + $0x930] sm:$0xff]
    %v848 = vld [vmem:[#allocation7 + $0x938] sm:$0xff]
    %v849 = vld [vmem:[#allocation7 + $0x940] sm:$0xff]
    %v850 = vld [vmem:[#allocation7 + $0x948] sm:$0xff]
    %v851 = vld [vmem:[#allocation7 + $0x950] sm:$0xff]
    %v852 = vld [vmem:[#allocation7 + $0x958] sm:$0xff]
    %v853 = vld [vmem:[#allocation7 + $0x960] sm:$0xff]
    %v854 = vld [vmem:[#allocation7 + $0x968] sm:$0xff]
    %v855 = vld [vmem:[#allocation7 + $0x970] sm:$0xff]
    %v856 = vld [vmem:[#allocation7 + $0x978] sm:$0xff]
    %v857 = vld [vmem:[#allocation7 + $0x980] sm:$0xff]
    %v858 = vld [vmem:[#allocation7 + $0x988] sm:$0xff]
    %v859 = vld [vmem:[#allocation7 + $0x990] sm:$0xff]
    %v860 = vld [vmem:[#allocation7 + $0x998] sm:$0xff]
    %v861 = vld [vmem:[#allocation7 + $0x9a0] sm:$0xff]
    %v862 = vld [vmem:[#allocation7 + $0x9a8] sm:$0xff]
    %v863 = vld [vmem:[#allocation7 + $0x9b0] sm:$0xff]
    %v864 = vld [vmem:[#allocation7 + $0x9b8] sm:$0xff]
    %v865 = vld [vmem:[#allocation7 + $0x9c0] sm:$0xff]
    %v866 = vld [vmem:[#allocation7 + $0x9c8] sm:$0xff]
    %v867 = vld [vmem:[#allocation7 + $0x9d0] sm:$0xff]
    %v868 = vld [vmem:[#allocation7 + $0x9d8] sm:$0xff]
    %v869 = vld [vmem:[#allocation7 + $0x9e0] sm:$0xff]
    %v870 = vld [vmem:[#allocation7 + $0x9e8] sm:$0xff]
    %v871 = vld [vmem:[#allocation7 + $0x9f0] sm:$0xff]
    %v872 = vld [vmem:[#allocation7 + $0x9f8] sm:$0xff]
    %v873 = vld [vmem:[#allocation7 + $0xa00] sm:$0xff]
    %v874 = vld [vmem:[#allocation7 + $0xa08] sm:$0xff]
    %v875 = vld [vmem:[#allocation7 + $0xa10] sm:$0xff]
    %v876 = vld [vmem:[#allocation7 + $0xa18] sm:$0xff]
    %v877 = vld [vmem:[#allocation7 + $0xa20] sm:$0xff]
    %v878 = vld [vmem:[#allocation7 + $0xa28] sm:$0xff]
    %v879 = vld [vmem:[#allocation7 + $0xa30] sm:$0xff]
    %v880 = vld [vmem:[#allocation7 + $0xa38] sm:$0xff]
    %v881 = vld [vmem:[#allocation7 + $0xa40] sm:$0xff]
    %v882 = vld [vmem:[#allocation7 + $0xa48] sm:$0xff]
    %v883 = vld [vmem:[#allocation7 + $0xa50] sm:$0xff]
    %v884 = vld [vmem:[#allocation7 + $0xa58] sm:$0xff]
    %v885 = vld [vmem:[#allocation7 + $0xa60] sm:$0xff]
    %v886 = vld [vmem:[#allocation7 + $0xa68] sm:$0xff]
    %v887 = vld [vmem:[#allocation7 + $0xa70] sm:$0xff]
    %v888 = vld [vmem:[#allocation7 + $0xa78] sm:$0xff]
    %v889 = vld [vmem:[#allocation7 + $0xa80] sm:$0xff]
    %v890 = vld [vmem:[#allocation7 + $0xa88] sm:$0xff]
    %v891 = vld [vmem:[#allocation7 + $0xa90] sm:$0xff]
    %v892 = vld [vmem:[#allocation7 + $0xa98] sm:$0xff]
    %v893 = vld [vmem:[#allocation7 + $0xaa0] sm:$0xff]
    %v894 = vld [vmem:[#allocation7 + $0xaa8] sm:$0xff]
    %v895 = vld [vmem:[#allocation7 + $0xab0] sm:$0xff]
    %v896 = vld [vmem:[#allocation7 + $0xab8] sm:$0xff]
    %v897 = vld [vmem:[#allocation7 + $0xac0] sm:$0xff]
    %v898 = vld [vmem:[#allocation7 + $0xac8] sm:$0xff]
    %v899 = vld [vmem:[#allocation7 + $0xad0] sm:$0xff]
    %v900 = vld [vmem:[#allocation7 + $0xad8] sm:$0xff]
    %v901 = vld [vmem:[#allocation7 + $0xae0] sm:$0xff]
    %v902 = vld [vmem:[#allocation7 + $0xae8] sm:$0xff]
    %v903 = vld [vmem:[#allocation7 + $0xaf0] sm:$0xff]
    %v904 = vld [vmem:[#allocation7 + $0xaf8] sm:$0xff]
    %v905 = vld [vmem:[#allocation7 + $0xb00] sm:$0xff]
    %v906 = vld [vmem:[#allocation7 + $0xb08] sm:$0xff]
    %v907 = vld [vmem:[#allocation7 + $0xb10] sm:$0xff]
    %v908 = vld [vmem:[#allocation7 + $0xb18] sm:$0xff]
    %v909 = vld [vmem:[#allocation7 + $0xb20] sm:$0xff]
    %v910 = vld [vmem:[#allocation7 + $0xb28] sm:$0xff]
    %v911 = vld [vmem:[#allocation7 + $0xb30] sm:$0xff]
    %v912 = vld [vmem:[#allocation7 + $0xb38] sm:$0xff]
    %v913 = vld [vmem:[#allocation7 + $0xb40] sm:$0xff]
    %v914 = vld [vmem:[#allocation7 + $0xb48] sm:$0xff]
    %v915 = vld [vmem:[#allocation7 + $0xb50] sm:$0xff]
    %v916 = vld [vmem:[#allocation7 + $0xb58] sm:$0xff]
    %v917 = vld [vmem:[#allocation7 + $0xb60] sm:$0xff]
    %v918 = vld [vmem:[#allocation7 + $0xb68] sm:$0xff]
    %v919 = vld [vmem:[#allocation7 + $0xb70] sm:$0xff]
    %v920 = vld [vmem:[#allocation7 + $0xb78] sm:$0xff]
    %v921 = vld [vmem:[#allocation7 + $0xb80] sm:$0xff]
    %v922 = vld [vmem:[#allocation7 + $0xb88] sm:$0xff]
    %v923 = vld [vmem:[#allocation7 + $0xb90] sm:$0xff]
    %v924 = vld [vmem:[#allocation7 + $0xb98] sm:$0xff]
    %v925 = vld [vmem:[#allocation7 + $0xba0] sm:$0xff]
    %v926 = vld [vmem:[#allocation7 + $0xba8] sm:$0xff]
    %v927 = vld [vmem:[#allocation7 + $0xbb0] sm:$0xff]
    %v928 = vld [vmem:[#allocation7 + $0xbb8] sm:$0xff]
    %v929 = vld [vmem:[#allocation7 + $0xbc0] sm:$0xff]
    %v930 = vld [vmem:[#allocation7 + $0xbc8] sm:$0xff]
    %v931 = vld [vmem:[#allocation7 + $0xbd0] sm:$0xff]
    %v932 = vld [vmem:[#allocation7 + $0xbd8] sm:$0xff]
    %v933 = vld [vmem:[#allocation7 + $0xbe0] sm:$0xff]
    %v934 = vld [vmem:[#allocation7 + $0xbe8] sm:$0xff]
    %v935 = vld [vmem:[#allocation7 + $0xbf0] sm:$0xff]
    %v936 = vld [vmem:[#allocation7 + $0xbf8] sm:$0xff]
    %v937 = vld [vmem:[#allocation7 + $0xc00] sm:$0xff]
    %v938 = vld [vmem:[#allocation7 + $0xc08] sm:$0xff]
    %v939 = vld [vmem:[#allocation7 + $0xc10] sm:$0xff]
    %v940 = vld [vmem:[#allocation7 + $0xc18] sm:$0xff]
    %v941 = vld [vmem:[#allocation7 + $0xc20] sm:$0xff]
    %v942 = vld [vmem:[#allocation7 + $0xc28] sm:$0xff]
    %v943 = vld [vmem:[#allocation7 + $0xc30] sm:$0xff]
    %v944 = vld [vmem:[#allocation7 + $0xc38] sm:$0xff]
    %v945 = vld [vmem:[#allocation7 + $0xc40] sm:$0xff]
    %v946 = vld [vmem:[#allocation7 + $0xc48] sm:$0xff]
    %v947 = vld [vmem:[#allocation7 + $0xc50] sm:$0xff]
    %v948 = vld [vmem:[#allocation7 + $0xc58] sm:$0xff]
    %v949 = vld [vmem:[#allocation7 + $0xc60] sm:$0xff]
    %v950 = vld [vmem:[#allocation7 + $0xc68] sm:$0xff]
    %v951 = vld [vmem:[#allocation7 + $0xc70] sm:$0xff]
    %v952 = vld [vmem:[#allocation7 + $0xc78] sm:$0xff]
    %v953 = vld [vmem:[#allocation7 + $0xc80] sm:$0xff]
    %v954 = vld [vmem:[#allocation7 + $0xc88] sm:$0xff]
    %v955 = vld [vmem:[#allocation7 + $0xc90] sm:$0xff]
    %v956 = vld [vmem:[#allocation7 + $0xc98] sm:$0xff]
    %v957 = vld [vmem:[#allocation7 + $0xca0] sm:$0xff]
    %v958 = vld [vmem:[#allocation7 + $0xca8] sm:$0xff]
    %v959 = vld [vmem:[#allocation7 + $0xcb0] sm:$0xff]
    %v960 = vld [vmem:[#allocation7 + $0xcb8] sm:$0xff]
    %v961 = vld [vmem:[#allocation7 + $0xcc0] sm:$0xff]
    %v962 = vld [vmem:[#allocation7 + $0xcc8] sm:$0xff]
    %v963 = vld [vmem:[#allocation7 + $0xcd0] sm:$0xff]
    %v964 = vld [vmem:[#allocation7 + $0xcd8] sm:$0xff]
    %v965 = vld [vmem:[#allocation7 + $0xce0] sm:$0xff]
    %v966 = vld [vmem:[#allocation7 + $0xce8] sm:$0xff]
    %v967 = vld [vmem:[#allocation7 + $0xcf0] sm:$0xff]
    %v968 = vld [vmem:[#allocation7 + $0xcf8] sm:$0xff]
    %v969 = vld [vmem:[#allocation7 + $0xd00] sm:$0xff]
    %v970 = vld [vmem:[#allocation7 + $0xd08] sm:$0xff]
    %v971 = vld [vmem:[#allocation7 + $0xd10] sm:$0xff]
    %v972 = vld [vmem:[#allocation7 + $0xd18] sm:$0xff]
    %v973 = vld [vmem:[#allocation7 + $0xd20] sm:$0xff]
    %v974 = vld [vmem:[#allocation7 + $0xd28] sm:$0xff]
    %v975 = vld [vmem:[#allocation7 + $0xd30] sm:$0xff]
    %v976 = vld [vmem:[#allocation7 + $0xd38] sm:$0xff]
    %v977 = vld [vmem:[#allocation7 + $0xd40] sm:$0xff]
    %v978 = vld [vmem:[#allocation7 + $0xd48] sm:$0xff]
    %v979 = vld [vmem:[#allocation7 + $0xd50] sm:$0xff]
    %v980 = vld [vmem:[#allocation7 + $0xd58] sm:$0xff]
    %v981 = vld [vmem:[#allocation7 + $0xd60] sm:$0xff]
    %v982 = vld [vmem:[#allocation7 + $0xd68] sm:$0xff]
    %v983 = vld [vmem:[#allocation7 + $0xd70] sm:$0xff]
    %v984 = vld [vmem:[#allocation7 + $0xd78] sm:$0xff]
    %v985 = vld [vmem:[#allocation7 + $0xd80] sm:$0xff]
    %v986 = vld [vmem:[#allocation7 + $0xd88] sm:$0xff]
    %v987 = vld [vmem:[#allocation7 + $0xd90] sm:$0xff]
    %v988 = vld [vmem:[#allocation7 + $0xd98] sm:$0xff]
    %v989 = vld [vmem:[#allocation7 + $0xda0] sm:$0xff]
    %v990 = vld [vmem:[#allocation7 + $0xda8] sm:$0xff]
    %v991 = vld [vmem:[#allocation7 + $0xdb0] sm:$0xff]
    %v992 = vld [vmem:[#allocation7 + $0xdb8] sm:$0xff]
    %v993 = vld [vmem:[#allocation7 + $0xdc0] sm:$0xff]
    %v994 = vld [vmem:[#allocation7 + $0xdc8] sm:$0xff]
    %v995 = vld [vmem:[#allocation7 + $0xdd0] sm:$0xff]
    %v996 = vld [vmem:[#allocation7 + $0xdd8] sm:$0xff]
    %v997 = vld [vmem:[#allocation7 + $0xde0] sm:$0xff]
    %v998 = vld [vmem:[#allocation7 + $0xde8] sm:$0xff]
    %v999 = vld [vmem:[#allocation7 + $0xdf0] sm:$0xff]
    %v1000 = vld [vmem:[#allocation7 + $0xdf8] sm:$0xff]
    %v1001 = vld [vmem:[#allocation7 + $0xe00] sm:$0xff]
    %v1002 = vld [vmem:[#allocation7 + $0xe08] sm:$0xff]
    %v1003 = vld [vmem:[#allocation7 + $0xe10] sm:$0xff]
    %v1004 = vld [vmem:[#allocation7 + $0xe18] sm:$0xff]
    %v1005 = vld [vmem:[#allocation7 + $0xe20] sm:$0xff]
    %v1006 = vld [vmem:[#allocation7 + $0xe28] sm:$0xff]
    %v1007 = vld [vmem:[#allocation7 + $0xe30] sm:$0xff]
    %v1008 = vld [vmem:[#allocation7 + $0xe38] sm:$0xff]
    %v1009 = vld [vmem:[#allocation7 + $0xe40] sm:$0xff]
    %v1010 = vld [vmem:[#allocation7 + $0xe48] sm:$0xff]
    %v1011 = vld [vmem:[#allocation7 + $0xe50] sm:$0xff]
    %v1012 = vld [vmem:[#allocation7 + $0xe58] sm:$0xff]
    %v1013 = vld [vmem:[#allocation7 + $0xe60] sm:$0xff]
    %v1014 = vld [vmem:[#allocation7 + $0xe68] sm:$0xff]
    %v1015 = vld [vmem:[#allocation7 + $0xe70] sm:$0xff]
    %v1016 = vld [vmem:[#allocation7 + $0xe78] sm:$0xff]
    %v1017 = vld [vmem:[#allocation7 + $0xe80] sm:$0xff]
    %v1018 = vld [vmem:[#allocation7 + $0xe88] sm:$0xff]
    %v1019 = vld [vmem:[#allocation7 + $0xe90] sm:$0xff]
    %v1020 = vld [vmem:[#allocation7 + $0xe98] sm:$0xff]
    %v1021 = vld [vmem:[#allocation7 + $0xea0] sm:$0xff]
    %v1022 = vld [vmem:[#allocation7 + $0xea8] sm:$0xff]
    %v1023 = vld [vmem:[#allocation7 + $0xeb0] sm:$0xff]
    %v1024 = vld [vmem:[#allocation7 + $0xeb8] sm:$0xff]
    %v1025 = vld [vmem:[#allocation7 + $0xec0] sm:$0xff]
    %v1026 = vld [vmem:[#allocation7 + $0xec8] sm:$0xff]
    %v1027 = vld [vmem:[#allocation7 + $0xed0] sm:$0xff]
    %v1028 = vld [vmem:[#allocation7 + $0xed8] sm:$0xff]
    %v1029 = vld [vmem:[#allocation7 + $0xee0] sm:$0xff]
    %v1030 = vld [vmem:[#allocation7 + $0xee8] sm:$0xff]
    %v1031 = vld [vmem:[#allocation7 + $0xef0] sm:$0xff]
    %v1032 = vld [vmem:[#allocation7 + $0xef8] sm:$0xff]
    %v1033 = vld [vmem:[#allocation7 + $0xf00] sm:$0xff]
    %v1034 = vld [vmem:[#allocation7 + $0xf08] sm:$0xff]
    %v1035 = vld [vmem:[#allocation7 + $0xf10] sm:$0xff]
    %v1036 = vld [vmem:[#allocation7 + $0xf18] sm:$0xff]
    %v1037 = vld [vmem:[#allocation7 + $0xf20] sm:$0xff]
    %v1038 = vld [vmem:[#allocation7 + $0xf28] sm:$0xff]
    %v1039 = vld [vmem:[#allocation7 + $0xf30] sm:$0xff]
    %v1040 = vld [vmem:[#allocation7 + $0xf38] sm:$0xff]
    %v1041 = vld [vmem:[#allocation7 + $0xf40] sm:$0xff]
    %v1042 = vld [vmem:[#allocation7 + $0xf48] sm:$0xff]
    %v1043 = vld [vmem:[#allocation7 + $0xf50] sm:$0xff]
    %v1044 = vld [vmem:[#allocation7 + $0xf58] sm:$0xff]
    %v1045 = vld [vmem:[#allocation7 + $0xf60] sm:$0xff]
    %v1046 = vld [vmem:[#allocation7 + $0xf68] sm:$0xff]
    %v1047 = vld [vmem:[#allocation7 + $0xf70] sm:$0xff]
    %v1048 = vld [vmem:[#allocation7 + $0xf78] sm:$0xff]
    %v1049 = vld [vmem:[#allocation7 + $0xf80] sm:$0xff]
    %v1050 = vld [vmem:[#allocation7 + $0xf88] sm:$0xff]
    %v1051 = vld [vmem:[#allocation7 + $0xf90] sm:$0xff]
    %v1052 = vld [vmem:[#allocation7 + $0xf98] sm:$0xff]
    %v1053 = vld [vmem:[#allocation7 + $0xfa0] sm:$0xff]
    %v1054 = vld [vmem:[#allocation7 + $0xfa8] sm:$0xff]
    %v1055 = vld [vmem:[#allocation7 + $0xfb0] sm:$0xff]
    %v1056 = vld [vmem:[#allocation7 + $0xfb8] sm:$0xff]
    %v1057 = vld [vmem:[#allocation7 + $0xfc0] sm:$0xff]
    %v1058 = vld [vmem:[#allocation7 + $0xfc8] sm:$0xff]
    %v1059 = vld [vmem:[#allocation7 + $0xfd0] sm:$0xff]
    %v1060 = vld [vmem:[#allocation7 + $0xfd8] sm:$0xff]
    %v1061 = vld [vmem:[#allocation7 + $0xfe0] sm:$0xff]
    %v1062 = vld [vmem:[#allocation7 + $0xfe8] sm:$0xff]
    %v1063 = vld [vmem:[#allocation7 + $0xff0] sm:$0xff]
    %v1064 = vld [vmem:[#allocation7 + $0xff8] sm:$0xff]
    %v1065 = vld [vmem:[#allocation9] sm:$0xff]
    %v1067 = vlaneseq
    %v1068 = vshrl.u32 %v1067, 7
    %v1069 = vsub.s32 0, %v1068
    %v1070 = vrot.slane %v1065, %v1069
    %v1071 = vlaneseq
    %v1072 = vshrl.u32 %v1071, 7
    %v1073 = vsub.s32 1, %v1072
    %v1074 = vrot.slane %v1065, %v1073
    %v1075 = vlaneseq
    %v1076 = vshrl.u32 %v1075, 7
    %v1077 = vsub.s32 2, %v1076
    %v1078 = vrot.slane %v1065, %v1077
    %v1079 = vlaneseq
    %v1080 = vshrl.u32 %v1079, 7
    %v1081 = vsub.s32 3, %v1080
    %v1082 = vrot.slane %v1065, %v1081
    %v1083 = vlaneseq
    %v1084 = vshrl.u32 %v1083, 7
    %v1085 = vsub.s32 4, %v1084
    %v1086 = vrot.slane %v1065, %v1085
    %v1087 = vlaneseq
    %v1088 = vshrl.u32 %v1087, 7
    %v1089 = vsub.s32 5, %v1088
    %v1090 = vrot.slane %v1065, %v1089
    %v1091 = vlaneseq
    %v1092 = vshrl.u32 %v1091, 7
    %v1093 = vsub.s32 6, %v1092
    %v1094 = vrot.slane %v1065, %v1093
    %v1095 = vlaneseq
    %v1096 = vshrl.u32 %v1095, 7
    %v1097 = vsub.s32 7, %v1096
    %v1098 = vrot.slane %v1065, %v1097
    %v1619 = vunpack.c.l.b16 %v553
    %v1620 = vunpack.c.h.b16 %v553
    %v1621 = vunpack.c.l.b16 %v554
    %v1622 = vunpack.c.h.b16 %v554
    %v1623 = vunpack.c.l.b16 %v555
    %v1624 = vunpack.c.h.b16 %v555
    %v1625 = vunpack.c.l.b16 %v556
    %v1626 = vunpack.c.h.b16 %v556
    %v1627 = vunpack.c.l.b16 %v557
    %v1628 = vunpack.c.h.b16 %v557
    %v1629 = vunpack.c.l.b16 %v558
    %v1630 = vunpack.c.h.b16 %v558
    %v1631 = vunpack.c.l.b16 %v559
    %v1632 = vunpack.c.h.b16 %v559
    %v1633 = vunpack.c.l.b16 %v560
    %v1634 = vunpack.c.h.b16 %v560
    %v1635 = vunpack.c.l.b16 %v561
    %v1636 = vunpack.c.h.b16 %v561
    %v1637 = vunpack.c.l.b16 %v562
    %v1638 = vunpack.c.h.b16 %v562
    %v1639 = vunpack.c.l.b16 %v563
    %v1640 = vunpack.c.h.b16 %v563
    %v1641 = vunpack.c.l.b16 %v564
    %v1642 = vunpack.c.h.b16 %v564
    %v1643 = vunpack.c.l.b16 %v565
    %v1644 = vunpack.c.h.b16 %v565
    %v1645 = vunpack.c.l.b16 %v566
    %v1646 = vunpack.c.h.b16 %v566
    %v1647 = vunpack.c.l.b16 %v567
    %v1648 = vunpack.c.h.b16 %v567
    %v1649 = vunpack.c.l.b16 %v568
    %v1650 = vunpack.c.h.b16 %v568
    %v1651 = vunpack.c.l.b16 %v569
    %v1652 = vunpack.c.h.b16 %v569
    %v1653 = vunpack.c.l.b16 %v570
    %v1654 = vunpack.c.h.b16 %v570
    %v1655 = vunpack.c.l.b16 %v571
    %v1656 = vunpack.c.h.b16 %v571
    %v1657 = vunpack.c.l.b16 %v572
    %v1658 = vunpack.c.h.b16 %v572
    %v1659 = vunpack.c.l.b16 %v573
    %v1660 = vunpack.c.h.b16 %v573
    %v1661 = vunpack.c.l.b16 %v574
    %v1662 = vunpack.c.h.b16 %v574
    %v1663 = vunpack.c.l.b16 %v575
    %v1664 = vunpack.c.h.b16 %v575
    %v1665 = vunpack.c.l.b16 %v576
    %v1666 = vunpack.c.h.b16 %v576
    %v1667 = vunpack.c.l.b16 %v577
    %v1668 = vunpack.c.h.b16 %v577
    %v1669 = vunpack.c.l.b16 %v578
    %v1670 = vunpack.c.h.b16 %v578
    %v1671 = vunpack.c.l.b16 %v579
    %v1672 = vunpack.c.h.b16 %v579
    %v1673 = vunpack.c.l.b16 %v580
    %v1674 = vunpack.c.h.b16 %v580
    %v1675 = vunpack.c.l.b16 %v581
    %v1676 = vunpack.c.h.b16 %v581
    %v1677 = vunpack.c.l.b16 %v582
    %v1678 = vunpack.c.h.b16 %v582
    %v1679 = vunpack.c.l.b16 %v583
    %v1680 = vunpack.c.h.b16 %v583
    %v1681 = vunpack.c.l.b16 %v584
    %v1682 = vunpack.c.h.b16 %v584
    %v1683 = vunpack.c.l.b16 %v585
    %v1684 = vunpack.c.h.b16 %v585
    %v1685 = vunpack.c.l.b16 %v586
    %v1686 = vunpack.c.h.b16 %v586
    %v1687 = vunpack.c.l.b16 %v587
    %v1688 = vunpack.c.h.b16 %v587
    %v1689 = vunpack.c.l.b16 %v588
    %v1690 = vunpack.c.h.b16 %v588
    %v1691 = vunpack.c.l.b16 %v589
    %v1692 = vunpack.c.h.b16 %v589
    %v1693 = vunpack.c.l.b16 %v590
    %v1694 = vunpack.c.h.b16 %v590
    %v1695 = vunpack.c.l.b16 %v591
    %v1696 = vunpack.c.h.b16 %v591
    %v1697 = vunpack.c.l.b16 %v592
    %v1698 = vunpack.c.h.b16 %v592
    %v1699 = vunpack.c.l.b16 %v593
    %v1700 = vunpack.c.h.b16 %v593
    %v1701 = vunpack.c.l.b16 %v594
    %v1702 = vunpack.c.h.b16 %v594
    %v1703 = vunpack.c.l.b16 %v595
    %v1704 = vunpack.c.h.b16 %v595
    %v1705 = vunpack.c.l.b16 %v596
    %v1706 = vunpack.c.h.b16 %v596
    %v1707 = vunpack.c.l.b16 %v597
    %v1708 = vunpack.c.h.b16 %v597
    %v1709 = vunpack.c.l.b16 %v598
    %v1710 = vunpack.c.h.b16 %v598
    %v1711 = vunpack.c.l.b16 %v599
    %v1712 = vunpack.c.h.b16 %v599
    %v1713 = vunpack.c.l.b16 %v600
    %v1714 = vunpack.c.h.b16 %v600
    %v1715 = vunpack.c.l.b16 %v601
    %v1716 = vunpack.c.h.b16 %v601
    %v1717 = vunpack.c.l.b16 %v602
    %v1718 = vunpack.c.h.b16 %v602
    %v1719 = vunpack.c.l.b16 %v603
    %v1720 = vunpack.c.h.b16 %v603
    %v1721 = vunpack.c.l.b16 %v604
    %v1722 = vunpack.c.h.b16 %v604
    %v1723 = vunpack.c.l.b16 %v605
    %v1724 = vunpack.c.h.b16 %v605
    %v1725 = vunpack.c.l.b16 %v606
    %v1726 = vunpack.c.h.b16 %v606
    %v1727 = vunpack.c.l.b16 %v607
    %v1728 = vunpack.c.h.b16 %v607
    %v1729 = vunpack.c.l.b16 %v608
    %v1730 = vunpack.c.h.b16 %v608
    %v1731 = vunpack.c.l.b16 %v609
    %v1732 = vunpack.c.h.b16 %v609
    %v1733 = vunpack.c.l.b16 %v610
    %v1734 = vunpack.c.h.b16 %v610
    %v1735 = vunpack.c.l.b16 %v611
    %v1736 = vunpack.c.h.b16 %v611
    %v1737 = vunpack.c.l.b16 %v612
    %v1738 = vunpack.c.h.b16 %v612
    %v1739 = vunpack.c.l.b16 %v613
    %v1740 = vunpack.c.h.b16 %v613
    %v1741 = vunpack.c.l.b16 %v614
    %v1742 = vunpack.c.h.b16 %v614
    %v1743 = vunpack.c.l.b16 %v615
    %v1744 = vunpack.c.h.b16 %v615
    %v1745 = vunpack.c.l.b16 %v616
    %v1746 = vunpack.c.h.b16 %v616
    %v1747 = vunpack.c.l.b16 %v617
    %v1748 = vunpack.c.h.b16 %v617
    %v1749 = vunpack.c.l.b16 %v618
    %v1750 = vunpack.c.h.b16 %v618
    %v1751 = vunpack.c.l.b16 %v619
    %v1752 = vunpack.c.h.b16 %v619
    %v1753 = vunpack.c.l.b16 %v620
    %v1754 = vunpack.c.h.b16 %v620
    %v1755 = vunpack.c.l.b16 %v621
    %v1756 = vunpack.c.h.b16 %v621
    %v1757 = vunpack.c.l.b16 %v622
    %v1758 = vunpack.c.h.b16 %v622
    %v1759 = vunpack.c.l.b16 %v623
    %v1760 = vunpack.c.h.b16 %v623
    %v1761 = vunpack.c.l.b16 %v624
    %v1762 = vunpack.c.h.b16 %v624
    %v1763 = vunpack.c.l.b16 %v625
    %v1764 = vunpack.c.h.b16 %v625
    %v1765 = vunpack.c.l.b16 %v626
    %v1766 = vunpack.c.h.b16 %v626
    %v1767 = vunpack.c.l.b16 %v627
    %v1768 = vunpack.c.h.b16 %v627
    %v1769 = vunpack.c.l.b16 %v628
    %v1770 = vunpack.c.h.b16 %v628
    %v1771 = vunpack.c.l.b16 %v629
    %v1772 = vunpack.c.h.b16 %v629
    %v1773 = vunpack.c.l.b16 %v630
    %v1774 = vunpack.c.h.b16 %v630
    %v1775 = vunpack.c.l.b16 %v631
    %v1776 = vunpack.c.h.b16 %v631
    %v1777 = vunpack.c.l.b16 %v632
    %v1778 = vunpack.c.h.b16 %v632
    %v1779 = vunpack.c.l.b16 %v633
    %v1780 = vunpack.c.h.b16 %v633
    %v1781 = vunpack.c.l.b16 %v634
    %v1782 = vunpack.c.h.b16 %v634
    %v1783 = vunpack.c.l.b16 %v635
    %v1784 = vunpack.c.h.b16 %v635
    %v1785 = vunpack.c.l.b16 %v636
    %v1786 = vunpack.c.h.b16 %v636
    %v1787 = vunpack.c.l.b16 %v637
    %v1788 = vunpack.c.h.b16 %v637
    %v1789 = vunpack.c.l.b16 %v638
    %v1790 = vunpack.c.h.b16 %v638
    %v1791 = vunpack.c.l.b16 %v639
    %v1792 = vunpack.c.h.b16 %v639
    %v1793 = vunpack.c.l.b16 %v640
    %v1794 = vunpack.c.h.b16 %v640
    %v1795 = vunpack.c.l.b16 %v641
    %v1796 = vunpack.c.h.b16 %v641
    %v1797 = vunpack.c.l.b16 %v642
    %v1798 = vunpack.c.h.b16 %v642
    %v1799 = vunpack.c.l.b16 %v643
    %v1800 = vunpack.c.h.b16 %v643
    %v1801 = vunpack.c.l.b16 %v644
    %v1802 = vunpack.c.h.b16 %v644
    %v1803 = vunpack.c.l.b16 %v645
    %v1804 = vunpack.c.h.b16 %v645
    %v1805 = vunpack.c.l.b16 %v646
    %v1806 = vunpack.c.h.b16 %v646
    %v1807 = vunpack.c.l.b16 %v647
    %v1808 = vunpack.c.h.b16 %v647
    %v1809 = vunpack.c.l.b16 %v648
    %v1810 = vunpack.c.h.b16 %v648
    %v1811 = vunpack.c.l.b16 %v649
    %v1812 = vunpack.c.h.b16 %v649
    %v1813 = vunpack.c.l.b16 %v650
    %v1814 = vunpack.c.h.b16 %v650
    %v1815 = vunpack.c.l.b16 %v651
    %v1816 = vunpack.c.h.b16 %v651
    %v1817 = vunpack.c.l.b16 %v652
    %v1818 = vunpack.c.h.b16 %v652
    %v1819 = vunpack.c.l.b16 %v653
    %v1820 = vunpack.c.h.b16 %v653
    %v1821 = vunpack.c.l.b16 %v654
    %v1822 = vunpack.c.h.b16 %v654
    %v1823 = vunpack.c.l.b16 %v655
    %v1824 = vunpack.c.h.b16 %v655
    %v1825 = vunpack.c.l.b16 %v656
    %v1826 = vunpack.c.h.b16 %v656
    %v1827 = vunpack.c.l.b16 %v657
    %v1828 = vunpack.c.h.b16 %v657
    %v1829 = vunpack.c.l.b16 %v658
    %v1830 = vunpack.c.h.b16 %v658
    %v1831 = vunpack.c.l.b16 %v659
    %v1832 = vunpack.c.h.b16 %v659
    %v1833 = vunpack.c.l.b16 %v660
    %v1834 = vunpack.c.h.b16 %v660
    %v1835 = vunpack.c.l.b16 %v661
    %v1836 = vunpack.c.h.b16 %v661
    %v1837 = vunpack.c.l.b16 %v662
    %v1838 = vunpack.c.h.b16 %v662
    %v1839 = vunpack.c.l.b16 %v663
    %v1840 = vunpack.c.h.b16 %v663
    %v1841 = vunpack.c.l.b16 %v664
    %v1842 = vunpack.c.h.b16 %v664
    %v1843 = vunpack.c.l.b16 %v665
    %v1844 = vunpack.c.h.b16 %v665
    %v1845 = vunpack.c.l.b16 %v666
    %v1846 = vunpack.c.h.b16 %v666
    %v1847 = vunpack.c.l.b16 %v667
    %v1848 = vunpack.c.h.b16 %v667
    %v1849 = vunpack.c.l.b16 %v668
    %v1850 = vunpack.c.h.b16 %v668
    %v1851 = vunpack.c.l.b16 %v669
    %v1852 = vunpack.c.h.b16 %v669
    %v1853 = vunpack.c.l.b16 %v670
    %v1854 = vunpack.c.h.b16 %v670
    %v1855 = vunpack.c.l.b16 %v671
    %v1856 = vunpack.c.h.b16 %v671
    %v1857 = vunpack.c.l.b16 %v672
    %v1858 = vunpack.c.h.b16 %v672
    %v1859 = vunpack.c.l.b16 %v673
    %v1860 = vunpack.c.h.b16 %v673
    %v1861 = vunpack.c.l.b16 %v674
    %v1862 = vunpack.c.h.b16 %v674
    %v1863 = vunpack.c.l.b16 %v675
    %v1864 = vunpack.c.h.b16 %v675
    %v1865 = vunpack.c.l.b16 %v676
    %v1866 = vunpack.c.h.b16 %v676
    %v1867 = vunpack.c.l.b16 %v677
    %v1868 = vunpack.c.h.b16 %v677
    %v1869 = vunpack.c.l.b16 %v678
    %v1870 = vunpack.c.h.b16 %v678
    %v1871 = vunpack.c.l.b16 %v679
    %v1872 = vunpack.c.h.b16 %v679
    %v1873 = vunpack.c.l.b16 %v680
    %v1874 = vunpack.c.h.b16 %v680
    %v1875 = vunpack.c.l.b16 %v681
    %v1876 = vunpack.c.h.b16 %v681
    %v1877 = vunpack.c.l.b16 %v682
    %v1878 = vunpack.c.h.b16 %v682
    %v1879 = vunpack.c.l.b16 %v683
    %v1880 = vunpack.c.h.b16 %v683
    %v1881 = vunpack.c.l.b16 %v684
    %v1882 = vunpack.c.h.b16 %v684
    %v1883 = vunpack.c.l.b16 %v685
    %v1884 = vunpack.c.h.b16 %v685
    %v1885 = vunpack.c.l.b16 %v686
    %v1886 = vunpack.c.h.b16 %v686
    %v1887 = vunpack.c.l.b16 %v687
    %v1888 = vunpack.c.h.b16 %v687
    %v1889 = vunpack.c.l.b16 %v688
    %v1890 = vunpack.c.h.b16 %v688
    %v1891 = vunpack.c.l.b16 %v689
    %v1892 = vunpack.c.h.b16 %v689
    %v1893 = vunpack.c.l.b16 %v690
    %v1894 = vunpack.c.h.b16 %v690
    %v1895 = vunpack.c.l.b16 %v691
    %v1896 = vunpack.c.h.b16 %v691
    %v1897 = vunpack.c.l.b16 %v692
    %v1898 = vunpack.c.h.b16 %v692
    %v1899 = vunpack.c.l.b16 %v693
    %v1900 = vunpack.c.h.b16 %v693
    %v1901 = vunpack.c.l.b16 %v694
    %v1902 = vunpack.c.h.b16 %v694
    %v1903 = vunpack.c.l.b16 %v695
    %v1904 = vunpack.c.h.b16 %v695
    %v1905 = vunpack.c.l.b16 %v696
    %v1906 = vunpack.c.h.b16 %v696
    %v1907 = vunpack.c.l.b16 %v697
    %v1908 = vunpack.c.h.b16 %v697
    %v1909 = vunpack.c.l.b16 %v698
    %v1910 = vunpack.c.h.b16 %v698
    %v1911 = vunpack.c.l.b16 %v699
    %v1912 = vunpack.c.h.b16 %v699
    %v1913 = vunpack.c.l.b16 %v700
    %v1914 = vunpack.c.h.b16 %v700
    %v1915 = vunpack.c.l.b16 %v701
    %v1916 = vunpack.c.h.b16 %v701
    %v1917 = vunpack.c.l.b16 %v702
    %v1918 = vunpack.c.h.b16 %v702
    %v1919 = vunpack.c.l.b16 %v703
    %v1920 = vunpack.c.h.b16 %v703
    %v1921 = vunpack.c.l.b16 %v704
    %v1922 = vunpack.c.h.b16 %v704
    %v1923 = vunpack.c.l.b16 %v705
    %v1924 = vunpack.c.h.b16 %v705
    %v1925 = vunpack.c.l.b16 %v706
    %v1926 = vunpack.c.h.b16 %v706
    %v1927 = vunpack.c.l.b16 %v707
    %v1928 = vunpack.c.h.b16 %v707
    %v1929 = vunpack.c.l.b16 %v708
    %v1930 = vunpack.c.h.b16 %v708
    %v1931 = vunpack.c.l.b16 %v709
    %v1932 = vunpack.c.h.b16 %v709
    %v1933 = vunpack.c.l.b16 %v710
    %v1934 = vunpack.c.h.b16 %v710
    %v1935 = vunpack.c.l.b16 %v711
    %v1936 = vunpack.c.h.b16 %v711
    %v1937 = vunpack.c.l.b16 %v712
    %v1938 = vunpack.c.h.b16 %v712
    %v1939 = vunpack.c.l.b16 %v713
    %v1940 = vunpack.c.h.b16 %v713
    %v1941 = vunpack.c.l.b16 %v714
    %v1942 = vunpack.c.h.b16 %v714
    %v1943 = vunpack.c.l.b16 %v715
    %v1944 = vunpack.c.h.b16 %v715
    %v1945 = vunpack.c.l.b16 %v716
    %v1946 = vunpack.c.h.b16 %v716
    %v1947 = vunpack.c.l.b16 %v717
    %v1948 = vunpack.c.h.b16 %v717
    %v1949 = vunpack.c.l.b16 %v718
    %v1950 = vunpack.c.h.b16 %v718
    %v1951 = vunpack.c.l.b16 %v719
    %v1952 = vunpack.c.h.b16 %v719
    %v1953 = vunpack.c.l.b16 %v720
    %v1954 = vunpack.c.h.b16 %v720
    %v1955 = vunpack.c.l.b16 %v721
    %v1956 = vunpack.c.h.b16 %v721
    %v1957 = vunpack.c.l.b16 %v722
    %v1958 = vunpack.c.h.b16 %v722
    %v1959 = vunpack.c.l.b16 %v723
    %v1960 = vunpack.c.h.b16 %v723
    %v1961 = vunpack.c.l.b16 %v724
    %v1962 = vunpack.c.h.b16 %v724
    %v1963 = vunpack.c.l.b16 %v725
    %v1964 = vunpack.c.h.b16 %v725
    %v1965 = vunpack.c.l.b16 %v726
    %v1966 = vunpack.c.h.b16 %v726
    %v1967 = vunpack.c.l.b16 %v727
    %v1968 = vunpack.c.h.b16 %v727
    %v1969 = vunpack.c.l.b16 %v728
    %v1970 = vunpack.c.h.b16 %v728
    %v1971 = vunpack.c.l.b16 %v729
    %v1972 = vunpack.c.h.b16 %v729
    %v1973 = vunpack.c.l.b16 %v730
    %v1974 = vunpack.c.h.b16 %v730
    %v1975 = vunpack.c.l.b16 %v731
    %v1976 = vunpack.c.h.b16 %v731
    %v1977 = vunpack.c.l.b16 %v732
    %v1978 = vunpack.c.h.b16 %v732
    %v1979 = vunpack.c.l.b16 %v733
    %v1980 = vunpack.c.h.b16 %v733
    %v1981 = vunpack.c.l.b16 %v734
    %v1982 = vunpack.c.h.b16 %v734
    %v1983 = vunpack.c.l.b16 %v735
    %v1984 = vunpack.c.h.b16 %v735
    %v1985 = vunpack.c.l.b16 %v736
    %v1986 = vunpack.c.h.b16 %v736
    %v1987 = vunpack.c.l.b16 %v737
    %v1988 = vunpack.c.h.b16 %v737
    %v1989 = vunpack.c.l.b16 %v738
    %v1990 = vunpack.c.h.b16 %v738
    %v1991 = vunpack.c.l.b16 %v739
    %v1992 = vunpack.c.h.b16 %v739
    %v1993 = vunpack.c.l.b16 %v740
    %v1994 = vunpack.c.h.b16 %v740
    %v1995 = vunpack.c.l.b16 %v741
    %v1996 = vunpack.c.h.b16 %v741
    %v1997 = vunpack.c.l.b16 %v742
    %v1998 = vunpack.c.h.b16 %v742
    %v1999 = vunpack.c.l.b16 %v743
    %v2000 = vunpack.c.h.b16 %v743
    %v2001 = vunpack.c.l.b16 %v744
    %v2002 = vunpack.c.h.b16 %v744
    %v2003 = vunpack.c.l.b16 %v745
    %v2004 = vunpack.c.h.b16 %v745
    %v2005 = vunpack.c.l.b16 %v746
    %v2006 = vunpack.c.h.b16 %v746
    %v2007 = vunpack.c.l.b16 %v747
    %v2008 = vunpack.c.h.b16 %v747
    %v2009 = vunpack.c.l.b16 %v748
    %v2010 = vunpack.c.h.b16 %v748
    %v2011 = vunpack.c.l.b16 %v749
    %v2012 = vunpack.c.h.b16 %v749
    %v2013 = vunpack.c.l.b16 %v750
    %v2014 = vunpack.c.h.b16 %v750
    %v2015 = vunpack.c.l.b16 %v751
    %v2016 = vunpack.c.h.b16 %v751
    %v2017 = vunpack.c.l.b16 %v752
    %v2018 = vunpack.c.h.b16 %v752
    %v2019 = vunpack.c.l.b16 %v753
    %v2020 = vunpack.c.h.b16 %v753
    %v2021 = vunpack.c.l.b16 %v754
    %v2022 = vunpack.c.h.b16 %v754
    %v2023 = vunpack.c.l.b16 %v755
    %v2024 = vunpack.c.h.b16 %v755
    %v2025 = vunpack.c.l.b16 %v756
    %v2026 = vunpack.c.h.b16 %v756
    %v2027 = vunpack.c.l.b16 %v757
    %v2028 = vunpack.c.h.b16 %v757
    %v2029 = vunpack.c.l.b16 %v758
    %v2030 = vunpack.c.h.b16 %v758
    %v2031 = vunpack.c.l.b16 %v759
    %v2032 = vunpack.c.h.b16 %v759
    %v2033 = vunpack.c.l.b16 %v760
    %v2034 = vunpack.c.h.b16 %v760
    %v2035 = vunpack.c.l.b16 %v761
    %v2036 = vunpack.c.h.b16 %v761
    %v2037 = vunpack.c.l.b16 %v762
    %v2038 = vunpack.c.h.b16 %v762
    %v2039 = vunpack.c.l.b16 %v763
    %v2040 = vunpack.c.h.b16 %v763
    %v2041 = vunpack.c.l.b16 %v764
    %v2042 = vunpack.c.h.b16 %v764
    %v2043 = vunpack.c.l.b16 %v765
    %v2044 = vunpack.c.h.b16 %v765
    %v2045 = vunpack.c.l.b16 %v766
    %v2046 = vunpack.c.h.b16 %v766
    %v2047 = vunpack.c.l.b16 %v767
    %v2048 = vunpack.c.h.b16 %v767
    %v2049 = vunpack.c.l.b16 %v768
    %v2050 = vunpack.c.h.b16 %v768
    %v2051 = vunpack.c.l.b16 %v769
    %v2052 = vunpack.c.h.b16 %v769
    %v2053 = vunpack.c.l.b16 %v770
    %v2054 = vunpack.c.h.b16 %v770
    %v2055 = vunpack.c.l.b16 %v771
    %v2056 = vunpack.c.h.b16 %v771
    %v2057 = vunpack.c.l.b16 %v772
    %v2058 = vunpack.c.h.b16 %v772
    %v2059 = vunpack.c.l.b16 %v773
    %v2060 = vunpack.c.h.b16 %v773
    %v2061 = vunpack.c.l.b16 %v774
    %v2062 = vunpack.c.h.b16 %v774
    %v2063 = vunpack.c.l.b16 %v775
    %v2064 = vunpack.c.h.b16 %v775
    %v2065 = vunpack.c.l.b16 %v776
    %v2066 = vunpack.c.h.b16 %v776
    %v2067 = vunpack.c.l.b16 %v777
    %v2068 = vunpack.c.h.b16 %v777
    %v2069 = vunpack.c.l.b16 %v778
    %v2070 = vunpack.c.h.b16 %v778
    %v2071 = vunpack.c.l.b16 %v779
    %v2072 = vunpack.c.h.b16 %v779
    %v2073 = vunpack.c.l.b16 %v780
    %v2074 = vunpack.c.h.b16 %v780
    %v2075 = vunpack.c.l.b16 %v781
    %v2076 = vunpack.c.h.b16 %v781
    %v2077 = vunpack.c.l.b16 %v782
    %v2078 = vunpack.c.h.b16 %v782
    %v2079 = vunpack.c.l.b16 %v783
    %v2080 = vunpack.c.h.b16 %v783
    %v2081 = vunpack.c.l.b16 %v784
    %v2082 = vunpack.c.h.b16 %v784
    %v2083 = vunpack.c.l.b16 %v785
    %v2084 = vunpack.c.h.b16 %v785
    %v2085 = vunpack.c.l.b16 %v786
    %v2086 = vunpack.c.h.b16 %v786
    %v2087 = vunpack.c.l.b16 %v787
    %v2088 = vunpack.c.h.b16 %v787
    %v2089 = vunpack.c.l.b16 %v788
    %v2090 = vunpack.c.h.b16 %v788
    %v2091 = vunpack.c.l.b16 %v789
    %v2092 = vunpack.c.h.b16 %v789
    %v2093 = vunpack.c.l.b16 %v790
    %v2094 = vunpack.c.h.b16 %v790
    %v2095 = vunpack.c.l.b16 %v791
    %v2096 = vunpack.c.h.b16 %v791
    %v2097 = vunpack.c.l.b16 %v792
    %v2098 = vunpack.c.h.b16 %v792
    %v2099 = vunpack.c.l.b16 %v793
    %v2100 = vunpack.c.h.b16 %v793
    %v2101 = vunpack.c.l.b16 %v794
    %v2102 = vunpack.c.h.b16 %v794
    %v2103 = vunpack.c.l.b16 %v795
    %v2104 = vunpack.c.h.b16 %v795
    %v2105 = vunpack.c.l.b16 %v796
    %v2106 = vunpack.c.h.b16 %v796
    %v2107 = vunpack.c.l.b16 %v797
    %v2108 = vunpack.c.h.b16 %v797
    %v2109 = vunpack.c.l.b16 %v798
    %v2110 = vunpack.c.h.b16 %v798
    %v2111 = vunpack.c.l.b16 %v799
    %v2112 = vunpack.c.h.b16 %v799
    %v2113 = vunpack.c.l.b16 %v800
    %v2114 = vunpack.c.h.b16 %v800
    %v2115 = vunpack.c.l.b16 %v801
    %v2116 = vunpack.c.h.b16 %v801
    %v2117 = vunpack.c.l.b16 %v802
    %v2118 = vunpack.c.h.b16 %v802
    %v2119 = vunpack.c.l.b16 %v803
    %v2120 = vunpack.c.h.b16 %v803
    %v2121 = vunpack.c.l.b16 %v804
    %v2122 = vunpack.c.h.b16 %v804
    %v2123 = vunpack.c.l.b16 %v805
    %v2124 = vunpack.c.h.b16 %v805
    %v2125 = vunpack.c.l.b16 %v806
    %v2126 = vunpack.c.h.b16 %v806
    %v2127 = vunpack.c.l.b16 %v807
    %v2128 = vunpack.c.h.b16 %v807
    %v2129 = vunpack.c.l.b16 %v808
    %v2130 = vunpack.c.h.b16 %v808
    %v2131 = vunpack.c.l.b16 %v809
    %v2132 = vunpack.c.h.b16 %v809
    %v2133 = vunpack.c.l.b16 %v810
    %v2134 = vunpack.c.h.b16 %v810
    %v2135 = vunpack.c.l.b16 %v811
    %v2136 = vunpack.c.h.b16 %v811
    %v2137 = vunpack.c.l.b16 %v812
    %v2138 = vunpack.c.h.b16 %v812
    %v2139 = vunpack.c.l.b16 %v813
    %v2140 = vunpack.c.h.b16 %v813
    %v2141 = vunpack.c.l.b16 %v814
    %v2142 = vunpack.c.h.b16 %v814
    %v2143 = vunpack.c.l.b16 %v815
    %v2144 = vunpack.c.h.b16 %v815
    %v2145 = vunpack.c.l.b16 %v816
    %v2146 = vunpack.c.h.b16 %v816
    %v2147 = vunpack.c.l.b16 %v817
    %v2148 = vunpack.c.h.b16 %v817
    %v2149 = vunpack.c.l.b16 %v818
    %v2150 = vunpack.c.h.b16 %v818
    %v2151 = vunpack.c.l.b16 %v819
    %v2152 = vunpack.c.h.b16 %v819
    %v2153 = vunpack.c.l.b16 %v820
    %v2154 = vunpack.c.h.b16 %v820
    %v2155 = vunpack.c.l.b16 %v821
    %v2156 = vunpack.c.h.b16 %v821
    %v2157 = vunpack.c.l.b16 %v822
    %v2158 = vunpack.c.h.b16 %v822
    %v2159 = vunpack.c.l.b16 %v823
    %v2160 = vunpack.c.h.b16 %v823
    %v2161 = vunpack.c.l.b16 %v824
    %v2162 = vunpack.c.h.b16 %v824
    %v2163 = vunpack.c.l.b16 %v825
    %v2164 = vunpack.c.h.b16 %v825
    %v2165 = vunpack.c.l.b16 %v826
    %v2166 = vunpack.c.h.b16 %v826
    %v2167 = vunpack.c.l.b16 %v827
    %v2168 = vunpack.c.h.b16 %v827
    %v2169 = vunpack.c.l.b16 %v828
    %v2170 = vunpack.c.h.b16 %v828
    %v2171 = vunpack.c.l.b16 %v829
    %v2172 = vunpack.c.h.b16 %v829
    %v2173 = vunpack.c.l.b16 %v830
    %v2174 = vunpack.c.h.b16 %v830
    %v2175 = vunpack.c.l.b16 %v831
    %v2176 = vunpack.c.h.b16 %v831
    %v2177 = vunpack.c.l.b16 %v832
    %v2178 = vunpack.c.h.b16 %v832
    %v2179 = vunpack.c.l.b16 %v833
    %v2180 = vunpack.c.h.b16 %v833
    %v2181 = vunpack.c.l.b16 %v834
    %v2182 = vunpack.c.h.b16 %v834
    %v2183 = vunpack.c.l.b16 %v835
    %v2184 = vunpack.c.h.b16 %v835
    %v2185 = vunpack.c.l.b16 %v836
    %v2186 = vunpack.c.h.b16 %v836
    %v2187 = vunpack.c.l.b16 %v837
    %v2188 = vunpack.c.h.b16 %v837
    %v2189 = vunpack.c.l.b16 %v838
    %v2190 = vunpack.c.h.b16 %v838
    %v2191 = vunpack.c.l.b16 %v839
    %v2192 = vunpack.c.h.b16 %v839
    %v2193 = vunpack.c.l.b16 %v840
    %v2194 = vunpack.c.h.b16 %v840
    %v2195 = vunpack.c.l.b16 %v841
    %v2196 = vunpack.c.h.b16 %v841
    %v2197 = vunpack.c.l.b16 %v842
    %v2198 = vunpack.c.h.b16 %v842
    %v2199 = vunpack.c.l.b16 %v843
    %v2200 = vunpack.c.h.b16 %v843
    %v2201 = vunpack.c.l.b16 %v844
    %v2202 = vunpack.c.h.b16 %v844
    %v2203 = vunpack.c.l.b16 %v845
    %v2204 = vunpack.c.h.b16 %v845
    %v2205 = vunpack.c.l.b16 %v846
    %v2206 = vunpack.c.h.b16 %v846
    %v2207 = vunpack.c.l.b16 %v847
    %v2208 = vunpack.c.h.b16 %v847
    %v2209 = vunpack.c.l.b16 %v848
    %v2210 = vunpack.c.h.b16 %v848
    %v2211 = vunpack.c.l.b16 %v849
    %v2212 = vunpack.c.h.b16 %v849
    %v2213 = vunpack.c.l.b16 %v850
    %v2214 = vunpack.c.h.b16 %v850
    %v2215 = vunpack.c.l.b16 %v851
    %v2216 = vunpack.c.h.b16 %v851
    %v2217 = vunpack.c.l.b16 %v852
    %v2218 = vunpack.c.h.b16 %v852
    %v2219 = vunpack.c.l.b16 %v853
    %v2220 = vunpack.c.h.b16 %v853
    %v2221 = vunpack.c.l.b16 %v854
    %v2222 = vunpack.c.h.b16 %v854
    %v2223 = vunpack.c.l.b16 %v855
    %v2224 = vunpack.c.h.b16 %v855
    %v2225 = vunpack.c.l.b16 %v856
    %v2226 = vunpack.c.h.b16 %v856
    %v2227 = vunpack.c.l.b16 %v857
    %v2228 = vunpack.c.h.b16 %v857
    %v2229 = vunpack.c.l.b16 %v858
    %v2230 = vunpack.c.h.b16 %v858
    %v2231 = vunpack.c.l.b16 %v859
    %v2232 = vunpack.c.h.b16 %v859
    %v2233 = vunpack.c.l.b16 %v860
    %v2234 = vunpack.c.h.b16 %v860
    %v2235 = vunpack.c.l.b16 %v861
    %v2236 = vunpack.c.h.b16 %v861
    %v2237 = vunpack.c.l.b16 %v862
    %v2238 = vunpack.c.h.b16 %v862
    %v2239 = vunpack.c.l.b16 %v863
    %v2240 = vunpack.c.h.b16 %v863
    %v2241 = vunpack.c.l.b16 %v864
    %v2242 = vunpack.c.h.b16 %v864
    %v2243 = vunpack.c.l.b16 %v865
    %v2244 = vunpack.c.h.b16 %v865
    %v2245 = vunpack.c.l.b16 %v866
    %v2246 = vunpack.c.h.b16 %v866
    %v2247 = vunpack.c.l.b16 %v867
    %v2248 = vunpack.c.h.b16 %v867
    %v2249 = vunpack.c.l.b16 %v868
    %v2250 = vunpack.c.h.b16 %v868
    %v2251 = vunpack.c.l.b16 %v869
    %v2252 = vunpack.c.h.b16 %v869
    %v2253 = vunpack.c.l.b16 %v870
    %v2254 = vunpack.c.h.b16 %v870
    %v2255 = vunpack.c.l.b16 %v871
    %v2256 = vunpack.c.h.b16 %v871
    %v2257 = vunpack.c.l.b16 %v872
    %v2258 = vunpack.c.h.b16 %v872
    %v2259 = vunpack.c.l.b16 %v873
    %v2260 = vunpack.c.h.b16 %v873
    %v2261 = vunpack.c.l.b16 %v874
    %v2262 = vunpack.c.h.b16 %v874
    %v2263 = vunpack.c.l.b16 %v875
    %v2264 = vunpack.c.h.b16 %v875
    %v2265 = vunpack.c.l.b16 %v876
    %v2266 = vunpack.c.h.b16 %v876
    %v2267 = vunpack.c.l.b16 %v877
    %v2268 = vunpack.c.h.b16 %v877
    %v2269 = vunpack.c.l.b16 %v878
    %v2270 = vunpack.c.h.b16 %v878
    %v2271 = vunpack.c.l.b16 %v879
    %v2272 = vunpack.c.h.b16 %v879
    %v2273 = vunpack.c.l.b16 %v880
    %v2274 = vunpack.c.h.b16 %v880
    %v2275 = vunpack.c.l.b16 %v881
    %v2276 = vunpack.c.h.b16 %v881
    %v2277 = vunpack.c.l.b16 %v882
    %v2278 = vunpack.c.h.b16 %v882
    %v2279 = vunpack.c.l.b16 %v883
    %v2280 = vunpack.c.h.b16 %v883
    %v2281 = vunpack.c.l.b16 %v884
    %v2282 = vunpack.c.h.b16 %v884
    %v2283 = vunpack.c.l.b16 %v885
    %v2284 = vunpack.c.h.b16 %v885
    %v2285 = vunpack.c.l.b16 %v886
    %v2286 = vunpack.c.h.b16 %v886
    %v2287 = vunpack.c.l.b16 %v887
    %v2288 = vunpack.c.h.b16 %v887
    %v2289 = vunpack.c.l.b16 %v888
    %v2290 = vunpack.c.h.b16 %v888
    %v2291 = vunpack.c.l.b16 %v889
    %v2292 = vunpack.c.h.b16 %v889
    %v2293 = vunpack.c.l.b16 %v890
    %v2294 = vunpack.c.h.b16 %v890
    %v2295 = vunpack.c.l.b16 %v891
    %v2296 = vunpack.c.h.b16 %v891
    %v2297 = vunpack.c.l.b16 %v892
    %v2298 = vunpack.c.h.b16 %v892
    %v2299 = vunpack.c.l.b16 %v893
    %v2300 = vunpack.c.h.b16 %v893
    %v2301 = vunpack.c.l.b16 %v894
    %v2302 = vunpack.c.h.b16 %v894
    %v2303 = vunpack.c.l.b16 %v895
    %v2304 = vunpack.c.h.b16 %v895
    %v2305 = vunpack.c.l.b16 %v896
    %v2306 = vunpack.c.h.b16 %v896
    %v2307 = vunpack.c.l.b16 %v897
    %v2308 = vunpack.c.h.b16 %v897
    %v2309 = vunpack.c.l.b16 %v898
    %v2310 = vunpack.c.h.b16 %v898
    %v2311 = vunpack.c.l.b16 %v899
    %v2312 = vunpack.c.h.b16 %v899
    %v2313 = vunpack.c.l.b16 %v900
    %v2314 = vunpack.c.h.b16 %v900
    %v2315 = vunpack.c.l.b16 %v901
    %v2316 = vunpack.c.h.b16 %v901
    %v2317 = vunpack.c.l.b16 %v902
    %v2318 = vunpack.c.h.b16 %v902
    %v2319 = vunpack.c.l.b16 %v903
    %v2320 = vunpack.c.h.b16 %v903
    %v2321 = vunpack.c.l.b16 %v904
    %v2322 = vunpack.c.h.b16 %v904
    %v2323 = vunpack.c.l.b16 %v905
    %v2324 = vunpack.c.h.b16 %v905
    %v2325 = vunpack.c.l.b16 %v906
    %v2326 = vunpack.c.h.b16 %v906
    %v2327 = vunpack.c.l.b16 %v907
    %v2328 = vunpack.c.h.b16 %v907
    %v2329 = vunpack.c.l.b16 %v908
    %v2330 = vunpack.c.h.b16 %v908
    %v2331 = vunpack.c.l.b16 %v909
    %v2332 = vunpack.c.h.b16 %v909
    %v2333 = vunpack.c.l.b16 %v910
    %v2334 = vunpack.c.h.b16 %v910
    %v2335 = vunpack.c.l.b16 %v911
    %v2336 = vunpack.c.h.b16 %v911
    %v2337 = vunpack.c.l.b16 %v912
    %v2338 = vunpack.c.h.b16 %v912
    %v2339 = vunpack.c.l.b16 %v913
    %v2340 = vunpack.c.h.b16 %v913
    %v2341 = vunpack.c.l.b16 %v914
    %v2342 = vunpack.c.h.b16 %v914
    %v2343 = vunpack.c.l.b16 %v915
    %v2344 = vunpack.c.h.b16 %v915
    %v2345 = vunpack.c.l.b16 %v916
    %v2346 = vunpack.c.h.b16 %v916
    %v2347 = vunpack.c.l.b16 %v917
    %v2348 = vunpack.c.h.b16 %v917
    %v2349 = vunpack.c.l.b16 %v918
    %v2350 = vunpack.c.h.b16 %v918
    %v2351 = vunpack.c.l.b16 %v919
    %v2352 = vunpack.c.h.b16 %v919
    %v2353 = vunpack.c.l.b16 %v920
    %v2354 = vunpack.c.h.b16 %v920
    %v2355 = vunpack.c.l.b16 %v921
    %v2356 = vunpack.c.h.b16 %v921
    %v2357 = vunpack.c.l.b16 %v922
    %v2358 = vunpack.c.h.b16 %v922
    %v2359 = vunpack.c.l.b16 %v923
    %v2360 = vunpack.c.h.b16 %v923
    %v2361 = vunpack.c.l.b16 %v924
    %v2362 = vunpack.c.h.b16 %v924
    %v2363 = vunpack.c.l.b16 %v925
    %v2364 = vunpack.c.h.b16 %v925
    %v2365 = vunpack.c.l.b16 %v926
    %v2366 = vunpack.c.h.b16 %v926
    %v2367 = vunpack.c.l.b16 %v927
    %v2368 = vunpack.c.h.b16 %v927
    %v2369 = vunpack.c.l.b16 %v928
    %v2370 = vunpack.c.h.b16 %v928
    %v2371 = vunpack.c.l.b16 %v929
    %v2372 = vunpack.c.h.b16 %v929
    %v2373 = vunpack.c.l.b16 %v930
    %v2374 = vunpack.c.h.b16 %v930
    %v2375 = vunpack.c.l.b16 %v931
    %v2376 = vunpack.c.h.b16 %v931
    %v2377 = vunpack.c.l.b16 %v932
    %v2378 = vunpack.c.h.b16 %v932
    %v2379 = vunpack.c.l.b16 %v933
    %v2380 = vunpack.c.h.b16 %v933
    %v2381 = vunpack.c.l.b16 %v934
    %v2382 = vunpack.c.h.b16 %v934
    %v2383 = vunpack.c.l.b16 %v935
    %v2384 = vunpack.c.h.b16 %v935
    %v2385 = vunpack.c.l.b16 %v936
    %v2386 = vunpack.c.h.b16 %v936
    %v2387 = vunpack.c.l.b16 %v937
    %v2388 = vunpack.c.h.b16 %v937
    %v2389 = vunpack.c.l.b16 %v938
    %v2390 = vunpack.c.h.b16 %v938
    %v2391 = vunpack.c.l.b16 %v939
    %v2392 = vunpack.c.h.b16 %v939
    %v2393 = vunpack.c.l.b16 %v940
    %v2394 = vunpack.c.h.b16 %v940
    %v2395 = vunpack.c.l.b16 %v941
    %v2396 = vunpack.c.h.b16 %v941
    %v2397 = vunpack.c.l.b16 %v942
    %v2398 = vunpack.c.h.b16 %v942
    %v2399 = vunpack.c.l.b16 %v943
    %v2400 = vunpack.c.h.b16 %v943
    %v2401 = vunpack.c.l.b16 %v944
    %v2402 = vunpack.c.h.b16 %v944
    %v2403 = vunpack.c.l.b16 %v945
    %v2404 = vunpack.c.h.b16 %v945
    %v2405 = vunpack.c.l.b16 %v946
    %v2406 = vunpack.c.h.b16 %v946
    %v2407 = vunpack.c.l.b16 %v947
    %v2408 = vunpack.c.h.b16 %v947
    %v2409 = vunpack.c.l.b16 %v948
    %v2410 = vunpack.c.h.b16 %v948
    %v2411 = vunpack.c.l.b16 %v949
    %v2412 = vunpack.c.h.b16 %v949
    %v2413 = vunpack.c.l.b16 %v950
    %v2414 = vunpack.c.h.b16 %v950
    %v2415 = vunpack.c.l.b16 %v951
    %v2416 = vunpack.c.h.b16 %v951
    %v2417 = vunpack.c.l.b16 %v952
    %v2418 = vunpack.c.h.b16 %v952
    %v2419 = vunpack.c.l.b16 %v953
    %v2420 = vunpack.c.h.b16 %v953
    %v2421 = vunpack.c.l.b16 %v954
    %v2422 = vunpack.c.h.b16 %v954
    %v2423 = vunpack.c.l.b16 %v955
    %v2424 = vunpack.c.h.b16 %v955
    %v2425 = vunpack.c.l.b16 %v956
    %v2426 = vunpack.c.h.b16 %v956
    %v2427 = vunpack.c.l.b16 %v957
    %v2428 = vunpack.c.h.b16 %v957
    %v2429 = vunpack.c.l.b16 %v958
    %v2430 = vunpack.c.h.b16 %v958
    %v2431 = vunpack.c.l.b16 %v959
    %v2432 = vunpack.c.h.b16 %v959
    %v2433 = vunpack.c.l.b16 %v960
    %v2434 = vunpack.c.h.b16 %v960
    %v2435 = vunpack.c.l.b16 %v961
    %v2436 = vunpack.c.h.b16 %v961
    %v2437 = vunpack.c.l.b16 %v962
    %v2438 = vunpack.c.h.b16 %v962
    %v2439 = vunpack.c.l.b16 %v963
    %v2440 = vunpack.c.h.b16 %v963
    %v2441 = vunpack.c.l.b16 %v964
    %v2442 = vunpack.c.h.b16 %v964
    %v2443 = vunpack.c.l.b16 %v965
    %v2444 = vunpack.c.h.b16 %v965
    %v2445 = vunpack.c.l.b16 %v966
    %v2446 = vunpack.c.h.b16 %v966
    %v2447 = vunpack.c.l.b16 %v967
    %v2448 = vunpack.c.h.b16 %v967
    %v2449 = vunpack.c.l.b16 %v968
    %v2450 = vunpack.c.h.b16 %v968
    %v2451 = vunpack.c.l.b16 %v969
    %v2452 = vunpack.c.h.b16 %v969
    %v2453 = vunpack.c.l.b16 %v970
    %v2454 = vunpack.c.h.b16 %v970
    %v2455 = vunpack.c.l.b16 %v971
    %v2456 = vunpack.c.h.b16 %v971
    %v2457 = vunpack.c.l.b16 %v972
    %v2458 = vunpack.c.h.b16 %v972
    %v2459 = vunpack.c.l.b16 %v973
    %v2460 = vunpack.c.h.b16 %v973
    %v2461 = vunpack.c.l.b16 %v974
    %v2462 = vunpack.c.h.b16 %v974
    %v2463 = vunpack.c.l.b16 %v975
    %v2464 = vunpack.c.h.b16 %v975
    %v2465 = vunpack.c.l.b16 %v976
    %v2466 = vunpack.c.h.b16 %v976
    %v2467 = vunpack.c.l.b16 %v977
    %v2468 = vunpack.c.h.b16 %v977
    %v2469 = vunpack.c.l.b16 %v978
    %v2470 = vunpack.c.h.b16 %v978
    %v2471 = vunpack.c.l.b16 %v979
    %v2472 = vunpack.c.h.b16 %v979
    %v2473 = vunpack.c.l.b16 %v980
    %v2474 = vunpack.c.h.b16 %v980
    %v2475 = vunpack.c.l.b16 %v981
    %v2476 = vunpack.c.h.b16 %v981
    %v2477 = vunpack.c.l.b16 %v982
    %v2478 = vunpack.c.h.b16 %v982
    %v2479 = vunpack.c.l.b16 %v983
    %v2480 = vunpack.c.h.b16 %v983
    %v2481 = vunpack.c.l.b16 %v984
    %v2482 = vunpack.c.h.b16 %v984
    %v2483 = vunpack.c.l.b16 %v985
    %v2484 = vunpack.c.h.b16 %v985
    %v2485 = vunpack.c.l.b16 %v986
    %v2486 = vunpack.c.h.b16 %v986
    %v2487 = vunpack.c.l.b16 %v987
    %v2488 = vunpack.c.h.b16 %v987
    %v2489 = vunpack.c.l.b16 %v988
    %v2490 = vunpack.c.h.b16 %v988
    %v2491 = vunpack.c.l.b16 %v989
    %v2492 = vunpack.c.h.b16 %v989
    %v2493 = vunpack.c.l.b16 %v990
    %v2494 = vunpack.c.h.b16 %v990
    %v2495 = vunpack.c.l.b16 %v991
    %v2496 = vunpack.c.h.b16 %v991
    %v2497 = vunpack.c.l.b16 %v992
    %v2498 = vunpack.c.h.b16 %v992
    %v2499 = vunpack.c.l.b16 %v993
    %v2500 = vunpack.c.h.b16 %v993
    %v2501 = vunpack.c.l.b16 %v994
    %v2502 = vunpack.c.h.b16 %v994
    %v2503 = vunpack.c.l.b16 %v995
    %v2504 = vunpack.c.h.b16 %v995
    %v2505 = vunpack.c.l.b16 %v996
    %v2506 = vunpack.c.h.b16 %v996
    %v2507 = vunpack.c.l.b16 %v997
    %v2508 = vunpack.c.h.b16 %v997
    %v2509 = vunpack.c.l.b16 %v998
    %v2510 = vunpack.c.h.b16 %v998
    %v2511 = vunpack.c.l.b16 %v999
    %v2512 = vunpack.c.h.b16 %v999
    %v2513 = vunpack.c.l.b16 %v1000
    %v2514 = vunpack.c.h.b16 %v1000
    %v2515 = vunpack.c.l.b16 %v1001
    %v2516 = vunpack.c.h.b16 %v1001
    %v2517 = vunpack.c.l.b16 %v1002
    %v2518 = vunpack.c.h.b16 %v1002
    %v2519 = vunpack.c.l.b16 %v1003
    %v2520 = vunpack.c.h.b16 %v1003
    %v2521 = vunpack.c.l.b16 %v1004
    %v2522 = vunpack.c.h.b16 %v1004
    %v2523 = vunpack.c.l.b16 %v1005
    %v2524 = vunpack.c.h.b16 %v1005
    %v2525 = vunpack.c.l.b16 %v1006
    %v2526 = vunpack.c.h.b16 %v1006
    %v2527 = vunpack.c.l.b16 %v1007
    %v2528 = vunpack.c.h.b16 %v1007
    %v2529 = vunpack.c.l.b16 %v1008
    %v2530 = vunpack.c.h.b16 %v1008
    %v2531 = vunpack.c.l.b16 %v1009
    %v2532 = vunpack.c.h.b16 %v1009
    %v2533 = vunpack.c.l.b16 %v1010
    %v2534 = vunpack.c.h.b16 %v1010
    %v2535 = vunpack.c.l.b16 %v1011
    %v2536 = vunpack.c.h.b16 %v1011
    %v2537 = vunpack.c.l.b16 %v1012
    %v2538 = vunpack.c.h.b16 %v1012
    %v2539 = vunpack.c.l.b16 %v1013
    %v2540 = vunpack.c.h.b16 %v1013
    %v2541 = vunpack.c.l.b16 %v1014
    %v2542 = vunpack.c.h.b16 %v1014
    %v2543 = vunpack.c.l.b16 %v1015
    %v2544 = vunpack.c.h.b16 %v1015
    %v2545 = vunpack.c.l.b16 %v1016
    %v2546 = vunpack.c.h.b16 %v1016
    %v2547 = vunpack.c.l.b16 %v1017
    %v2548 = vunpack.c.h.b16 %v1017
    %v2549 = vunpack.c.l.b16 %v1018
    %v2550 = vunpack.c.h.b16 %v1018
    %v2551 = vunpack.c.l.b16 %v1019
    %v2552 = vunpack.c.h.b16 %v1019
    %v2553 = vunpack.c.l.b16 %v1020
    %v2554 = vunpack.c.h.b16 %v1020
    %v2555 = vunpack.c.l.b16 %v1021
    %v2556 = vunpack.c.h.b16 %v1021
    %v2557 = vunpack.c.l.b16 %v1022
    %v2558 = vunpack.c.h.b16 %v1022
    %v2559 = vunpack.c.l.b16 %v1023
    %v2560 = vunpack.c.h.b16 %v1023
    %v2561 = vunpack.c.l.b16 %v1024
    %v2562 = vunpack.c.h.b16 %v1024
    %v2563 = vunpack.c.l.b16 %v1025
    %v2564 = vunpack.c.h.b16 %v1025
    %v2565 = vunpack.c.l.b16 %v1026
    %v2566 = vunpack.c.h.b16 %v1026
    %v2567 = vunpack.c.l.b16 %v1027
    %v2568 = vunpack.c.h.b16 %v1027
    %v2569 = vunpack.c.l.b16 %v1028
    %v2570 = vunpack.c.h.b16 %v1028
    %v2571 = vunpack.c.l.b16 %v1029
    %v2572 = vunpack.c.h.b16 %v1029
    %v2573 = vunpack.c.l.b16 %v1030
    %v2574 = vunpack.c.h.b16 %v1030
    %v2575 = vunpack.c.l.b16 %v1031
    %v2576 = vunpack.c.h.b16 %v1031
    %v2577 = vunpack.c.l.b16 %v1032
    %v2578 = vunpack.c.h.b16 %v1032
    %v2579 = vunpack.c.l.b16 %v1033
    %v2580 = vunpack.c.h.b16 %v1033
    %v2581 = vunpack.c.l.b16 %v1034
    %v2582 = vunpack.c.h.b16 %v1034
    %v2583 = vunpack.c.l.b16 %v1035
    %v2584 = vunpack.c.h.b16 %v1035
    %v2585 = vunpack.c.l.b16 %v1036
    %v2586 = vunpack.c.h.b16 %v1036
    %v2587 = vunpack.c.l.b16 %v1037
    %v2588 = vunpack.c.h.b16 %v1037
    %v2589 = vunpack.c.l.b16 %v1038
    %v2590 = vunpack.c.h.b16 %v1038
    %v2591 = vunpack.c.l.b16 %v1039
    %v2592 = vunpack.c.h.b16 %v1039
    %v2593 = vunpack.c.l.b16 %v1040
    %v2594 = vunpack.c.h.b16 %v1040
    %v2595 = vunpack.c.l.b16 %v1041
    %v2596 = vunpack.c.h.b16 %v1041
    %v2597 = vunpack.c.l.b16 %v1042
    %v2598 = vunpack.c.h.b16 %v1042
    %v2599 = vunpack.c.l.b16 %v1043
    %v2600 = vunpack.c.h.b16 %v1043
    %v2601 = vunpack.c.l.b16 %v1044
    %v2602 = vunpack.c.h.b16 %v1044
    %v2603 = vunpack.c.l.b16 %v1045
    %v2604 = vunpack.c.h.b16 %v1045
    %v2605 = vunpack.c.l.b16 %v1046
    %v2606 = vunpack.c.h.b16 %v1046
    %v2607 = vunpack.c.l.b16 %v1047
    %v2608 = vunpack.c.h.b16 %v1047
    %v2609 = vunpack.c.l.b16 %v1048
    %v2610 = vunpack.c.h.b16 %v1048
    %v2611 = vunpack.c.l.b16 %v1049
    %v2612 = vunpack.c.h.b16 %v1049
    %v2613 = vunpack.c.l.b16 %v1050
    %v2614 = vunpack.c.h.b16 %v1050
    %v2615 = vunpack.c.l.b16 %v1051
    %v2616 = vunpack.c.h.b16 %v1051
    %v2617 = vunpack.c.l.b16 %v1052
    %v2618 = vunpack.c.h.b16 %v1052
    %v2619 = vunpack.c.l.b16 %v1053
    %v2620 = vunpack.c.h.b16 %v1053
    %v2621 = vunpack.c.l.b16 %v1054
    %v2622 = vunpack.c.h.b16 %v1054
    %v2623 = vunpack.c.l.b16 %v1055
    %v2624 = vunpack.c.h.b16 %v1055
    %v2625 = vunpack.c.l.b16 %v1056
    %v2626 = vunpack.c.h.b16 %v1056
    %v2627 = vunpack.c.l.b16 %v1057
    %v2628 = vunpack.c.h.b16 %v1057
    %v2629 = vunpack.c.l.b16 %v1058
    %v2630 = vunpack.c.h.b16 %v1058
    %v2631 = vunpack.c.l.b16 %v1059
    %v2632 = vunpack.c.h.b16 %v1059
    %v2633 = vunpack.c.l.b16 %v1060
    %v2634 = vunpack.c.h.b16 %v1060
    %v2635 = vunpack.c.l.b16 %v1061
    %v2636 = vunpack.c.h.b16 %v1061
    %v2637 = vunpack.c.l.b16 %v1062
    %v2638 = vunpack.c.h.b16 %v1062
    %v2639 = vunpack.c.l.b16 %v1063
    %v2640 = vunpack.c.h.b16 %v1063
    %v2641 = vunpack.c.l.b16 %v1064
    %v2642 = vunpack.c.h.b16 %v1064
    %v2643 = vpack.c.b16 %v1627, %v1619
    %v2644 = vpack.c.b16 %v1628, %v1620
    %v2645 = vpack.c.b16 %v1629, %v1621
    %v2646 = vpack.c.b16 %v1630, %v1622
    %v2647 = vpack.c.b16 %v1631, %v1623
    %v2648 = vpack.c.b16 %v1632, %v1624
    %v2649 = vpack.c.b16 %v1633, %v1625
    %v2650 = vpack.c.b16 %v1634, %v1626
    %v2651 = vpack.c.b16 %v1643, %v1635
    %v2652 = vpack.c.b16 %v1644, %v1636
    %v2653 = vpack.c.b16 %v1645, %v1637
    %v2654 = vpack.c.b16 %v1646, %v1638
    %v2655 = vpack.c.b16 %v1647, %v1639
    %v2656 = vpack.c.b16 %v1648, %v1640
    %v2657 = vpack.c.b16 %v1649, %v1641
    %v2658 = vpack.c.b16 %v1650, %v1642
    %v2659 = vpack.c.b16 %v1659, %v1651
    %v2660 = vpack.c.b16 %v1660, %v1652
    %v2661 = vpack.c.b16 %v1661, %v1653
    %v2662 = vpack.c.b16 %v1662, %v1654
    %v2663 = vpack.c.b16 %v1663, %v1655
    %v2664 = vpack.c.b16 %v1664, %v1656
    %v2665 = vpack.c.b16 %v1665, %v1657
    %v2666 = vpack.c.b16 %v1666, %v1658
    %v2667 = vpack.c.b16 %v1675, %v1667
    %v2668 = vpack.c.b16 %v1676, %v1668
    %v2669 = vpack.c.b16 %v1677, %v1669
    %v2670 = vpack.c.b16 %v1678, %v1670
    %v2671 = vpack.c.b16 %v1679, %v1671
    %v2672 = vpack.c.b16 %v1680, %v1672
    %v2673 = vpack.c.b16 %v1681, %v1673
    %v2674 = vpack.c.b16 %v1682, %v1674
    %v2675 = vpack.c.b16 %v1691, %v1683
    %v2676 = vpack.c.b16 %v1692, %v1684
    %v2677 = vpack.c.b16 %v1693, %v1685
    %v2678 = vpack.c.b16 %v1694, %v1686
    %v2679 = vpack.c.b16 %v1695, %v1687
    %v2680 = vpack.c.b16 %v1696, %v1688
    %v2681 = vpack.c.b16 %v1697, %v1689
    %v2682 = vpack.c.b16 %v1698, %v1690
    %v2683 = vpack.c.b16 %v1707, %v1699
    %v2684 = vpack.c.b16 %v1708, %v1700
    %v2685 = vpack.c.b16 %v1709, %v1701
    %v2686 = vpack.c.b16 %v1710, %v1702
    %v2687 = vpack.c.b16 %v1711, %v1703
    %v2688 = vpack.c.b16 %v1712, %v1704
    %v2689 = vpack.c.b16 %v1713, %v1705
    %v2690 = vpack.c.b16 %v1714, %v1706
    %v2691 = vpack.c.b16 %v1723, %v1715
    %v2692 = vpack.c.b16 %v1724, %v1716
    %v2693 = vpack.c.b16 %v1725, %v1717
    %v2694 = vpack.c.b16 %v1726, %v1718
    %v2695 = vpack.c.b16 %v1727, %v1719
    %v2696 = vpack.c.b16 %v1728, %v1720
    %v2697 = vpack.c.b16 %v1729, %v1721
    %v2698 = vpack.c.b16 %v1730, %v1722
    %v2699 = vpack.c.b16 %v1739, %v1731
    %v2700 = vpack.c.b16 %v1740, %v1732
    %v2701 = vpack.c.b16 %v1741, %v1733
    %v2702 = vpack.c.b16 %v1742, %v1734
    %v2703 = vpack.c.b16 %v1743, %v1735
    %v2704 = vpack.c.b16 %v1744, %v1736
    %v2705 = vpack.c.b16 %v1745, %v1737
    %v2706 = vpack.c.b16 %v1746, %v1738
    %v2707 = vpack.c.b16 %v1755, %v1747
    %v2708 = vpack.c.b16 %v1756, %v1748
    %v2709 = vpack.c.b16 %v1757, %v1749
    %v2710 = vpack.c.b16 %v1758, %v1750
    %v2711 = vpack.c.b16 %v1759, %v1751
    %v2712 = vpack.c.b16 %v1760, %v1752
    %v2713 = vpack.c.b16 %v1761, %v1753
    %v2714 = vpack.c.b16 %v1762, %v1754
    %v2715 = vpack.c.b16 %v1771, %v1763
    %v2716 = vpack.c.b16 %v1772, %v1764
    %v2717 = vpack.c.b16 %v1773, %v1765
    %v2718 = vpack.c.b16 %v1774, %v1766
    %v2719 = vpack.c.b16 %v1775, %v1767
    %v2720 = vpack.c.b16 %v1776, %v1768
    %v2721 = vpack.c.b16 %v1777, %v1769
    %v2722 = vpack.c.b16 %v1778, %v1770
    %v2723 = vpack.c.b16 %v1787, %v1779
    %v2724 = vpack.c.b16 %v1788, %v1780
    %v2725 = vpack.c.b16 %v1789, %v1781
    %v2726 = vpack.c.b16 %v1790, %v1782
    %v2727 = vpack.c.b16 %v1791, %v1783
    %v2728 = vpack.c.b16 %v1792, %v1784
    %v2729 = vpack.c.b16 %v1793, %v1785
    %v2730 = vpack.c.b16 %v1794, %v1786
    %v2731 = vpack.c.b16 %v1803, %v1795
    %v2732 = vpack.c.b16 %v1804, %v1796
    %v2733 = vpack.c.b16 %v1805, %v1797
    %v2734 = vpack.c.b16 %v1806, %v1798
    %v2735 = vpack.c.b16 %v1807, %v1799
    %v2736 = vpack.c.b16 %v1808, %v1800
    %v2737 = vpack.c.b16 %v1809, %v1801
    %v2738 = vpack.c.b16 %v1810, %v1802
    %v2739 = vpack.c.b16 %v1819, %v1811
    %v2740 = vpack.c.b16 %v1820, %v1812
    %v2741 = vpack.c.b16 %v1821, %v1813
    %v2742 = vpack.c.b16 %v1822, %v1814
    %v2743 = vpack.c.b16 %v1823, %v1815
    %v2744 = vpack.c.b16 %v1824, %v1816
    %v2745 = vpack.c.b16 %v1825, %v1817
    %v2746 = vpack.c.b16 %v1826, %v1818
    %v2747 = vpack.c.b16 %v1835, %v1827
    %v2748 = vpack.c.b16 %v1836, %v1828
    %v2749 = vpack.c.b16 %v1837, %v1829
    %v2750 = vpack.c.b16 %v1838, %v1830
    %v2751 = vpack.c.b16 %v1839, %v1831
    %v2752 = vpack.c.b16 %v1840, %v1832
    %v2753 = vpack.c.b16 %v1841, %v1833
    %v2754 = vpack.c.b16 %v1842, %v1834
    %v2755 = vpack.c.b16 %v1851, %v1843
    %v2756 = vpack.c.b16 %v1852, %v1844
    %v2757 = vpack.c.b16 %v1853, %v1845
    %v2758 = vpack.c.b16 %v1854, %v1846
    %v2759 = vpack.c.b16 %v1855, %v1847
    %v2760 = vpack.c.b16 %v1856, %v1848
    %v2761 = vpack.c.b16 %v1857, %v1849
    %v2762 = vpack.c.b16 %v1858, %v1850
    %v2763 = vpack.c.b16 %v1867, %v1859
    %v2764 = vpack.c.b16 %v1868, %v1860
    %v2765 = vpack.c.b16 %v1869, %v1861
    %v2766 = vpack.c.b16 %v1870, %v1862
    %v2767 = vpack.c.b16 %v1871, %v1863
    %v2768 = vpack.c.b16 %v1872, %v1864
    %v2769 = vpack.c.b16 %v1873, %v1865
    %v2770 = vpack.c.b16 %v1874, %v1866
    %v2771 = vpack.c.b16 %v1883, %v1875
    %v2772 = vpack.c.b16 %v1884, %v1876
    %v2773 = vpack.c.b16 %v1885, %v1877
    %v2774 = vpack.c.b16 %v1886, %v1878
    %v2775 = vpack.c.b16 %v1887, %v1879
    %v2776 = vpack.c.b16 %v1888, %v1880
    %v2777 = vpack.c.b16 %v1889, %v1881
    %v2778 = vpack.c.b16 %v1890, %v1882
    %v2779 = vpack.c.b16 %v1899, %v1891
    %v2780 = vpack.c.b16 %v1900, %v1892
    %v2781 = vpack.c.b16 %v1901, %v1893
    %v2782 = vpack.c.b16 %v1902, %v1894
    %v2783 = vpack.c.b16 %v1903, %v1895
    %v2784 = vpack.c.b16 %v1904, %v1896
    %v2785 = vpack.c.b16 %v1905, %v1897
    %v2786 = vpack.c.b16 %v1906, %v1898
    %v2787 = vpack.c.b16 %v1915, %v1907
    %v2788 = vpack.c.b16 %v1916, %v1908
    %v2789 = vpack.c.b16 %v1917, %v1909
    %v2790 = vpack.c.b16 %v1918, %v1910
    %v2791 = vpack.c.b16 %v1919, %v1911
    %v2792 = vpack.c.b16 %v1920, %v1912
    %v2793 = vpack.c.b16 %v1921, %v1913
    %v2794 = vpack.c.b16 %v1922, %v1914
    %v2795 = vpack.c.b16 %v1931, %v1923
    %v2796 = vpack.c.b16 %v1932, %v1924
    %v2797 = vpack.c.b16 %v1933, %v1925
    %v2798 = vpack.c.b16 %v1934, %v1926
    %v2799 = vpack.c.b16 %v1935, %v1927
    %v2800 = vpack.c.b16 %v1936, %v1928
    %v2801 = vpack.c.b16 %v1937, %v1929
    %v2802 = vpack.c.b16 %v1938, %v1930
    %v2803 = vpack.c.b16 %v1947, %v1939
    %v2804 = vpack.c.b16 %v1948, %v1940
    %v2805 = vpack.c.b16 %v1949, %v1941
    %v2806 = vpack.c.b16 %v1950, %v1942
    %v2807 = vpack.c.b16 %v1951, %v1943
    %v2808 = vpack.c.b16 %v1952, %v1944
    %v2809 = vpack.c.b16 %v1953, %v1945
    %v2810 = vpack.c.b16 %v1954, %v1946
    %v2811 = vpack.c.b16 %v1963, %v1955
    %v2812 = vpack.c.b16 %v1964, %v1956
    %v2813 = vpack.c.b16 %v1965, %v1957
    %v2814 = vpack.c.b16 %v1966, %v1958
    %v2815 = vpack.c.b16 %v1967, %v1959
    %v2816 = vpack.c.b16 %v1968, %v1960
    %v2817 = vpack.c.b16 %v1969, %v1961
    %v2818 = vpack.c.b16 %v1970, %v1962
    %v2819 = vpack.c.b16 %v1979, %v1971
    %v2820 = vpack.c.b16 %v1980, %v1972
    %v2821 = vpack.c.b16 %v1981, %v1973
    %v2822 = vpack.c.b16 %v1982, %v1974
    %v2823 = vpack.c.b16 %v1983, %v1975
    %v2824 = vpack.c.b16 %v1984, %v1976
    %v2825 = vpack.c.b16 %v1985, %v1977
    %v2826 = vpack.c.b16 %v1986, %v1978
    %v2827 = vpack.c.b16 %v1995, %v1987
    %v2828 = vpack.c.b16 %v1996, %v1988
    %v2829 = vpack.c.b16 %v1997, %v1989
    %v2830 = vpack.c.b16 %v1998, %v1990
    %v2831 = vpack.c.b16 %v1999, %v1991
    %v2832 = vpack.c.b16 %v2000, %v1992
    %v2833 = vpack.c.b16 %v2001, %v1993
    %v2834 = vpack.c.b16 %v2002, %v1994
    %v2835 = vpack.c.b16 %v2011, %v2003
    %v2836 = vpack.c.b16 %v2012, %v2004
    %v2837 = vpack.c.b16 %v2013, %v2005
    %v2838 = vpack.c.b16 %v2014, %v2006
    %v2839 = vpack.c.b16 %v2015, %v2007
    %v2840 = vpack.c.b16 %v2016, %v2008
    %v2841 = vpack.c.b16 %v2017, %v2009
    %v2842 = vpack.c.b16 %v2018, %v2010
    %v2843 = vpack.c.b16 %v2027, %v2019
    %v2844 = vpack.c.b16 %v2028, %v2020
    %v2845 = vpack.c.b16 %v2029, %v2021
    %v2846 = vpack.c.b16 %v2030, %v2022
    %v2847 = vpack.c.b16 %v2031, %v2023
    %v2848 = vpack.c.b16 %v2032, %v2024
    %v2849 = vpack.c.b16 %v2033, %v2025
    %v2850 = vpack.c.b16 %v2034, %v2026
    %v2851 = vpack.c.b16 %v2043, %v2035
    %v2852 = vpack.c.b16 %v2044, %v2036
    %v2853 = vpack.c.b16 %v2045, %v2037
    %v2854 = vpack.c.b16 %v2046, %v2038
    %v2855 = vpack.c.b16 %v2047, %v2039
    %v2856 = vpack.c.b16 %v2048, %v2040
    %v2857 = vpack.c.b16 %v2049, %v2041
    %v2858 = vpack.c.b16 %v2050, %v2042
    %v2859 = vpack.c.b16 %v2059, %v2051
    %v2860 = vpack.c.b16 %v2060, %v2052
    %v2861 = vpack.c.b16 %v2061, %v2053
    %v2862 = vpack.c.b16 %v2062, %v2054
    %v2863 = vpack.c.b16 %v2063, %v2055
    %v2864 = vpack.c.b16 %v2064, %v2056
    %v2865 = vpack.c.b16 %v2065, %v2057
    %v2866 = vpack.c.b16 %v2066, %v2058
    %v2867 = vpack.c.b16 %v2075, %v2067
    %v2868 = vpack.c.b16 %v2076, %v2068
    %v2869 = vpack.c.b16 %v2077, %v2069
    %v2870 = vpack.c.b16 %v2078, %v2070
    %v2871 = vpack.c.b16 %v2079, %v2071
    %v2872 = vpack.c.b16 %v2080, %v2072
    %v2873 = vpack.c.b16 %v2081, %v2073
    %v2874 = vpack.c.b16 %v2082, %v2074
    %v2875 = vpack.c.b16 %v2091, %v2083
    %v2876 = vpack.c.b16 %v2092, %v2084
    %v2877 = vpack.c.b16 %v2093, %v2085
    %v2878 = vpack.c.b16 %v2094, %v2086
    %v2879 = vpack.c.b16 %v2095, %v2087
    %v2880 = vpack.c.b16 %v2096, %v2088
    %v2881 = vpack.c.b16 %v2097, %v2089
    %v2882 = vpack.c.b16 %v2098, %v2090
    %v2883 = vpack.c.b16 %v2107, %v2099
    %v2884 = vpack.c.b16 %v2108, %v2100
    %v2885 = vpack.c.b16 %v2109, %v2101
    %v2886 = vpack.c.b16 %v2110, %v2102
    %v2887 = vpack.c.b16 %v2111, %v2103
    %v2888 = vpack.c.b16 %v2112, %v2104
    %v2889 = vpack.c.b16 %v2113, %v2105
    %v2890 = vpack.c.b16 %v2114, %v2106
    %v2891 = vpack.c.b16 %v2123, %v2115
    %v2892 = vpack.c.b16 %v2124, %v2116
    %v2893 = vpack.c.b16 %v2125, %v2117
    %v2894 = vpack.c.b16 %v2126, %v2118
    %v2895 = vpack.c.b16 %v2127, %v2119
    %v2896 = vpack.c.b16 %v2128, %v2120
    %v2897 = vpack.c.b16 %v2129, %v2121
    %v2898 = vpack.c.b16 %v2130, %v2122
    %v2899 = vpack.c.b16 %v2139, %v2131
    %v2900 = vpack.c.b16 %v2140, %v2132
    %v2901 = vpack.c.b16 %v2141, %v2133
    %v2902 = vpack.c.b16 %v2142, %v2134
    %v2903 = vpack.c.b16 %v2143, %v2135
    %v2904 = vpack.c.b16 %v2144, %v2136
    %v2905 = vpack.c.b16 %v2145, %v2137
    %v2906 = vpack.c.b16 %v2146, %v2138
    %v2907 = vpack.c.b16 %v2155, %v2147
    %v2908 = vpack.c.b16 %v2156, %v2148
    %v2909 = vpack.c.b16 %v2157, %v2149
    %v2910 = vpack.c.b16 %v2158, %v2150
    %v2911 = vpack.c.b16 %v2159, %v2151
    %v2912 = vpack.c.b16 %v2160, %v2152
    %v2913 = vpack.c.b16 %v2161, %v2153
    %v2914 = vpack.c.b16 %v2162, %v2154
    %v2915 = vpack.c.b16 %v2171, %v2163
    %v2916 = vpack.c.b16 %v2172, %v2164
    %v2917 = vpack.c.b16 %v2173, %v2165
    %v2918 = vpack.c.b16 %v2174, %v2166
    %v2919 = vpack.c.b16 %v2175, %v2167
    %v2920 = vpack.c.b16 %v2176, %v2168
    %v2921 = vpack.c.b16 %v2177, %v2169
    %v2922 = vpack.c.b16 %v2178, %v2170
    %v2923 = vpack.c.b16 %v2187, %v2179
    %v2924 = vpack.c.b16 %v2188, %v2180
    %v2925 = vpack.c.b16 %v2189, %v2181
    %v2926 = vpack.c.b16 %v2190, %v2182
    %v2927 = vpack.c.b16 %v2191, %v2183
    %v2928 = vpack.c.b16 %v2192, %v2184
    %v2929 = vpack.c.b16 %v2193, %v2185
    %v2930 = vpack.c.b16 %v2194, %v2186
    %v2931 = vpack.c.b16 %v2203, %v2195
    %v2932 = vpack.c.b16 %v2204, %v2196
    %v2933 = vpack.c.b16 %v2205, %v2197
    %v2934 = vpack.c.b16 %v2206, %v2198
    %v2935 = vpack.c.b16 %v2207, %v2199
    %v2936 = vpack.c.b16 %v2208, %v2200
    %v2937 = vpack.c.b16 %v2209, %v2201
    %v2938 = vpack.c.b16 %v2210, %v2202
    %v2939 = vpack.c.b16 %v2219, %v2211
    %v2940 = vpack.c.b16 %v2220, %v2212
    %v2941 = vpack.c.b16 %v2221, %v2213
    %v2942 = vpack.c.b16 %v2222, %v2214
    %v2943 = vpack.c.b16 %v2223, %v2215
    %v2944 = vpack.c.b16 %v2224, %v2216
    %v2945 = vpack.c.b16 %v2225, %v2217
    %v2946 = vpack.c.b16 %v2226, %v2218
    %v2947 = vpack.c.b16 %v2235, %v2227
    %v2948 = vpack.c.b16 %v2236, %v2228
    %v2949 = vpack.c.b16 %v2237, %v2229
    %v2950 = vpack.c.b16 %v2238, %v2230
    %v2951 = vpack.c.b16 %v2239, %v2231
    %v2952 = vpack.c.b16 %v2240, %v2232
    %v2953 = vpack.c.b16 %v2241, %v2233
    %v2954 = vpack.c.b16 %v2242, %v2234
    %v2955 = vpack.c.b16 %v2251, %v2243
    %v2956 = vpack.c.b16 %v2252, %v2244
    %v2957 = vpack.c.b16 %v2253, %v2245
    %v2958 = vpack.c.b16 %v2254, %v2246
    %v2959 = vpack.c.b16 %v2255, %v2247
    %v2960 = vpack.c.b16 %v2256, %v2248
    %v2961 = vpack.c.b16 %v2257, %v2249
    %v2962 = vpack.c.b16 %v2258, %v2250
    %v2963 = vpack.c.b16 %v2267, %v2259
    %v2964 = vpack.c.b16 %v2268, %v2260
    %v2965 = vpack.c.b16 %v2269, %v2261
    %v2966 = vpack.c.b16 %v2270, %v2262
    %v2967 = vpack.c.b16 %v2271, %v2263
    %v2968 = vpack.c.b16 %v2272, %v2264
    %v2969 = vpack.c.b16 %v2273, %v2265
    %v2970 = vpack.c.b16 %v2274, %v2266
    %v2971 = vpack.c.b16 %v2283, %v2275
    %v2972 = vpack.c.b16 %v2284, %v2276
    %v2973 = vpack.c.b16 %v2285, %v2277
    %v2974 = vpack.c.b16 %v2286, %v2278
    %v2975 = vpack.c.b16 %v2287, %v2279
    %v2976 = vpack.c.b16 %v2288, %v2280
    %v2977 = vpack.c.b16 %v2289, %v2281
    %v2978 = vpack.c.b16 %v2290, %v2282
    %v2979 = vpack.c.b16 %v2299, %v2291
    %v2980 = vpack.c.b16 %v2300, %v2292
    %v2981 = vpack.c.b16 %v2301, %v2293
    %v2982 = vpack.c.b16 %v2302, %v2294
    %v2983 = vpack.c.b16 %v2303, %v2295
    %v2984 = vpack.c.b16 %v2304, %v2296
    %v2985 = vpack.c.b16 %v2305, %v2297
    %v2986 = vpack.c.b16 %v2306, %v2298
    %v2987 = vpack.c.b16 %v2315, %v2307
    %v2988 = vpack.c.b16 %v2316, %v2308
    %v2989 = vpack.c.b16 %v2317, %v2309
    %v2990 = vpack.c.b16 %v2318, %v2310
    %v2991 = vpack.c.b16 %v2319, %v2311
    %v2992 = vpack.c.b16 %v2320, %v2312
    %v2993 = vpack.c.b16 %v2321, %v2313
    %v2994 = vpack.c.b16 %v2322, %v2314
    %v2995 = vpack.c.b16 %v2331, %v2323
    %v2996 = vpack.c.b16 %v2332, %v2324
    %v2997 = vpack.c.b16 %v2333, %v2325
    %v2998 = vpack.c.b16 %v2334, %v2326
    %v2999 = vpack.c.b16 %v2335, %v2327
    %v3000 = vpack.c.b16 %v2336, %v2328
    %v3001 = vpack.c.b16 %v2337, %v2329
    %v3002 = vpack.c.b16 %v2338, %v2330
    %v3003 = vpack.c.b16 %v2347, %v2339
    %v3004 = vpack.c.b16 %v2348, %v2340
    %v3005 = vpack.c.b16 %v2349, %v2341
    %v3006 = vpack.c.b16 %v2350, %v2342
    %v3007 = vpack.c.b16 %v2351, %v2343
    %v3008 = vpack.c.b16 %v2352, %v2344
    %v3009 = vpack.c.b16 %v2353, %v2345
    %v3010 = vpack.c.b16 %v2354, %v2346
    %v3011 = vpack.c.b16 %v2363, %v2355
    %v3012 = vpack.c.b16 %v2364, %v2356
    %v3013 = vpack.c.b16 %v2365, %v2357
    %v3014 = vpack.c.b16 %v2366, %v2358
    %v3015 = vpack.c.b16 %v2367, %v2359
    %v3016 = vpack.c.b16 %v2368, %v2360
    %v3017 = vpack.c.b16 %v2369, %v2361
    %v3018 = vpack.c.b16 %v2370, %v2362
    %v3019 = vpack.c.b16 %v2379, %v2371
    %v3020 = vpack.c.b16 %v2380, %v2372
    %v3021 = vpack.c.b16 %v2381, %v2373
    %v3022 = vpack.c.b16 %v2382, %v2374
    %v3023 = vpack.c.b16 %v2383, %v2375
    %v3024 = vpack.c.b16 %v2384, %v2376
    %v3025 = vpack.c.b16 %v2385, %v2377
    %v3026 = vpack.c.b16 %v2386, %v2378
    %v3027 = vpack.c.b16 %v2395, %v2387
    %v3028 = vpack.c.b16 %v2396, %v2388
    %v3029 = vpack.c.b16 %v2397, %v2389
    %v3030 = vpack.c.b16 %v2398, %v2390
    %v3031 = vpack.c.b16 %v2399, %v2391
    %v3032 = vpack.c.b16 %v2400, %v2392
    %v3033 = vpack.c.b16 %v2401, %v2393
    %v3034 = vpack.c.b16 %v2402, %v2394
    %v3035 = vpack.c.b16 %v2411, %v2403
    %v3036 = vpack.c.b16 %v2412, %v2404
    %v3037 = vpack.c.b16 %v2413, %v2405
    %v3038 = vpack.c.b16 %v2414, %v2406
    %v3039 = vpack.c.b16 %v2415, %v2407
    %v3040 = vpack.c.b16 %v2416, %v2408
    %v3041 = vpack.c.b16 %v2417, %v2409
    %v3042 = vpack.c.b16 %v2418, %v2410
    %v3043 = vpack.c.b16 %v2427, %v2419
    %v3044 = vpack.c.b16 %v2428, %v2420
    %v3045 = vpack.c.b16 %v2429, %v2421
    %v3046 = vpack.c.b16 %v2430, %v2422
    %v3047 = vpack.c.b16 %v2431, %v2423
    %v3048 = vpack.c.b16 %v2432, %v2424
    %v3049 = vpack.c.b16 %v2433, %v2425
    %v3050 = vpack.c.b16 %v2434, %v2426
    %v3051 = vpack.c.b16 %v2443, %v2435
    %v3052 = vpack.c.b16 %v2444, %v2436
    %v3053 = vpack.c.b16 %v2445, %v2437
    %v3054 = vpack.c.b16 %v2446, %v2438
    %v3055 = vpack.c.b16 %v2447, %v2439
    %v3056 = vpack.c.b16 %v2448, %v2440
    %v3057 = vpack.c.b16 %v2449, %v2441
    %v3058 = vpack.c.b16 %v2450, %v2442
    %v3059 = vpack.c.b16 %v2459, %v2451
    %v3060 = vpack.c.b16 %v2460, %v2452
    %v3061 = vpack.c.b16 %v2461, %v2453
    %v3062 = vpack.c.b16 %v2462, %v2454
    %v3063 = vpack.c.b16 %v2463, %v2455
    %v3064 = vpack.c.b16 %v2464, %v2456
    %v3065 = vpack.c.b16 %v2465, %v2457
    %v3066 = vpack.c.b16 %v2466, %v2458
    %v3067 = vpack.c.b16 %v2475, %v2467
    %v3068 = vpack.c.b16 %v2476, %v2468
    %v3069 = vpack.c.b16 %v2477, %v2469
    %v3070 = vpack.c.b16 %v2478, %v2470
    %v3071 = vpack.c.b16 %v2479, %v2471
    %v3072 = vpack.c.b16 %v2480, %v2472
    %v3073 = vpack.c.b16 %v2481, %v2473
    %v3074 = vpack.c.b16 %v2482, %v2474
    %v3075 = vpack.c.b16 %v2491, %v2483
    %v3076 = vpack.c.b16 %v2492, %v2484
    %v3077 = vpack.c.b16 %v2493, %v2485
    %v3078 = vpack.c.b16 %v2494, %v2486
    %v3079 = vpack.c.b16 %v2495, %v2487
    %v3080 = vpack.c.b16 %v2496, %v2488
    %v3081 = vpack.c.b16 %v2497, %v2489
    %v3082 = vpack.c.b16 %v2498, %v2490
    %v3083 = vpack.c.b16 %v2507, %v2499
    %v3084 = vpack.c.b16 %v2508, %v2500
    %v3085 = vpack.c.b16 %v2509, %v2501
    %v3086 = vpack.c.b16 %v2510, %v2502
    %v3087 = vpack.c.b16 %v2511, %v2503
    %v3088 = vpack.c.b16 %v2512, %v2504
    %v3089 = vpack.c.b16 %v2513, %v2505
    %v3090 = vpack.c.b16 %v2514, %v2506
    %v3091 = vpack.c.b16 %v2523, %v2515
    %v3092 = vpack.c.b16 %v2524, %v2516
    %v3093 = vpack.c.b16 %v2525, %v2517
    %v3094 = vpack.c.b16 %v2526, %v2518
    %v3095 = vpack.c.b16 %v2527, %v2519
    %v3096 = vpack.c.b16 %v2528, %v2520
    %v3097 = vpack.c.b16 %v2529, %v2521
    %v3098 = vpack.c.b16 %v2530, %v2522
    %v3099 = vpack.c.b16 %v2539, %v2531
    %v3100 = vpack.c.b16 %v2540, %v2532
    %v3101 = vpack.c.b16 %v2541, %v2533
    %v3102 = vpack.c.b16 %v2542, %v2534
    %v3103 = vpack.c.b16 %v2543, %v2535
    %v3104 = vpack.c.b16 %v2544, %v2536
    %v3105 = vpack.c.b16 %v2545, %v2537
    %v3106 = vpack.c.b16 %v2546, %v2538
    %v3107 = vpack.c.b16 %v2555, %v2547
    %v3108 = vpack.c.b16 %v2556, %v2548
    %v3109 = vpack.c.b16 %v2557, %v2549
    %v3110 = vpack.c.b16 %v2558, %v2550
    %v3111 = vpack.c.b16 %v2559, %v2551
    %v3112 = vpack.c.b16 %v2560, %v2552
    %v3113 = vpack.c.b16 %v2561, %v2553
    %v3114 = vpack.c.b16 %v2562, %v2554
    %v3115 = vpack.c.b16 %v2571, %v2563
    %v3116 = vpack.c.b16 %v2572, %v2564
    %v3117 = vpack.c.b16 %v2573, %v2565
    %v3118 = vpack.c.b16 %v2574, %v2566
    %v3119 = vpack.c.b16 %v2575, %v2567
    %v3120 = vpack.c.b16 %v2576, %v2568
    %v3121 = vpack.c.b16 %v2577, %v2569
    %v3122 = vpack.c.b16 %v2578, %v2570
    %v3123 = vpack.c.b16 %v2587, %v2579
    %v3124 = vpack.c.b16 %v2588, %v2580
    %v3125 = vpack.c.b16 %v2589, %v2581
    %v3126 = vpack.c.b16 %v2590, %v2582
    %v3127 = vpack.c.b16 %v2591, %v2583
    %v3128 = vpack.c.b16 %v2592, %v2584
    %v3129 = vpack.c.b16 %v2593, %v2585
    %v3130 = vpack.c.b16 %v2594, %v2586
    %v3131 = vpack.c.b16 %v2603, %v2595
    %v3132 = vpack.c.b16 %v2604, %v2596
    %v3133 = vpack.c.b16 %v2605, %v2597
    %v3134 = vpack.c.b16 %v2606, %v2598
    %v3135 = vpack.c.b16 %v2607, %v2599
    %v3136 = vpack.c.b16 %v2608, %v2600
    %v3137 = vpack.c.b16 %v2609, %v2601
    %v3138 = vpack.c.b16 %v2610, %v2602
    %v3139 = vpack.c.b16 %v2619, %v2611
    %v3140 = vpack.c.b16 %v2620, %v2612
    %v3141 = vpack.c.b16 %v2621, %v2613
    %v3142 = vpack.c.b16 %v2622, %v2614
    %v3143 = vpack.c.b16 %v2623, %v2615
    %v3144 = vpack.c.b16 %v2624, %v2616
    %v3145 = vpack.c.b16 %v2625, %v2617
    %v3146 = vpack.c.b16 %v2626, %v2618
    %v3147 = vpack.c.b16 %v2635, %v2627
    %v3148 = vpack.c.b16 %v2636, %v2628
    %v3149 = vpack.c.b16 %v2637, %v2629
    %v3150 = vpack.c.b16 %v2638, %v2630
    %v3151 = vpack.c.b16 %v2639, %v2631
    %v3152 = vpack.c.b16 %v2640, %v2632
    %v3153 = vpack.c.b16 %v2641, %v2633
    %v3154 = vpack.c.b16 %v2642, %v2634
    %3667 = vmatprep.subr.bf16.mxu0 %v2700
    %3668 = vmatpush1.bf16.msra.mxu0 %v2699
    %3669 = vmatprep.subr.bf16.mxu0 %v2692
    %3670 = vmatpush1.bf16.msra.mxu0 %v2691
    %3671 = vmatprep.subr.bf16.mxu0 %v2684
    %3672 = vmatpush1.bf16.msra.mxu0 %v2683
    %3673 = vmatprep.subr.bf16.mxu0 %v2676
    %3674 = vmatpush1.bf16.msra.mxu0 %v2675
    %3675 = vmatprep.subr.bf16.mxu0 %v2668
    %3676 = vmatpush1.bf16.msra.mxu0 %v2667
    %3677 = vmatprep.subr.bf16.mxu0 %v2660
    %3678 = vmatpush1.bf16.msra.mxu0 %v2659
    %3679 = vmatprep.subr.bf16.mxu0 %v2652
    %3680 = vmatpush1.bf16.msra.mxu0 %v2651
    %3681 = vmatprep.subr.bf16.mxu0 %v2644
    %3682 = vmatpush1.bf16.msra.mxu0 %v2643
    %3683 = vmatprep.subr.bf16.mxu0 %v2764
    %3684 = vmatpush2.bf16.msra.mxu0 %v2763
    %3685 = vmatprep.subr.bf16.mxu0 %v2756
    %3686 = vmatpush2.bf16.msra.mxu0 %v2755
    %3687 = vmatprep.subr.bf16.mxu0 %v2748
    %3688 = vmatpush2.bf16.msra.mxu0 %v2747
    %3689 = vmatprep.subr.bf16.mxu0 %v2740
    %3690 = vmatpush2.bf16.msra.mxu0 %v2739
    %3691 = vmatprep.subr.bf16.mxu0 %v2732
    %3692 = vmatpush2.bf16.msra.mxu0 %v2731
    %3693 = vmatprep.subr.bf16.mxu0 %v2724
    %3694 = vmatpush2.bf16.msra.mxu0 %v2723
    %3695 = vmatprep.subr.bf16.mxu0 %v2716
    %3696 = vmatpush2.bf16.msra.mxu0 %v2715
    %3697 = vmatprep.subr.bf16.mxu0 %v2708
    %3698 = vmatpush2.bf16.msra.mxu0 %v2707
    %3699 = vmatprep.mubr.bf16.mxu0 %v546
    %3700 = vmatmul.mubr.bf16.gmra.mxu0 %v545
    %v3701 = vpop.f32.mrf.mxu0
    %v3702 = vadd.f32 %v1070, %v3701
    %v3703 = vpop.f32.mrf.mxu0
    %v3704 = vadd.f32 %v1074, %v3703
    %v3705 = vpop.f32.mrf.mxu0
    %v3706 = vadd.f32 %v1070, %v3705
    %v3707 = vpop.f32.mrf.mxu0
    %v3708 = vadd.f32 %v1074, %v3707
    %3709 = vdwg.mxu0
    %3710 = vmatprep.subr.bf16.mxu0 %v2828
    %3711 = vmatpush1.bf16.msra.mxu0 %v2827
    %3712 = vmatprep.subr.bf16.mxu0 %v2820
    %3713 = vmatpush1.bf16.msra.mxu0 %v2819
    %3714 = vmatprep.subr.bf16.mxu0 %v2812
    %3715 = vmatpush1.bf16.msra.mxu0 %v2811
    %3716 = vmatprep.subr.bf16.mxu0 %v2804
    %3717 = vmatpush1.bf16.msra.mxu0 %v2803
    %3718 = vmatprep.subr.bf16.mxu0 %v2796
    %3719 = vmatpush1.bf16.msra.mxu0 %v2795
    %3720 = vmatprep.subr.bf16.mxu0 %v2788
    %3721 = vmatpush1.bf16.msra.mxu0 %v2787
    %3722 = vmatprep.subr.bf16.mxu0 %v2780
    %3723 = vmatpush1.bf16.msra.mxu0 %v2779
    %3724 = vmatprep.subr.bf16.mxu0 %v2772
    %3725 = vmatpush1.bf16.msra.mxu0 %v2771
    %3726 = vmatprep.subr.bf16.mxu0 %v2892
    %3727 = vmatpush2.bf16.msra.mxu0 %v2891
    %3728 = vmatprep.subr.bf16.mxu0 %v2884
    %3729 = vmatpush2.bf16.msra.mxu0 %v2883
    %3730 = vmatprep.subr.bf16.mxu0 %v2876
    %3731 = vmatpush2.bf16.msra.mxu0 %v2875
    %3732 = vmatprep.subr.bf16.mxu0 %v2868
    %3733 = vmatpush2.bf16.msra.mxu0 %v2867
    %3734 = vmatprep.subr.bf16.mxu0 %v2860
    %3735 = vmatpush2.bf16.msra.mxu0 %v2859
    %3736 = vmatprep.subr.bf16.mxu0 %v2852
    %3737 = vmatpush2.bf16.msra.mxu0 %v2851
    %3738 = vmatprep.subr.bf16.mxu0 %v2844
    %3739 = vmatpush2.bf16.msra.mxu0 %v2843
    %3740 = vmatprep.subr.bf16.mxu0 %v2836
    %3741 = vmatpush2.bf16.msra.mxu0 %v2835
    %3742 = vmatprep.mubr.bf16.mxu0 %v548
    %3743 = vmatmul.mubr.bf16.gmra.mxu0 %v547
    %v3744 = vpop.f32.mrf.mxu0
    %v3745 = vadd.f32 %v3702, %v3744
    %v3746 = vpop.f32.mrf.mxu0
    %v3747 = vadd.f32 %v3704, %v3746
    %v3748 = vpop.f32.mrf.mxu0
    %v3749 = vadd.f32 %v3706, %v3748
    %v3750 = vpop.f32.mrf.mxu0
    %v3751 = vadd.f32 %v3708, %v3750
    %3752 = vdwg.mxu0
    %3753 = vmatprep.subr.bf16.mxu0 %v2956
    %3754 = vmatpush1.bf16.msra.mxu0 %v2955
    %3755 = vmatprep.subr.bf16.mxu0 %v2948
    %3756 = vmatpush1.bf16.msra.mxu0 %v2947
    %3757 = vmatprep.subr.bf16.mxu0 %v2940
    %3758 = vmatpush1.bf16.msra.mxu0 %v2939
    %3759 = vmatprep.subr.bf16.mxu0 %v2932
    %3760 = vmatpush1.bf16.msra.mxu0 %v2931
    %3761 = vmatprep.subr.bf16.mxu0 %v2924
    %3762 = vmatpush1.bf16.msra.mxu0 %v2923
    %3763 = vmatprep.subr.bf16.mxu0 %v2916
    %3764 = vmatpush1.bf16.msra.mxu0 %v2915
    %3765 = vmatprep.subr.bf16.mxu0 %v2908
    %3766 = vmatpush1.bf16.msra.mxu0 %v2907
    %3767 = vmatprep.subr.bf16.mxu0 %v2900
    %3768 = vmatpush1.bf16.msra.mxu0 %v2899
    %3769 = vmatprep.subr.bf16.mxu0 %v3020
    %3770 = vmatpush2.bf16.msra.mxu0 %v3019
    %3771 = vmatprep.subr.bf16.mxu0 %v3012
    %3772 = vmatpush2.bf16.msra.mxu0 %v3011
    %3773 = vmatprep.subr.bf16.mxu0 %v3004
    %3774 = vmatpush2.bf16.msra.mxu0 %v3003
    %3775 = vmatprep.subr.bf16.mxu0 %v2996
    %3776 = vmatpush2.bf16.msra.mxu0 %v2995
    %3777 = vmatprep.subr.bf16.mxu0 %v2988
    %3778 = vmatpush2.bf16.msra.mxu0 %v2987
    %3779 = vmatprep.subr.bf16.mxu0 %v2980
    %3780 = vmatpush2.bf16.msra.mxu0 %v2979
    %3781 = vmatprep.subr.bf16.mxu0 %v2972
    %3782 = vmatpush2.bf16.msra.mxu0 %v2971
    %3783 = vmatprep.subr.bf16.mxu0 %v2964
    %3784 = vmatpush2.bf16.msra.mxu0 %v2963
    %3785 = vmatprep.mubr.bf16.mxu0 %v550
    %3786 = vmatmul.mubr.bf16.gmra.mxu0 %v549
    %v3787 = vpop.f32.mrf.mxu0
    %v3788 = vadd.f32 %v3745, %v3787
    %v3789 = vpop.f32.mrf.mxu0
    %v3790 = vadd.f32 %v3747, %v3789
    %v3791 = vpop.f32.mrf.mxu0
    %v3792 = vadd.f32 %v3749, %v3791
    %v3793 = vpop.f32.mrf.mxu0
    %v3794 = vadd.f32 %v3751, %v3793
    %3795 = vdwg.mxu0
    %3796 = vmatprep.subr.bf16.mxu0 %v3084
    %3797 = vmatpush1.bf16.msra.mxu0 %v3083
    %3798 = vmatprep.subr.bf16.mxu0 %v3076
    %3799 = vmatpush1.bf16.msra.mxu0 %v3075
    %3800 = vmatprep.subr.bf16.mxu0 %v3068
    %3801 = vmatpush1.bf16.msra.mxu0 %v3067
    %3802 = vmatprep.subr.bf16.mxu0 %v3060
    %3803 = vmatpush1.bf16.msra.mxu0 %v3059
    %3804 = vmatprep.subr.bf16.mxu0 %v3052
    %3805 = vmatpush1.bf16.msra.mxu0 %v3051
    %3806 = vmatprep.subr.bf16.mxu0 %v3044
    %3807 = vmatpush1.bf16.msra.mxu0 %v3043
    %3808 = vmatprep.subr.bf16.mxu0 %v3036
    %3809 = vmatpush1.bf16.msra.mxu0 %v3035
    %3810 = vmatprep.subr.bf16.mxu0 %v3028
    %3811 = vmatpush1.bf16.msra.mxu0 %v3027
    %3812 = vmatprep.subr.bf16.mxu0 %v3148
    %3813 = vmatpush2.bf16.msra.mxu0 %v3147
    %3814 = vmatprep.subr.bf16.mxu0 %v3140
    %3815 = vmatpush2.bf16.msra.mxu0 %v3139
    %3816 = vmatprep.subr.bf16.mxu0 %v3132
    %3817 = vmatpush2.bf16.msra.mxu0 %v3131
    %3818 = vmatprep.subr.bf16.mxu0 %v3124
    %3819 = vmatpush2.bf16.msra.mxu0 %v3123
    %3820 = vmatprep.subr.bf16.mxu0 %v3116
    %3821 = vmatpush2.bf16.msra.mxu0 %v3115
    %3822 = vmatprep.subr.bf16.mxu0 %v3108
    %3823 = vmatpush2.bf16.msra.mxu0 %v3107
    %3824 = vmatprep.subr.bf16.mxu0 %v3100
    %3825 = vmatpush2.bf16.msra.mxu0 %v3099
    %3826 = vmatprep.subr.bf16.mxu0 %v3092
    %3827 = vmatpush2.bf16.msra.mxu0 %v3091
    %3828 = vmatprep.mubr.bf16.mxu0 %v552
    %3829 = vmatmul.mubr.bf16.gmra.mxu0 %v551
    %v3830 = vpop.f32.mrf.mxu0
    %v3831 = vadd.f32 %v3788, %v3830
    %v3832 = vpop.f32.mrf.mxu0
    %v3833 = vadd.f32 %v3790, %v3832
    %v3834 = vpop.f32.mrf.mxu0
    %v3835 = vadd.f32 %v3792, %v3834
    %v3836 = vpop.f32.mrf.mxu0
    %v3837 = vadd.f32 %v3794, %v3836
    %3838 = vdwg.mxu0
    %3839 = vmatprep.subr.bf16.mxu0 %v2702
    %3840 = vmatpush1.bf16.msra.mxu0 %v2701
    %3841 = vmatprep.subr.bf16.mxu0 %v2694
    %3842 = vmatpush1.bf16.msra.mxu0 %v2693
    %3843 = vmatprep.subr.bf16.mxu0 %v2686
    %3844 = vmatpush1.bf16.msra.mxu0 %v2685
    %3845 = vmatprep.subr.bf16.mxu0 %v2678
    %3846 = vmatpush1.bf16.msra.mxu0 %v2677
    %3847 = vmatprep.subr.bf16.mxu0 %v2670
    %3848 = vmatpush1.bf16.msra.mxu0 %v2669
    %3849 = vmatprep.subr.bf16.mxu0 %v2662
    %3850 = vmatpush1.bf16.msra.mxu0 %v2661
    %3851 = vmatprep.subr.bf16.mxu0 %v2654
    %3852 = vmatpush1.bf16.msra.mxu0 %v2653
    %3853 = vmatprep.subr.bf16.mxu0 %v2646
    %3854 = vmatpush1.bf16.msra.mxu0 %v2645
    %3855 = vmatprep.subr.bf16.mxu0 %v2766
    %3856 = vmatpush2.bf16.msra.mxu0 %v2765
    %3857 = vmatprep.subr.bf16.mxu0 %v2758
    %3858 = vmatpush2.bf16.msra.mxu0 %v2757
    %3859 = vmatprep.subr.bf16.mxu0 %v2750
    %3860 = vmatpush2.bf16.msra.mxu0 %v2749
    %3861 = vmatprep.subr.bf16.mxu0 %v2742
    %3862 = vmatpush2.bf16.msra.mxu0 %v2741
    %3863 = vmatprep.subr.bf16.mxu0 %v2734
    %3864 = vmatpush2.bf16.msra.mxu0 %v2733
    %3865 = vmatprep.subr.bf16.mxu0 %v2726
    %3866 = vmatpush2.bf16.msra.mxu0 %v2725
    %3867 = vmatprep.subr.bf16.mxu0 %v2718
    %3868 = vmatpush2.bf16.msra.mxu0 %v2717
    %3869 = vmatprep.subr.bf16.mxu0 %v2710
    %3870 = vmatpush2.bf16.msra.mxu0 %v2709
    %3871 = vmatprep.mubr.bf16.mxu0 %v546
    %3872 = vmatmul.mubr.bf16.gmra.mxu0 %v545
    %v3873 = vpop.f32.mrf.mxu0
    %v3874 = vadd.f32 %v1078, %v3873
    %v3875 = vpop.f32.mrf.mxu0
    %v3876 = vadd.f32 %v1082, %v3875
    %v3877 = vpop.f32.mrf.mxu0
    %v3878 = vadd.f32 %v1078, %v3877
    %v3879 = vpop.f32.mrf.mxu0
    %v3880 = vadd.f32 %v1082, %v3879
    %3881 = vdwg.mxu0
    %3882 = vmatprep.subr.bf16.mxu0 %v2830
    %3883 = vmatpush1.bf16.msra.mxu0 %v2829
    %3884 = vmatprep.subr.bf16.mxu0 %v2822
    %3885 = vmatpush1.bf16.msra.mxu0 %v2821
    %3886 = vmatprep.subr.bf16.mxu0 %v2814
    %3887 = vmatpush1.bf16.msra.mxu0 %v2813
    %3888 = vmatprep.subr.bf16.mxu0 %v2806
    %3889 = vmatpush1.bf16.msra.mxu0 %v2805
    %3890 = vmatprep.subr.bf16.mxu0 %v2798
    %3891 = vmatpush1.bf16.msra.mxu0 %v2797
    %3892 = vmatprep.subr.bf16.mxu0 %v2790
    %3893 = vmatpush1.bf16.msra.mxu0 %v2789
    %3894 = vmatprep.subr.bf16.mxu0 %v2782
    %3895 = vmatpush1.bf16.msra.mxu0 %v2781
    %3896 = vmatprep.subr.bf16.mxu0 %v2774
    %3897 = vmatpush1.bf16.msra.mxu0 %v2773
    %3898 = vmatprep.subr.bf16.mxu0 %v2894
    %3899 = vmatpush2.bf16.msra.mxu0 %v2893
    %3900 = vmatprep.subr.bf16.mxu0 %v2886
    %3901 = vmatpush2.bf16.msra.mxu0 %v2885
    %3902 = vmatprep.subr.bf16.mxu0 %v2878
    %3903 = vmatpush2.bf16.msra.mxu0 %v2877
    %3904 = vmatprep.subr.bf16.mxu0 %v2870
    %3905 = vmatpush2.bf16.msra.mxu0 %v2869
    %3906 = vmatprep.subr.bf16.mxu0 %v2862
    %3907 = vmatpush2.bf16.msra.mxu0 %v2861
    %3908 = vmatprep.subr.bf16.mxu0 %v2854
    %3909 = vmatpush2.bf16.msra.mxu0 %v2853
    %3910 = vmatprep.subr.bf16.mxu0 %v2846
    %3911 = vmatpush2.bf16.msra.mxu0 %v2845
    %3912 = vmatprep.subr.bf16.mxu0 %v2838
    %3913 = vmatpush2.bf16.msra.mxu0 %v2837
    %3914 = vmatprep.mubr.bf16.mxu0 %v548
    %3915 = vmatmul.mubr.bf16.gmra.mxu0 %v547
    %v3916 = vpop.f32.mrf.mxu0
    %v3917 = vadd.f32 %v3874, %v3916
    %v3918 = vpop.f32.mrf.mxu0
    %v3919 = vadd.f32 %v3876, %v3918
    %v3920 = vpop.f32.mrf.mxu0
    %v3921 = vadd.f32 %v3878, %v3920
    %v3922 = vpop.f32.mrf.mxu0
    %v3923 = vadd.f32 %v3880, %v3922
    %3924 = vdwg.mxu0
    %3925 = vmatprep.subr.bf16.mxu0 %v2958
    %3926 = vmatpush1.bf16.msra.mxu0 %v2957
    %3927 = vmatprep.subr.bf16.mxu0 %v2950
    %3928 = vmatpush1.bf16.msra.mxu0 %v2949
    %3929 = vmatprep.subr.bf16.mxu0 %v2942
    %3930 = vmatpush1.bf16.msra.mxu0 %v2941
    %3931 = vmatprep.subr.bf16.mxu0 %v2934
    %3932 = vmatpush1.bf16.msra.mxu0 %v2933
    %3933 = vmatprep.subr.bf16.mxu0 %v2926
    %3934 = vmatpush1.bf16.msra.mxu0 %v2925
    %3935 = vmatprep.subr.bf16.mxu0 %v2918
    %3936 = vmatpush1.bf16.msra.mxu0 %v2917
    %3937 = vmatprep.subr.bf16.mxu0 %v2910
    %3938 = vmatpush1.bf16.msra.mxu0 %v2909
    %3939 = vmatprep.subr.bf16.mxu0 %v2902
    %3940 = vmatpush1.bf16.msra.mxu0 %v2901
    %3941 = vmatprep.subr.bf16.mxu0 %v3022
    %3942 = vmatpush2.bf16.msra.mxu0 %v3021
    %3943 = vmatprep.subr.bf16.mxu0 %v3014
    %3944 = vmatpush2.bf16.msra.mxu0 %v3013
    %3945 = vmatprep.subr.bf16.mxu0 %v3006
    %3946 = vmatpush2.bf16.msra.mxu0 %v3005
    %3947 = vmatprep.subr.bf16.mxu0 %v2998
    %3948 = vmatpush2.bf16.msra.mxu0 %v2997
    %3949 = vmatprep.subr.bf16.mxu0 %v2990
    %3950 = vmatpush2.bf16.msra.mxu0 %v2989
    %3951 = vmatprep.subr.bf16.mxu0 %v2982
    %3952 = vmatpush2.bf16.msra.mxu0 %v2981
    %3953 = vmatprep.subr.bf16.mxu0 %v2974
    %3954 = vmatpush2.bf16.msra.mxu0 %v2973
    %3955 = vmatprep.subr.bf16.mxu0 %v2966
    %3956 = vmatpush2.bf16.msra.mxu0 %v2965
    %3957 = vmatprep.mubr.bf16.mxu0 %v550
    %3958 = vmatmul.mubr.bf16.gmra.mxu0 %v549
    %v3959 = vpop.f32.mrf.mxu0
    %v3960 = vadd.f32 %v3917, %v3959
    %v3961 = vpop.f32.mrf.mxu0
    %v3962 = vadd.f32 %v3919, %v3961
    %v3963 = vpop.f32.mrf.mxu0
    %v3964 = vadd.f32 %v3921, %v3963
    %v3965 = vpop.f32.mrf.mxu0
    %v3966 = vadd.f32 %v3923, %v3965
    %3967 = vdwg.mxu0
    %3968 = vmatprep.subr.bf16.mxu0 %v3086
    %3969 = vmatpush1.bf16.msra.mxu0 %v3085
    %3970 = vmatprep.subr.bf16.mxu0 %v3078
    %3971 = vmatpush1.bf16.msra.mxu0 %v3077
    %3972 = vmatprep.subr.bf16.mxu0 %v3070
    %3973 = vmatpush1.bf16.msra.mxu0 %v3069
    %3974 = vmatprep.subr.bf16.mxu0 %v3062
    %3975 = vmatpush1.bf16.msra.mxu0 %v3061
    %3976 = vmatprep.subr.bf16.mxu0 %v3054
    %3977 = vmatpush1.bf16.msra.mxu0 %v3053
    %3978 = vmatprep.subr.bf16.mxu0 %v3046
    %3979 = vmatpush1.bf16.msra.mxu0 %v3045
    %3980 = vmatprep.subr.bf16.mxu0 %v3038
    %3981 = vmatpush1.bf16.msra.mxu0 %v3037
    %3982 = vmatprep.subr.bf16.mxu0 %v3030
    %3983 = vmatpush1.bf16.msra.mxu0 %v3029
    %3984 = vmatprep.subr.bf16.mxu0 %v3150
    %3985 = vmatpush2.bf16.msra.mxu0 %v3149
    %3986 = vmatprep.subr.bf16.mxu0 %v3142
    %3987 = vmatpush2.bf16.msra.mxu0 %v3141
    %3988 = vmatprep.subr.bf16.mxu0 %v3134
    %3989 = vmatpush2.bf16.msra.mxu0 %v3133
    %3990 = vmatprep.subr.bf16.mxu0 %v3126
    %3991 = vmatpush2.bf16.msra.mxu0 %v3125
    %3992 = vmatprep.subr.bf16.mxu0 %v3118
    %3993 = vmatpush2.bf16.msra.mxu0 %v3117
    %3994 = vmatprep.subr.bf16.mxu0 %v3110
    %3995 = vmatpush2.bf16.msra.mxu0 %v3109
    %3996 = vmatprep.subr.bf16.mxu0 %v3102
    %3997 = vmatpush2.bf16.msra.mxu0 %v3101
    %3998 = vmatprep.subr.bf16.mxu0 %v3094
    %3999 = vmatpush2.bf16.msra.mxu0 %v3093
    %4000 = vmatprep.mubr.bf16.mxu0 %v552
    %4001 = vmatmul.mubr.bf16.gmra.mxu0 %v551
    %v4002 = vpop.f32.mrf.mxu0
    %v4003 = vadd.f32 %v3960, %v4002
    %v4004 = vpop.f32.mrf.mxu0
    %v4005 = vadd.f32 %v3962, %v4004
    %v4006 = vpop.f32.mrf.mxu0
    %v4007 = vadd.f32 %v3964, %v4006
    %v4008 = vpop.f32.mrf.mxu0
    %v4009 = vadd.f32 %v3966, %v4008
    %4010 = vdwg.mxu0
    %4011 = vmatprep.subr.bf16.mxu0 %v2704
    %4012 = vmatpush1.bf16.msra.mxu0 %v2703
    %4013 = vmatprep.subr.bf16.mxu0 %v2696
    %4014 = vmatpush1.bf16.msra.mxu0 %v2695
    %4015 = vmatprep.subr.bf16.mxu0 %v2688
    %4016 = vmatpush1.bf16.msra.mxu0 %v2687
    %4017 = vmatprep.subr.bf16.mxu0 %v2680
    %4018 = vmatpush1.bf16.msra.mxu0 %v2679
    %4019 = vmatprep.subr.bf16.mxu0 %v2672
    %4020 = vmatpush1.bf16.msra.mxu0 %v2671
    %4021 = vmatprep.subr.bf16.mxu0 %v2664
    %4022 = vmatpush1.bf16.msra.mxu0 %v2663
    %4023 = vmatprep.subr.bf16.mxu0 %v2656
    %4024 = vmatpush1.bf16.msra.mxu0 %v2655
    %4025 = vmatprep.subr.bf16.mxu0 %v2648
    %4026 = vmatpush1.bf16.msra.mxu0 %v2647
    %4027 = vmatprep.subr.bf16.mxu0 %v2768
    %4028 = vmatpush2.bf16.msra.mxu0 %v2767
    %4029 = vmatprep.subr.bf16.mxu0 %v2760
    %4030 = vmatpush2.bf16.msra.mxu0 %v2759
    %4031 = vmatprep.subr.bf16.mxu0 %v2752
    %4032 = vmatpush2.bf16.msra.mxu0 %v2751
    %4033 = vmatprep.subr.bf16.mxu0 %v2744
    %4034 = vmatpush2.bf16.msra.mxu0 %v2743
    %4035 = vmatprep.subr.bf16.mxu0 %v2736
    %4036 = vmatpush2.bf16.msra.mxu0 %v2735
    %4037 = vmatprep.subr.bf16.mxu0 %v2728
    %4038 = vmatpush2.bf16.msra.mxu0 %v2727
    %4039 = vmatprep.subr.bf16.mxu0 %v2720
    %4040 = vmatpush2.bf16.msra.mxu0 %v2719
    %4041 = vmatprep.subr.bf16.mxu0 %v2712
    %4042 = vmatpush2.bf16.msra.mxu0 %v2711
    %4043 = vmatprep.mubr.bf16.mxu0 %v546
    %4044 = vmatmul.mubr.bf16.gmra.mxu0 %v545
    %v4045 = vpop.f32.mrf.mxu0
    %v4046 = vadd.f32 %v1086, %v4045
    %v4047 = vpop.f32.mrf.mxu0
    %v4048 = vadd.f32 %v1090, %v4047
    %v4049 = vpop.f32.mrf.mxu0
    %v4050 = vadd.f32 %v1086, %v4049
    %v4051 = vpop.f32.mrf.mxu0
    %v4052 = vadd.f32 %v1090, %v4051
    %4053 = vdwg.mxu0
    %4054 = vmatprep.subr.bf16.mxu0 %v2832
    %4055 = vmatpush1.bf16.msra.mxu0 %v2831
    %4056 = vmatprep.subr.bf16.mxu0 %v2824
    %4057 = vmatpush1.bf16.msra.mxu0 %v2823
    %4058 = vmatprep.subr.bf16.mxu0 %v2816
    %4059 = vmatpush1.bf16.msra.mxu0 %v2815
    %4060 = vmatprep.subr.bf16.mxu0 %v2808
    %4061 = vmatpush1.bf16.msra.mxu0 %v2807
    %4062 = vmatprep.subr.bf16.mxu0 %v2800
    %4063 = vmatpush1.bf16.msra.mxu0 %v2799
    %4064 = vmatprep.subr.bf16.mxu0 %v2792
    %4065 = vmatpush1.bf16.msra.mxu0 %v2791
    %4066 = vmatprep.subr.bf16.mxu0 %v2784
    %4067 = vmatpush1.bf16.msra.mxu0 %v2783
    %4068 = vmatprep.subr.bf16.mxu0 %v2776
    %4069 = vmatpush1.bf16.msra.mxu0 %v2775
    %4070 = vmatprep.subr.bf16.mxu0 %v2896
    %4071 = vmatpush2.bf16.msra.mxu0 %v2895
    %4072 = vmatprep.subr.bf16.mxu0 %v2888
    %4073 = vmatpush2.bf16.msra.mxu0 %v2887
    %4074 = vmatprep.subr.bf16.mxu0 %v2880
    %4075 = vmatpush2.bf16.msra.mxu0 %v2879
    %4076 = vmatprep.subr.bf16.mxu0 %v2872
    %4077 = vmatpush2.bf16.msra.mxu0 %v2871
    %4078 = vmatprep.subr.bf16.mxu0 %v2864
    %4079 = vmatpush2.bf16.msra.mxu0 %v2863
    %4080 = vmatprep.subr.bf16.mxu0 %v2856
    %4081 = vmatpush2.bf16.msra.mxu0 %v2855
    %4082 = vmatprep.subr.bf16.mxu0 %v2848
    %4083 = vmatpush2.bf16.msra.mxu0 %v2847
    %4084 = vmatprep.subr.bf16.mxu0 %v2840
    %4085 = vmatpush2.bf16.msra.mxu0 %v2839
    %4086 = vmatprep.mubr.bf16.mxu0 %v548
    %4087 = vmatmul.mubr.bf16.gmra.mxu0 %v547
    %v4088 = vpop.f32.mrf.mxu0
    %v4089 = vadd.f32 %v4046, %v4088
    %v4090 = vpop.f32.mrf.mxu0
    %v4091 = vadd.f32 %v4048, %v4090
    %v4092 = vpop.f32.mrf.mxu0
    %v4093 = vadd.f32 %v4050, %v4092
    %v4094 = vpop.f32.mrf.mxu0
    %v4095 = vadd.f32 %v4052, %v4094
    %4096 = vdwg.mxu0
    %4097 = vmatprep.subr.bf16.mxu0 %v2960
    %4098 = vmatpush1.bf16.msra.mxu0 %v2959
    %4099 = vmatprep.subr.bf16.mxu0 %v2952
    %4100 = vmatpush1.bf16.msra.mxu0 %v2951
    %4101 = vmatprep.subr.bf16.mxu0 %v2944
    %4102 = vmatpush1.bf16.msra.mxu0 %v2943
    %4103 = vmatprep.subr.bf16.mxu0 %v2936
    %4104 = vmatpush1.bf16.msra.mxu0 %v2935
    %4105 = vmatprep.subr.bf16.mxu0 %v2928
    %4106 = vmatpush1.bf16.msra.mxu0 %v2927
    %4107 = vmatprep.subr.bf16.mxu0 %v2920
    %4108 = vmatpush1.bf16.msra.mxu0 %v2919
    %4109 = vmatprep.subr.bf16.mxu0 %v2912
    %4110 = vmatpush1.bf16.msra.mxu0 %v2911
    %4111 = vmatprep.subr.bf16.mxu0 %v2904
    %4112 = vmatpush1.bf16.msra.mxu0 %v2903
    %4113 = vmatprep.subr.bf16.mxu0 %v3024
    %4114 = vmatpush2.bf16.msra.mxu0 %v3023
    %4115 = vmatprep.subr.bf16.mxu0 %v3016
    %4116 = vmatpush2.bf16.msra.mxu0 %v3015
    %4117 = vmatprep.subr.bf16.mxu0 %v3008
    %4118 = vmatpush2.bf16.msra.mxu0 %v3007
    %4119 = vmatprep.subr.bf16.mxu0 %v3000
    %4120 = vmatpush2.bf16.msra.mxu0 %v2999
    %4121 = vmatprep.subr.bf16.mxu0 %v2992
    %4122 = vmatpush2.bf16.msra.mxu0 %v2991
    %4123 = vmatprep.subr.bf16.mxu0 %v2984
    %4124 = vmatpush2.bf16.msra.mxu0 %v2983
    %4125 = vmatprep.subr.bf16.mxu0 %v2976
    %4126 = vmatpush2.bf16.msra.mxu0 %v2975
    %4127 = vmatprep.subr.bf16.mxu0 %v2968
    %4128 = vmatpush2.bf16.msra.mxu0 %v2967
    %4129 = vmatprep.mubr.bf16.mxu0 %v550
    %4130 = vmatmul.mubr.bf16.gmra.mxu0 %v549
    %v4131 = vpop.f32.mrf.mxu0
    %v4132 = vadd.f32 %v4089, %v4131
    %v4133 = vpop.f32.mrf.mxu0
    %v4134 = vadd.f32 %v4091, %v4133
    %v4135 = vpop.f32.mrf.mxu0
    %v4136 = vadd.f32 %v4093, %v4135
    %v4137 = vpop.f32.mrf.mxu0
    %v4138 = vadd.f32 %v4095, %v4137
    %4139 = vdwg.mxu0
    %4140 = vmatprep.subr.bf16.mxu0 %v3088
    %4141 = vmatpush1.bf16.msra.mxu0 %v3087
    %4142 = vmatprep.subr.bf16.mxu0 %v3080
    %4143 = vmatpush1.bf16.msra.mxu0 %v3079
    %4144 = vmatprep.subr.bf16.mxu0 %v3072
    %4145 = vmatpush1.bf16.msra.mxu0 %v3071
    %4146 = vmatprep.subr.bf16.mxu0 %v3064
    %4147 = vmatpush1.bf16.msra.mxu0 %v3063
    %4148 = vmatprep.subr.bf16.mxu0 %v3056
    %4149 = vmatpush1.bf16.msra.mxu0 %v3055
    %4150 = vmatprep.subr.bf16.mxu0 %v3048
    %4151 = vmatpush1.bf16.msra.mxu0 %v3047
    %4152 = vmatprep.subr.bf16.mxu0 %v3040
    %4153 = vmatpush1.bf16.msra.mxu0 %v3039
    %4154 = vmatprep.subr.bf16.mxu0 %v3032
    %4155 = vmatpush1.bf16.msra.mxu0 %v3031
    %4156 = vmatprep.subr.bf16.mxu0 %v3152
    %4157 = vmatpush2.bf16.msra.mxu0 %v3151
    %4158 = vmatprep.subr.bf16.mxu0 %v3144
    %4159 = vmatpush2.bf16.msra.mxu0 %v3143
    %4160 = vmatprep.subr.bf16.mxu0 %v3136
    %4161 = vmatpush2.bf16.msra.mxu0 %v3135
    %4162 = vmatprep.subr.bf16.mxu0 %v3128
    %4163 = vmatpush2.bf16.msra.mxu0 %v3127
    %4164 = vmatprep.subr.bf16.mxu0 %v3120
    %4165 = vmatpush2.bf16.msra.mxu0 %v3119
    %4166 = vmatprep.subr.bf16.mxu0 %v3112
    %4167 = vmatpush2.bf16.msra.mxu0 %v3111
    %4168 = vmatprep.subr.bf16.mxu0 %v3104
    %4169 = vmatpush2.bf16.msra.mxu0 %v3103
    %4170 = vmatprep.subr.bf16.mxu0 %v3096
    %4171 = vmatpush2.bf16.msra.mxu0 %v3095
    %4172 = vmatprep.mubr.bf16.mxu0 %v552
    %4173 = vmatmul.mubr.bf16.gmra.mxu0 %v551
    %v4174 = vpop.f32.mrf.mxu0
    %v4175 = vadd.f32 %v4132, %v4174
    %v4176 = vpop.f32.mrf.mxu0
    %v4177 = vadd.f32 %v4134, %v4176
    %v4178 = vpop.f32.mrf.mxu0
    %v4179 = vadd.f32 %v4136, %v4178
    %v4180 = vpop.f32.mrf.mxu0
    %v4181 = vadd.f32 %v4138, %v4180
    %4182 = vdwg.mxu0
    %4183 = vmatprep.subr.bf16.mxu0 %v2706
    %4184 = vmatpush1.bf16.msra.mxu0 %v2705
    %4185 = vmatprep.subr.bf16.mxu0 %v2698
    %4186 = vmatpush1.bf16.msra.mxu0 %v2697
    %4187 = vmatprep.subr.bf16.mxu0 %v2690
    %4188 = vmatpush1.bf16.msra.mxu0 %v2689
    %4189 = vmatprep.subr.bf16.mxu0 %v2682
    %4190 = vmatpush1.bf16.msra.mxu0 %v2681
    %4191 = vmatprep.subr.bf16.mxu0 %v2674
    %4192 = vmatpush1.bf16.msra.mxu0 %v2673
    %4193 = vmatprep.subr.bf16.mxu0 %v2666
    %4194 = vmatpush1.bf16.msra.mxu0 %v2665
    %4195 = vmatprep.subr.bf16.mxu0 %v2658
    %4196 = vmatpush1.bf16.msra.mxu0 %v2657
    %4197 = vmatprep.subr.bf16.mxu0 %v2650
    %4198 = vmatpush1.bf16.msra.mxu0 %v2649
    %4199 = vmatprep.subr.bf16.mxu0 %v2770
    %4200 = vmatpush2.bf16.msra.mxu0 %v2769
    %4201 = vmatprep.subr.bf16.mxu0 %v2762
    %4202 = vmatpush2.bf16.msra.mxu0 %v2761
    %4203 = vmatprep.subr.bf16.mxu0 %v2754
    %4204 = vmatpush2.bf16.msra.mxu0 %v2753
    %4205 = vmatprep.subr.bf16.mxu0 %v2746
    %4206 = vmatpush2.bf16.msra.mxu0 %v2745
    %4207 = vmatprep.subr.bf16.mxu0 %v2738
    %4208 = vmatpush2.bf16.msra.mxu0 %v2737
    %4209 = vmatprep.subr.bf16.mxu0 %v2730
    %4210 = vmatpush2.bf16.msra.mxu0 %v2729
    %4211 = vmatprep.subr.bf16.mxu0 %v2722
    %4212 = vmatpush2.bf16.msra.mxu0 %v2721
    %4213 = vmatprep.subr.bf16.mxu0 %v2714
    %4214 = vmatpush2.bf16.msra.mxu0 %v2713
    %4215 = vmatprep.mubr.bf16.mxu0 %v546
    %4216 = vmatmul.mubr.bf16.gmra.mxu0 %v545
    %v4217 = vpop.f32.mrf.mxu0
    %v4218 = vadd.f32 %v1094, %v4217
    %v4219 = vpop.f32.mrf.mxu0
    %v4220 = vadd.f32 %v1098, %v4219
    %v4221 = vpop.f32.mrf.mxu0
    %v4222 = vadd.f32 %v1094, %v4221
    %v4223 = vpop.f32.mrf.mxu0
    %v4224 = vadd.f32 %v1098, %v4223
    %4225 = vdwg.mxu0
    %4226 = vmatprep.subr.bf16.mxu0 %v2834
    %4227 = vmatpush1.bf16.msra.mxu0 %v2833
    %4228 = vmatprep.subr.bf16.mxu0 %v2826
    %4229 = vmatpush1.bf16.msra.mxu0 %v2825
    %4230 = vmatprep.subr.bf16.mxu0 %v2818
    %4231 = vmatpush1.bf16.msra.mxu0 %v2817
    %4232 = vmatprep.subr.bf16.mxu0 %v2810
    %4233 = vmatpush1.bf16.msra.mxu0 %v2809
    %4234 = vmatprep.subr.bf16.mxu0 %v2802
    %4235 = vmatpush1.bf16.msra.mxu0 %v2801
    %4236 = vmatprep.subr.bf16.mxu0 %v2794
    %4237 = vmatpush1.bf16.msra.mxu0 %v2793
    %4238 = vmatprep.subr.bf16.mxu0 %v2786
    %4239 = vmatpush1.bf16.msra.mxu0 %v2785
    %4240 = vmatprep.subr.bf16.mxu0 %v2778
    %4241 = vmatpush1.bf16.msra.mxu0 %v2777
    %4242 = vmatprep.subr.bf16.mxu0 %v2898
    %4243 = vmatpush2.bf16.msra.mxu0 %v2897
    %4244 = vmatprep.subr.bf16.mxu0 %v2890
    %4245 = vmatpush2.bf16.msra.mxu0 %v2889
    %4246 = vmatprep.subr.bf16.mxu0 %v2882
    %4247 = vmatpush2.bf16.msra.mxu0 %v2881
    %4248 = vmatprep.subr.bf16.mxu0 %v2874
    %4249 = vmatpush2.bf16.msra.mxu0 %v2873
    %4250 = vmatprep.subr.bf16.mxu0 %v2866
    %4251 = vmatpush2.bf16.msra.mxu0 %v2865
    %4252 = vmatprep.subr.bf16.mxu0 %v2858
    %4253 = vmatpush2.bf16.msra.mxu0 %v2857
    %4254 = vmatprep.subr.bf16.mxu0 %v2850
    %4255 = vmatpush2.bf16.msra.mxu0 %v2849
    %4256 = vmatprep.subr.bf16.mxu0 %v2842
    %4257 = vmatpush2.bf16.msra.mxu0 %v2841
    %4258 = vmatprep.mubr.bf16.mxu0 %v548
    %4259 = vmatmul.mubr.bf16.gmra.mxu0 %v547
    %v4260 = vpop.f32.mrf.mxu0
    %v4261 = vadd.f32 %v4218, %v4260
    %v4262 = vpop.f32.mrf.mxu0
    %v4263 = vadd.f32 %v4220, %v4262
    %v4264 = vpop.f32.mrf.mxu0
    %v4265 = vadd.f32 %v4222, %v4264
    %v4266 = vpop.f32.mrf.mxu0
    %v4267 = vadd.f32 %v4224, %v4266
    %4268 = vdwg.mxu0
    %4269 = vmatprep.subr.bf16.mxu0 %v2962
    %4270 = vmatpush1.bf16.msra.mxu0 %v2961
    %4271 = vmatprep.subr.bf16.mxu0 %v2954
    %4272 = vmatpush1.bf16.msra.mxu0 %v2953
    %4273 = vmatprep.subr.bf16.mxu0 %v2946
    %4274 = vmatpush1.bf16.msra.mxu0 %v2945
    %4275 = vmatprep.subr.bf16.mxu0 %v2938
    %4276 = vmatpush1.bf16.msra.mxu0 %v2937
    %4277 = vmatprep.subr.bf16.mxu0 %v2930
    %4278 = vmatpush1.bf16.msra.mxu0 %v2929
    %4279 = vmatprep.subr.bf16.mxu0 %v2922
    %4280 = vmatpush1.bf16.msra.mxu0 %v2921
    %4281 = vmatprep.subr.bf16.mxu0 %v2914
    %4282 = vmatpush1.bf16.msra.mxu0 %v2913
    %4283 = vmatprep.subr.bf16.mxu0 %v2906
    %4284 = vmatpush1.bf16.msra.mxu0 %v2905
    %4285 = vmatprep.subr.bf16.mxu0 %v3026
    %4286 = vmatpush2.bf16.msra.mxu0 %v3025
    %4287 = vmatprep.subr.bf16.mxu0 %v3018
    %4288 = vmatpush2.bf16.msra.mxu0 %v3017
    %4289 = vmatprep.subr.bf16.mxu0 %v3010
    %4290 = vmatpush2.bf16.msra.mxu0 %v3009
    %4291 = vmatprep.subr.bf16.mxu0 %v3002
    %4292 = vmatpush2.bf16.msra.mxu0 %v3001
    %4293 = vmatprep.subr.bf16.mxu0 %v2994
    %4294 = vmatpush2.bf16.msra.mxu0 %v2993
    %4295 = vmatprep.subr.bf16.mxu0 %v2986
    %4296 = vmatpush2.bf16.msra.mxu0 %v2985
    %4297 = vmatprep.subr.bf16.mxu0 %v2978
    %4298 = vmatpush2.bf16.msra.mxu0 %v2977
    %4299 = vmatprep.subr.bf16.mxu0 %v2970
    %4300 = vmatpush2.bf16.msra.mxu0 %v2969
    %4301 = vmatprep.mubr.bf16.mxu0 %v550
    %4302 = vmatmul.mubr.bf16.gmra.mxu0 %v549
    %v4303 = vpop.f32.mrf.mxu0
    %v4304 = vadd.f32 %v4261, %v4303
    %v4305 = vpop.f32.mrf.mxu0
    %v4306 = vadd.f32 %v4263, %v4305
    %v4307 = vpop.f32.mrf.mxu0
    %v4308 = vadd.f32 %v4265, %v4307
    %v4309 = vpop.f32.mrf.mxu0
    %v4310 = vadd.f32 %v4267, %v4309
    %4311 = vdwg.mxu0
    %4312 = vmatprep.subr.bf16.mxu0 %v3090
    %4313 = vmatpush1.bf16.msra.mxu0 %v3089
    %4314 = vmatprep.subr.bf16.mxu0 %v3082
    %4315 = vmatpush1.bf16.msra.mxu0 %v3081
    %4316 = vmatprep.subr.bf16.mxu0 %v3074
    %4317 = vmatpush1.bf16.msra.mxu0 %v3073
    %4318 = vmatprep.subr.bf16.mxu0 %v3066
    %4319 = vmatpush1.bf16.msra.mxu0 %v3065
    %4320 = vmatprep.subr.bf16.mxu0 %v3058
    %4321 = vmatpush1.bf16.msra.mxu0 %v3057
    %4322 = vmatprep.subr.bf16.mxu0 %v3050
    %4323 = vmatpush1.bf16.msra.mxu0 %v3049
    %4324 = vmatprep.subr.bf16.mxu0 %v3042
    %4325 = vmatpush1.bf16.msra.mxu0 %v3041
    %4326 = vmatprep.subr.bf16.mxu0 %v3034
    %4327 = vmatpush1.bf16.msra.mxu0 %v3033
    %4328 = vmatprep.subr.bf16.mxu0 %v3154
    %4329 = vmatpush2.bf16.msra.mxu0 %v3153
    %4330 = vmatprep.subr.bf16.mxu0 %v3146
    %4331 = vmatpush2.bf16.msra.mxu0 %v3145
    %4332 = vmatprep.subr.bf16.mxu0 %v3138
    %4333 = vmatpush2.bf16.msra.mxu0 %v3137
    %4334 = vmatprep.subr.bf16.mxu0 %v3130
    %4335 = vmatpush2.bf16.msra.mxu0 %v3129
    %4336 = vmatprep.subr.bf16.mxu0 %v3122
    %4337 = vmatpush2.bf16.msra.mxu0 %v3121
    %4338 = vmatprep.subr.bf16.mxu0 %v3114
    %4339 = vmatpush2.bf16.msra.mxu0 %v3113
    %4340 = vmatprep.subr.bf16.mxu0 %v3106
    %4341 = vmatpush2.bf16.msra.mxu0 %v3105
    %4342 = vmatprep.subr.bf16.mxu0 %v3098
    %4343 = vmatpush2.bf16.msra.mxu0 %v3097
    %4344 = vmatprep.mubr.bf16.mxu0 %v552
    %4345 = vmatmul.mubr.bf16.gmra.mxu0 %v551
    %v4346 = vpop.f32.mrf.mxu0
    %v4347 = vadd.f32 %v4304, %v4346
    %v4348 = vpop.f32.mrf.mxu0
    %v4349 = vadd.f32 %v4306, %v4348
    %v4350 = vpop.f32.mrf.mxu0
    %v4351 = vadd.f32 %v4308, %v4350
    %v4352 = vpop.f32.mrf.mxu0
    %v4353 = vadd.f32 %v4310, %v4352
    %4354 = vdwg.mxu0
    %v4355 = vmax.f32 %v3831, 0.0
    %v4356 = vmax.f32 %v3833, 0.0
    %v4357 = vmax.f32 %v4003, 0.0
    %v4358 = vmax.f32 %v4005, 0.0
    %v4359 = vmax.f32 %v4175, 0.0
    %v4360 = vmax.f32 %v4177, 0.0
    %v4361 = vmax.f32 %v4347, 0.0
    %v4362 = vmax.f32 %v4349, 0.0
    %v4363 = vmax.f32 %v3835, 0.0
    %v4364 = vmax.f32 %v3837, 0.0
    %v4365 = vmax.f32 %v4007, 0.0
    %v4366 = vmax.f32 %v4009, 0.0
    %v4367 = vmax.f32 %v4179, 0.0
    %v4368 = vmax.f32 %v4181, 0.0
    %v4369 = vmax.f32 %v4351, 0.0
    %v4370 = vmax.f32 %v4353, 0.0
    %v4371 = vpack.c.bf16 %v4363, %v4355
    %v4372 = vpack.c.bf16 %v4364, %v4356
    %v4373 = vpack.c.bf16 %v4365, %v4357
    %v4374 = vpack.c.bf16 %v4366, %v4358
    %v4375 = vpack.c.bf16 %v4367, %v4359
    %v4376 = vpack.c.bf16 %v4368, %v4360
    %v4377 = vpack.c.bf16 %v4369, %v4361
    %v4378 = vpack.c.bf16 %v4370, %v4362
    %v4379 = vld [vmem:[#allocation10] sm:$0xf]
    %v4380 = vld [vmem:[#allocation10 + $0x4] sm:$0xf]
    %v4381 = vld [vmem:[#allocation10 + $0x8] sm:$0xf]
    %v4382 = vld [vmem:[#allocation10 + $0xc] sm:$0xf]
    %v4383 = vld [vmem:[#allocation10 + $0x10] sm:$0xf]
    %v4384 = vld [vmem:[#allocation10 + $0x14] sm:$0xf]
    %v4385 = vld [vmem:[#allocation10 + $0x18] sm:$0xf]
    %v4386 = vld [vmem:[#allocation10 + $0x1c] sm:$0xf]
    %v4387 = vld [vmem:[#allocation10 + $0x20] sm:$0xf]
    %v4388 = vld [vmem:[#allocation10 + $0x24] sm:$0xf]
    %v4389 = vld [vmem:[#allocation10 + $0x28] sm:$0xf]
    %v4390 = vld [vmem:[#allocation10 + $0x2c] sm:$0xf]
    %v4391 = vld [vmem:[#allocation10 + $0x30] sm:$0xf]
    %v4392 = vld [vmem:[#allocation10 + $0x34] sm:$0xf]
    %v4393 = vld [vmem:[#allocation10 + $0x38] sm:$0xf]
    %v4394 = vld [vmem:[#allocation10 + $0x3c] sm:$0xf]
    %v4395 = vld [vmem:[#allocation10 + $0x40] sm:$0xf]
    %v4396 = vld [vmem:[#allocation10 + $0x44] sm:$0xf]
    %v4397 = vld [vmem:[#allocation10 + $0x48] sm:$0xf]
    %v4398 = vld [vmem:[#allocation10 + $0x4c] sm:$0xf]
    %v4399 = vld [vmem:[#allocation10 + $0x50] sm:$0xf]
    %v4400 = vld [vmem:[#allocation10 + $0x54] sm:$0xf]
    %v4401 = vld [vmem:[#allocation10 + $0x58] sm:$0xf]
    %v4402 = vld [vmem:[#allocation10 + $0x5c] sm:$0xf]
    %v4403 = vld [vmem:[#allocation10 + $0x60] sm:$0xf]
    %v4404 = vld [vmem:[#allocation10 + $0x64] sm:$0xf]
    %v4405 = vld [vmem:[#allocation10 + $0x68] sm:$0xf]
    %v4406 = vld [vmem:[#allocation10 + $0x6c] sm:$0xf]
    %v4407 = vld [vmem:[#allocation10 + $0x70] sm:$0xf]
    %v4408 = vld [vmem:[#allocation10 + $0x74] sm:$0xf]
    %v4409 = vld [vmem:[#allocation10 + $0x78] sm:$0xf]
    %v4410 = vld [vmem:[#allocation10 + $0x7c] sm:$0xf]
    %v4411 = vld [vmem:[#allocation10 + $0x80] sm:$0xf]
    %v4412 = vld [vmem:[#allocation10 + $0x84] sm:$0xf]
    %v4413 = vld [vmem:[#allocation10 + $0x88] sm:$0xf]
    %v4414 = vld [vmem:[#allocation10 + $0x8c] sm:$0xf]
    %v4415 = vld [vmem:[#allocation10 + $0x90] sm:$0xf]
    %v4416 = vld [vmem:[#allocation10 + $0x94] sm:$0xf]
    %v4417 = vld [vmem:[#allocation10 + $0x98] sm:$0xf]
    %v4418 = vld [vmem:[#allocation10 + $0x9c] sm:$0xf]
    %v4419 = vld [vmem:[#allocation10 + $0xa0] sm:$0xf]
    %v4420 = vld [vmem:[#allocation10 + $0xa4] sm:$0xf]
    %v4421 = vld [vmem:[#allocation10 + $0xa8] sm:$0xf]
    %v4422 = vld [vmem:[#allocation10 + $0xac] sm:$0xf]
    %v4423 = vld [vmem:[#allocation10 + $0xb0] sm:$0xf]
    %v4424 = vld [vmem:[#allocation10 + $0xb4] sm:$0xf]
    %v4425 = vld [vmem:[#allocation10 + $0xb8] sm:$0xf]
    %v4426 = vld [vmem:[#allocation10 + $0xbc] sm:$0xf]
    %v4427 = vld [vmem:[#allocation10 + $0xc0] sm:$0xf]
    %v4428 = vld [vmem:[#allocation10 + $0xc4] sm:$0xf]
    %v4429 = vld [vmem:[#allocation10 + $0xc8] sm:$0xf]
    %v4430 = vld [vmem:[#allocation10 + $0xcc] sm:$0xf]
    %v4431 = vld [vmem:[#allocation10 + $0xd0] sm:$0xf]
    %v4432 = vld [vmem:[#allocation10 + $0xd4] sm:$0xf]
    %v4433 = vld [vmem:[#allocation10 + $0xd8] sm:$0xf]
    %v4434 = vld [vmem:[#allocation10 + $0xdc] sm:$0xf]
    %v4435 = vld [vmem:[#allocation10 + $0xe0] sm:$0xf]
    %v4436 = vld [vmem:[#allocation10 + $0xe4] sm:$0xf]
    %v4437 = vld [vmem:[#allocation10 + $0xe8] sm:$0xf]
    %v4438 = vld [vmem:[#allocation10 + $0xec] sm:$0xf]
    %v4439 = vld [vmem:[#allocation10 + $0xf0] sm:$0xf]
    %v4440 = vld [vmem:[#allocation10 + $0xf4] sm:$0xf]
    %v4441 = vld [vmem:[#allocation10 + $0xf8] sm:$0xf]
    %v4442 = vld [vmem:[#allocation10 + $0xfc] sm:$0xf]
    %v4443 = vld [vmem:[#allocation10 + $0x100] sm:$0xf]
    %v4444 = vld [vmem:[#allocation10 + $0x104] sm:$0xf]
    %v4445 = vld [vmem:[#allocation10 + $0x108] sm:$0xf]
    %v4446 = vld [vmem:[#allocation10 + $0x10c] sm:$0xf]
    %v4447 = vld [vmem:[#allocation10 + $0x110] sm:$0xf]
    %v4448 = vld [vmem:[#allocation10 + $0x114] sm:$0xf]
    %v4449 = vld [vmem:[#allocation10 + $0x118] sm:$0xf]
    %v4450 = vld [vmem:[#allocation10 + $0x11c] sm:$0xf]
    %v4451 = vld [vmem:[#allocation10 + $0x120] sm:$0xf]
    %v4452 = vld [vmem:[#allocation10 + $0x124] sm:$0xf]
    %v4453 = vld [vmem:[#allocation10 + $0x128] sm:$0xf]
    %v4454 = vld [vmem:[#allocation10 + $0x12c] sm:$0xf]
    %v4455 = vld [vmem:[#allocation10 + $0x130] sm:$0xf]
    %v4456 = vld [vmem:[#allocation10 + $0x134] sm:$0xf]
    %v4457 = vld [vmem:[#allocation10 + $0x138] sm:$0xf]
    %v4458 = vld [vmem:[#allocation10 + $0x13c] sm:$0xf]
    %v4459 = vld [vmem:[#allocation10 + $0x140] sm:$0xf]
    %v4460 = vld [vmem:[#allocation10 + $0x144] sm:$0xf]
    %v4461 = vld [vmem:[#allocation10 + $0x148] sm:$0xf]
    %v4462 = vld [vmem:[#allocation10 + $0x14c] sm:$0xf]
    %v4463 = vld [vmem:[#allocation10 + $0x150] sm:$0xf]
    %v4464 = vld [vmem:[#allocation10 + $0x154] sm:$0xf]
    %v4465 = vld [vmem:[#allocation10 + $0x158] sm:$0xf]
    %v4466 = vld [vmem:[#allocation10 + $0x15c] sm:$0xf]
    %v4467 = vld [vmem:[#allocation10 + $0x160] sm:$0xf]
    %v4468 = vld [vmem:[#allocation10 + $0x164] sm:$0xf]
    %v4469 = vld [vmem:[#allocation10 + $0x168] sm:$0xf]
    %v4470 = vld [vmem:[#allocation10 + $0x16c] sm:$0xf]
    %v4471 = vld [vmem:[#allocation10 + $0x170] sm:$0xf]
    %v4472 = vld [vmem:[#allocation10 + $0x174] sm:$0xf]
    %v4473 = vld [vmem:[#allocation10 + $0x178] sm:$0xf]
    %v4474 = vld [vmem:[#allocation10 + $0x17c] sm:$0xf]
    %v4475 = vld [vmem:[#allocation10 + $0x180] sm:$0xf]
    %v4476 = vld [vmem:[#allocation10 + $0x184] sm:$0xf]
    %v4477 = vld [vmem:[#allocation10 + $0x188] sm:$0xf]
    %v4478 = vld [vmem:[#allocation10 + $0x18c] sm:$0xf]
    %v4479 = vld [vmem:[#allocation10 + $0x190] sm:$0xf]
    %v4480 = vld [vmem:[#allocation10 + $0x194] sm:$0xf]
    %v4481 = vld [vmem:[#allocation10 + $0x198] sm:$0xf]
    %v4482 = vld [vmem:[#allocation10 + $0x19c] sm:$0xf]
    %v4483 = vld [vmem:[#allocation10 + $0x1a0] sm:$0xf]
    %v4484 = vld [vmem:[#allocation10 + $0x1a4] sm:$0xf]
    %v4485 = vld [vmem:[#allocation10 + $0x1a8] sm:$0xf]
    %v4486 = vld [vmem:[#allocation10 + $0x1ac] sm:$0xf]
    %v4487 = vld [vmem:[#allocation10 + $0x1b0] sm:$0xf]
    %v4488 = vld [vmem:[#allocation10 + $0x1b4] sm:$0xf]
    %v4489 = vld [vmem:[#allocation10 + $0x1b8] sm:$0xf]
    %v4490 = vld [vmem:[#allocation10 + $0x1bc] sm:$0xf]
    %v4491 = vld [vmem:[#allocation10 + $0x1c0] sm:$0xf]
    %v4492 = vld [vmem:[#allocation10 + $0x1c4] sm:$0xf]
    %v4493 = vld [vmem:[#allocation10 + $0x1c8] sm:$0xf]
    %v4494 = vld [vmem:[#allocation10 + $0x1cc] sm:$0xf]
    %v4495 = vld [vmem:[#allocation10 + $0x1d0] sm:$0xf]
    %v4496 = vld [vmem:[#allocation10 + $0x1d4] sm:$0xf]
    %v4497 = vld [vmem:[#allocation10 + $0x1d8] sm:$0xf]
    %v4498 = vld [vmem:[#allocation10 + $0x1dc] sm:$0xf]
    %v4499 = vld [vmem:[#allocation10 + $0x1e0] sm:$0xf]
    %v4500 = vld [vmem:[#allocation10 + $0x1e4] sm:$0xf]
    %v4501 = vld [vmem:[#allocation10 + $0x1e8] sm:$0xf]
    %v4502 = vld [vmem:[#allocation10 + $0x1ec] sm:$0xf]
    %v4503 = vld [vmem:[#allocation10 + $0x1f0] sm:$0xf]
    %v4504 = vld [vmem:[#allocation10 + $0x1f4] sm:$0xf]
    %v4505 = vld [vmem:[#allocation10 + $0x1f8] sm:$0xf]
    %v4506 = vld [vmem:[#allocation10 + $0x1fc] sm:$0xf]
    %v4507 = vld [vmem:[#allocation12] sm:$0x1]
    %v4509 = vlaneseq
    %v4510 = vshrl.u32 %v4509, 7
    %v4511 = vsub.s32 0, %v4510
    %v4512 = vrot.slane %v4507, %v4511
    %v4642 = vunpack.c.l.b16 %v4379
    %v4643 = vunpack.c.l.b16 %v4380
    %v4644 = vunpack.c.l.b16 %v4381
    %v4645 = vunpack.c.l.b16 %v4382
    %v4646 = vunpack.c.l.b16 %v4383
    %v4647 = vunpack.c.l.b16 %v4384
    %v4648 = vunpack.c.l.b16 %v4385
    %v4649 = vunpack.c.l.b16 %v4386
    %v4650 = vunpack.c.l.b16 %v4387
    %v4651 = vunpack.c.l.b16 %v4388
    %v4652 = vunpack.c.l.b16 %v4389
    %v4653 = vunpack.c.l.b16 %v4390
    %v4654 = vunpack.c.l.b16 %v4391
    %v4655 = vunpack.c.l.b16 %v4392
    %v4656 = vunpack.c.l.b16 %v4393
    %v4657 = vunpack.c.l.b16 %v4394
    %v4658 = vunpack.c.l.b16 %v4395
    %v4659 = vunpack.c.l.b16 %v4396
    %v4660 = vunpack.c.l.b16 %v4397
    %v4661 = vunpack.c.l.b16 %v4398
    %v4662 = vunpack.c.l.b16 %v4399
    %v4663 = vunpack.c.l.b16 %v4400
    %v4664 = vunpack.c.l.b16 %v4401
    %v4665 = vunpack.c.l.b16 %v4402
    %v4666 = vunpack.c.l.b16 %v4403
    %v4667 = vunpack.c.l.b16 %v4404
    %v4668 = vunpack.c.l.b16 %v4405
    %v4669 = vunpack.c.l.b16 %v4406
    %v4670 = vunpack.c.l.b16 %v4407
    %v4671 = vunpack.c.l.b16 %v4408
    %v4672 = vunpack.c.l.b16 %v4409
    %v4673 = vunpack.c.l.b16 %v4410
    %v4674 = vunpack.c.l.b16 %v4411
    %v4675 = vunpack.c.l.b16 %v4412
    %v4676 = vunpack.c.l.b16 %v4413
    %v4677 = vunpack.c.l.b16 %v4414
    %v4678 = vunpack.c.l.b16 %v4415
    %v4679 = vunpack.c.l.b16 %v4416
    %v4680 = vunpack.c.l.b16 %v4417
    %v4681 = vunpack.c.l.b16 %v4418
    %v4682 = vunpack.c.l.b16 %v4419
    %v4683 = vunpack.c.l.b16 %v4420
    %v4684 = vunpack.c.l.b16 %v4421
    %v4685 = vunpack.c.l.b16 %v4422
    %v4686 = vunpack.c.l.b16 %v4423
    %v4687 = vunpack.c.l.b16 %v4424
    %v4688 = vunpack.c.l.b16 %v4425
    %v4689 = vunpack.c.l.b16 %v4426
    %v4690 = vunpack.c.l.b16 %v4427
    %v4691 = vunpack.c.l.b16 %v4428
    %v4692 = vunpack.c.l.b16 %v4429
    %v4693 = vunpack.c.l.b16 %v4430
    %v4694 = vunpack.c.l.b16 %v4431
    %v4695 = vunpack.c.l.b16 %v4432
    %v4696 = vunpack.c.l.b16 %v4433
    %v4697 = vunpack.c.l.b16 %v4434
    %v4698 = vunpack.c.l.b16 %v4435
    %v4699 = vunpack.c.l.b16 %v4436
    %v4700 = vunpack.c.l.b16 %v4437
    %v4701 = vunpack.c.l.b16 %v4438
    %v4702 = vunpack.c.l.b16 %v4439
    %v4703 = vunpack.c.l.b16 %v4440
    %v4704 = vunpack.c.l.b16 %v4441
    %v4705 = vunpack.c.l.b16 %v4442
    %v4706 = vunpack.c.l.b16 %v4443
    %v4707 = vunpack.c.l.b16 %v4444
    %v4708 = vunpack.c.l.b16 %v4445
    %v4709 = vunpack.c.l.b16 %v4446
    %v4710 = vunpack.c.l.b16 %v4447
    %v4711 = vunpack.c.l.b16 %v4448
    %v4712 = vunpack.c.l.b16 %v4449
    %v4713 = vunpack.c.l.b16 %v4450
    %v4714 = vunpack.c.l.b16 %v4451
    %v4715 = vunpack.c.l.b16 %v4452
    %v4716 = vunpack.c.l.b16 %v4453
    %v4717 = vunpack.c.l.b16 %v4454
    %v4718 = vunpack.c.l.b16 %v4455
    %v4719 = vunpack.c.l.b16 %v4456
    %v4720 = vunpack.c.l.b16 %v4457
    %v4721 = vunpack.c.l.b16 %v4458
    %v4722 = vunpack.c.l.b16 %v4459
    %v4723 = vunpack.c.l.b16 %v4460
    %v4724 = vunpack.c.l.b16 %v4461
    %v4725 = vunpack.c.l.b16 %v4462
    %v4726 = vunpack.c.l.b16 %v4463
    %v4727 = vunpack.c.l.b16 %v4464
    %v4728 = vunpack.c.l.b16 %v4465
    %v4729 = vunpack.c.l.b16 %v4466
    %v4730 = vunpack.c.l.b16 %v4467
    %v4731 = vunpack.c.l.b16 %v4468
    %v4732 = vunpack.c.l.b16 %v4469
    %v4733 = vunpack.c.l.b16 %v4470
    %v4734 = vunpack.c.l.b16 %v4471
    %v4735 = vunpack.c.l.b16 %v4472
    %v4736 = vunpack.c.l.b16 %v4473
    %v4737 = vunpack.c.l.b16 %v4474
    %v4738 = vunpack.c.l.b16 %v4475
    %v4739 = vunpack.c.l.b16 %v4476
    %v4740 = vunpack.c.l.b16 %v4477
    %v4741 = vunpack.c.l.b16 %v4478
    %v4742 = vunpack.c.l.b16 %v4479
    %v4743 = vunpack.c.l.b16 %v4480
    %v4744 = vunpack.c.l.b16 %v4481
    %v4745 = vunpack.c.l.b16 %v4482
    %v4746 = vunpack.c.l.b16 %v4483
    %v4747 = vunpack.c.l.b16 %v4484
    %v4748 = vunpack.c.l.b16 %v4485
    %v4749 = vunpack.c.l.b16 %v4486
    %v4750 = vunpack.c.l.b16 %v4487
    %v4751 = vunpack.c.l.b16 %v4488
    %v4752 = vunpack.c.l.b16 %v4489
    %v4753 = vunpack.c.l.b16 %v4490
    %v4754 = vunpack.c.l.b16 %v4491
    %v4755 = vunpack.c.l.b16 %v4492
    %v4756 = vunpack.c.l.b16 %v4493
    %v4757 = vunpack.c.l.b16 %v4494
    %v4758 = vunpack.c.l.b16 %v4495
    %v4759 = vunpack.c.l.b16 %v4496
    %v4760 = vunpack.c.l.b16 %v4497
    %v4761 = vunpack.c.l.b16 %v4498
    %v4762 = vunpack.c.l.b16 %v4499
    %v4763 = vunpack.c.l.b16 %v4500
    %v4764 = vunpack.c.l.b16 %v4501
    %v4765 = vunpack.c.l.b16 %v4502
    %v4766 = vunpack.c.l.b16 %v4503
    %v4767 = vunpack.c.l.b16 %v4504
    %v4768 = vunpack.c.l.b16 %v4505
    %v4769 = vunpack.c.l.b16 %v4506
    %v4770 = vpack.c.b16 %v4643, %v4642
    %v4771 = vpack.c.b16 %v4645, %v4644
    %v4772 = vpack.c.b16 %v4647, %v4646
    %v4773 = vpack.c.b16 %v4649, %v4648
    %v4774 = vpack.c.b16 %v4651, %v4650
    %v4775 = vpack.c.b16 %v4653, %v4652
    %v4776 = vpack.c.b16 %v4655, %v4654
    %v4777 = vpack.c.b16 %v4657, %v4656
    %v4778 = vpack.c.b16 %v4659, %v4658
    %v4779 = vpack.c.b16 %v4661, %v4660
    %v4780 = vpack.c.b16 %v4663, %v4662
    %v4781 = vpack.c.b16 %v4665, %v4664
    %v4782 = vpack.c.b16 %v4667, %v4666
    %v4783 = vpack.c.b16 %v4669, %v4668
    %v4784 = vpack.c.b16 %v4671, %v4670
    %v4785 = vpack.c.b16 %v4673, %v4672
    %v4786 = vpack.c.b16 %v4675, %v4674
    %v4787 = vpack.c.b16 %v4677, %v4676
    %v4788 = vpack.c.b16 %v4679, %v4678
    %v4789 = vpack.c.b16 %v4681, %v4680
    %v4790 = vpack.c.b16 %v4683, %v4682
    %v4791 = vpack.c.b16 %v4685, %v4684
    %v4792 = vpack.c.b16 %v4687, %v4686
    %v4793 = vpack.c.b16 %v4689, %v4688
    %v4794 = vpack.c.b16 %v4691, %v4690
    %v4795 = vpack.c.b16 %v4693, %v4692
    %v4796 = vpack.c.b16 %v4695, %v4694
    %v4797 = vpack.c.b16 %v4697, %v4696
    %v4798 = vpack.c.b16 %v4699, %v4698
    %v4799 = vpack.c.b16 %v4701, %v4700
    %v4800 = vpack.c.b16 %v4703, %v4702
    %v4801 = vpack.c.b16 %v4705, %v4704
    %v4802 = vpack.c.b16 %v4707, %v4706
    %v4803 = vpack.c.b16 %v4709, %v4708
    %v4804 = vpack.c.b16 %v4711, %v4710
    %v4805 = vpack.c.b16 %v4713, %v4712
    %v4806 = vpack.c.b16 %v4715, %v4714
    %v4807 = vpack.c.b16 %v4717, %v4716
    %v4808 = vpack.c.b16 %v4719, %v4718
    %v4809 = vpack.c.b16 %v4721, %v4720
    %v4810 = vpack.c.b16 %v4723, %v4722
    %v4811 = vpack.c.b16 %v4725, %v4724
    %v4812 = vpack.c.b16 %v4727, %v4726
    %v4813 = vpack.c.b16 %v4729, %v4728
    %v4814 = vpack.c.b16 %v4731, %v4730
    %v4815 = vpack.c.b16 %v4733, %v4732
    %v4816 = vpack.c.b16 %v4735, %v4734
    %v4817 = vpack.c.b16 %v4737, %v4736
    %v4818 = vpack.c.b16 %v4739, %v4738
    %v4819 = vpack.c.b16 %v4741, %v4740
    %v4820 = vpack.c.b16 %v4743, %v4742
    %v4821 = vpack.c.b16 %v4745, %v4744
    %v4822 = vpack.c.b16 %v4747, %v4746
    %v4823 = vpack.c.b16 %v4749, %v4748
    %v4824 = vpack.c.b16 %v4751, %v4750
    %v4825 = vpack.c.b16 %v4753, %v4752
    %v4826 = vpack.c.b16 %v4755, %v4754
    %v4827 = vpack.c.b16 %v4757, %v4756
    %v4828 = vpack.c.b16 %v4759, %v4758
    %v4829 = vpack.c.b16 %v4761, %v4760
    %v4830 = vpack.c.b16 %v4763, %v4762
    %v4831 = vpack.c.b16 %v4765, %v4764
    %v4832 = vpack.c.b16 %v4767, %v4766
    %v4833 = vpack.c.b16 %v4769, %v4768
    %4898 = vmatprep.subr.bf16.mxu0 0
    %4899 = vmatpush1.bf16.msra.mxu0 %v4777
    %4900 = vmatprep.subr.bf16.mxu0 0
    %4901 = vmatpush1.bf16.msra.mxu0 %v4776
    %4902 = vmatprep.subr.bf16.mxu0 0
    %4903 = vmatpush1.bf16.msra.mxu0 %v4775
    %4904 = vmatprep.subr.bf16.mxu0 0
    %4905 = vmatpush1.bf16.msra.mxu0 %v4774
    %4906 = vmatprep.subr.bf16.mxu0 0
    %4907 = vmatpush1.bf16.msra.mxu0 %v4773
    %4908 = vmatprep.subr.bf16.mxu0 0
    %4909 = vmatpush1.bf16.msra.mxu0 %v4772
    %4910 = vmatprep.subr.bf16.mxu0 0
    %4911 = vmatpush1.bf16.msra.mxu0 %v4771
    %4912 = vmatprep.subr.bf16.mxu0 0
    %4913 = vmatpush1.bf16.msra.mxu0 %v4770
    %4914 = vmatprep.subr.bf16.mxu0 0
    %4915 = vmatpush2.bf16.msra.mxu0 %v4785
    %4916 = vmatprep.subr.bf16.mxu0 0
    %4917 = vmatpush2.bf16.msra.mxu0 %v4784
    %4918 = vmatprep.subr.bf16.mxu0 0
    %4919 = vmatpush2.bf16.msra.mxu0 %v4783
    %4920 = vmatprep.subr.bf16.mxu0 0
    %4921 = vmatpush2.bf16.msra.mxu0 %v4782
    %4922 = vmatprep.subr.bf16.mxu0 0
    %4923 = vmatpush2.bf16.msra.mxu0 %v4781
    %4924 = vmatprep.subr.bf16.mxu0 0
    %4925 = vmatpush2.bf16.msra.mxu0 %v4780
    %4926 = vmatprep.subr.bf16.mxu0 0
    %4927 = vmatpush2.bf16.msra.mxu0 %v4779
    %4928 = vmatprep.subr.bf16.mxu0 0
    %4929 = vmatpush2.bf16.msra.mxu0 %v4778
    %4930 = vmatprep.mubr.bf16.mxu0 %v4372
    %4931 = vmatmul.mubr.bf16.gmra.mxu0 %v4371
    %v4932 = vpop.f32.mrf.mxu0
    %v4933 = vadd.f32 %v4512, %v4932
    %v4934 = vpop.f32.mrf.mxu0
    %v4935 = vpop.f32.mrf.mxu0
    %v4936 = vadd.f32 %v4512, %v4935
    %v4937 = vpop.f32.mrf.mxu0
    %4938 = vdwg.mxu0
    %4939 = vmatprep.subr.bf16.mxu0 0
    %4940 = vmatpush1.bf16.msra.mxu0 %v4793
    %4941 = vmatprep.subr.bf16.mxu0 0
    %4942 = vmatpush1.bf16.msra.mxu0 %v4792
    %4943 = vmatprep.subr.bf16.mxu0 0
    %4944 = vmatpush1.bf16.msra.mxu0 %v4791
    %4945 = vmatprep.subr.bf16.mxu0 0
    %4946 = vmatpush1.bf16.msra.mxu0 %v4790
    %4947 = vmatprep.subr.bf16.mxu0 0
    %4948 = vmatpush1.bf16.msra.mxu0 %v4789
    %4949 = vmatprep.subr.bf16.mxu0 0
    %4950 = vmatpush1.bf16.msra.mxu0 %v4788
    %4951 = vmatprep.subr.bf16.mxu0 0
    %4952 = vmatpush1.bf16.msra.mxu0 %v4787
    %4953 = vmatprep.subr.bf16.mxu0 0
    %4954 = vmatpush1.bf16.msra.mxu0 %v4786
    %4955 = vmatprep.subr.bf16.mxu0 0
    %4956 = vmatpush2.bf16.msra.mxu0 %v4801
    %4957 = vmatprep.subr.bf16.mxu0 0
    %4958 = vmatpush2.bf16.msra.mxu0 %v4800
    %4959 = vmatprep.subr.bf16.mxu0 0
    %4960 = vmatpush2.bf16.msra.mxu0 %v4799
    %4961 = vmatprep.subr.bf16.mxu0 0
    %4962 = vmatpush2.bf16.msra.mxu0 %v4798
    %4963 = vmatprep.subr.bf16.mxu0 0
    %4964 = vmatpush2.bf16.msra.mxu0 %v4797
    %4965 = vmatprep.subr.bf16.mxu0 0
    %4966 = vmatpush2.bf16.msra.mxu0 %v4796
    %4967 = vmatprep.subr.bf16.mxu0 0
    %4968 = vmatpush2.bf16.msra.mxu0 %v4795
    %4969 = vmatprep.subr.bf16.mxu0 0
    %4970 = vmatpush2.bf16.msra.mxu0 %v4794
    %4971 = vmatprep.mubr.bf16.mxu0 %v4374
    %4972 = vmatmul.mubr.bf16.gmra.mxu0 %v4373
    %v4973 = vpop.f32.mrf.mxu0
    %v4974 = vadd.f32 %v4933, %v4973
    %v4975 = vpop.f32.mrf.mxu0
    %v4976 = vpop.f32.mrf.mxu0
    %v4977 = vadd.f32 %v4936, %v4976
    %v4978 = vpop.f32.mrf.mxu0
    %4979 = vdwg.mxu0
    %4980 = vmatprep.subr.bf16.mxu0 0
    %4981 = vmatpush1.bf16.msra.mxu0 %v4809
    %4982 = vmatprep.subr.bf16.mxu0 0
    %4983 = vmatpush1.bf16.msra.mxu0 %v4808
    %4984 = vmatprep.subr.bf16.mxu0 0
    %4985 = vmatpush1.bf16.msra.mxu0 %v4807
    %4986 = vmatprep.subr.bf16.mxu0 0
    %4987 = vmatpush1.bf16.msra.mxu0 %v4806
    %4988 = vmatprep.subr.bf16.mxu0 0
    %4989 = vmatpush1.bf16.msra.mxu0 %v4805
    %4990 = vmatprep.subr.bf16.mxu0 0
    %4991 = vmatpush1.bf16.msra.mxu0 %v4804
    %4992 = vmatprep.subr.bf16.mxu0 0
    %4993 = vmatpush1.bf16.msra.mxu0 %v4803
    %4994 = vmatprep.subr.bf16.mxu0 0
    %4995 = vmatpush1.bf16.msra.mxu0 %v4802
    %4996 = vmatprep.subr.bf16.mxu0 0
    %4997 = vmatpush2.bf16.msra.mxu0 %v4817
    %4998 = vmatprep.subr.bf16.mxu0 0
    %4999 = vmatpush2.bf16.msra.mxu0 %v4816
    %5000 = vmatprep.subr.bf16.mxu0 0
    %5001 = vmatpush2.bf16.msra.mxu0 %v4815
    %5002 = vmatprep.subr.bf16.mxu0 0
    %5003 = vmatpush2.bf16.msra.mxu0 %v4814
    %5004 = vmatprep.subr.bf16.mxu0 0
    %5005 = vmatpush2.bf16.msra.mxu0 %v4813
    %5006 = vmatprep.subr.bf16.mxu0 0
    %5007 = vmatpush2.bf16.msra.mxu0 %v4812
    %5008 = vmatprep.subr.bf16.mxu0 0
    %5009 = vmatpush2.bf16.msra.mxu0 %v4811
    %5010 = vmatprep.subr.bf16.mxu0 0
    %5011 = vmatpush2.bf16.msra.mxu0 %v4810
    %5012 = vmatprep.mubr.bf16.mxu0 %v4376
    %5013 = vmatmul.mubr.bf16.gmra.mxu0 %v4375
    %v5014 = vpop.f32.mrf.mxu0
    %v5015 = vadd.f32 %v4974, %v5014
    %v5016 = vpop.f32.mrf.mxu0
    %v5017 = vpop.f32.mrf.mxu0
    %v5018 = vadd.f32 %v4977, %v5017
    %v5019 = vpop.f32.mrf.mxu0
    %5020 = vdwg.mxu0
    %5021 = vmatprep.subr.bf16.mxu0 0
    %5022 = vmatpush1.bf16.msra.mxu0 %v4825
    %5023 = vmatprep.subr.bf16.mxu0 0
    %5024 = vmatpush1.bf16.msra.mxu0 %v4824
    %5025 = vmatprep.subr.bf16.mxu0 0
    %5026 = vmatpush1.bf16.msra.mxu0 %v4823
    %5027 = vmatprep.subr.bf16.mxu0 0
    %5028 = vmatpush1.bf16.msra.mxu0 %v4822
    %5029 = vmatprep.subr.bf16.mxu0 0
    %5030 = vmatpush1.bf16.msra.mxu0 %v4821
    %5031 = vmatprep.subr.bf16.mxu0 0
    %5032 = vmatpush1.bf16.msra.mxu0 %v4820
    %5033 = vmatprep.subr.bf16.mxu0 0
    %5034 = vmatpush1.bf16.msra.mxu0 %v4819
    %5035 = vmatprep.subr.bf16.mxu0 0
    %5036 = vmatpush1.bf16.msra.mxu0 %v4818
    %5037 = vmatprep.subr.bf16.mxu0 0
    %5038 = vmatpush2.bf16.msra.mxu0 %v4833
    %5039 = vmatprep.subr.bf16.mxu0 0
    %5040 = vmatpush2.bf16.msra.mxu0 %v4832
    %5041 = vmatprep.subr.bf16.mxu0 0
    %5042 = vmatpush2.bf16.msra.mxu0 %v4831
    %5043 = vmatprep.subr.bf16.mxu0 0
    %5044 = vmatpush2.bf16.msra.mxu0 %v4830
    %5045 = vmatprep.subr.bf16.mxu0 0
    %5046 = vmatpush2.bf16.msra.mxu0 %v4829
    %5047 = vmatprep.subr.bf16.mxu0 0
    %5048 = vmatpush2.bf16.msra.mxu0 %v4828
    %5049 = vmatprep.subr.bf16.mxu0 0
    %5050 = vmatpush2.bf16.msra.mxu0 %v4827
    %5051 = vmatprep.subr.bf16.mxu0 0
    %5052 = vmatpush2.bf16.msra.mxu0 %v4826
    %5053 = vmatprep.mubr.bf16.mxu0 %v4378
    %5054 = vmatmul.mubr.bf16.gmra.mxu0 %v4377
    %v5055 = vpop.f32.mrf.mxu0
    %v5056 = vadd.f32 %v5015, %v5055
    %v5057 = vpop.f32.mrf.mxu0
    %v5058 = vpop.f32.mrf.mxu0
    %v5059 = vadd.f32 %v5018, %v5058
    %v5060 = vpop.f32.mrf.mxu0
    %5061 = vdwg.mxu0
    %5062 = vst [vmem:[%s7] sm:$0xff] %v5056
    %5063 = vst [vmem:[%s7 + $0x8] sm:$0xff] %v5059
    // Predicated region
    $region58: #{_da_ins_head_impl.1} parent=1 // pred_check
      _
    $region59: #{_da_ins_head_impl.1} parent=1 // pred_check_branch
      %5065 = sbr.rel (0) target = $region61
    $region60: #{_da_ins_head_impl.1} parent=1 // pred_region
      _
    $region61: #{_da_ins_head_impl.1} parent=1 // pred_fallthru
      _
    // Predicated region
    $region62: #{_da_ins_head_impl.1} parent=1 // pred_check
      _
    $region63: #{_da_ins_head_impl.1} parent=1 // pred_check_branch
      %5067 = sbr.rel (0) target = $region65
    $region64: #{_da_ins_head_impl.1} parent=1 // pred_region
      _
    $region65: #{_da_ins_head_impl.1} parent=1 // pred_fallthru
      _
    %5068 = vsyncpa [#allocation3], 1
    %5069 = vsyncpa [#allocation5], 1
    %5070 = vsyncpa [#allocation8], 1
    %5071 = vsyncpa [#allocation11], 1

</llo_original>
